<compile_context>
chip_gen: v5e
topology: v5e:2x2
jax: 0.10.0
libtpu: 0.0.40
codegen_flags: <defaults>
</compile_context>

<pallas_src>
import functools

import jax
import jax.numpy as jnp
from jax import lax
from jax.experimental import pallas as pl
from jax.experimental.pallas import tpu as pltpu

PYDIM = 30  # self.PYDIM in the module


def _round_up(x, m):
    return ((x + m - 1) // m) * m


def _tpu_vmem_capacity_bytes():
    try:
        cap = int(pltpu.get_tpu_info().vmem_capacity_bytes)
        if cap > 0:
            return cap
    except Exception:
        pass
    return 64 * 1024 * 1024  # conservative default (v7x per-TC VMEM)


def _tpu_num_tensorcores():
    try:
        info = pltpu.get_tpu_info()
        for attr in ("num_tensorcores", "tensorcores_per_chip", "num_cores"):
            v = getattr(info, attr, None)
            if isinstance(v, int) and v > 0:
                return v
    except Exception:
        pass
    return 1  # single TC (v5e/v6e) unless we can prove otherwise


def _choose_block_n(N, T, HP, D, vmem_cap, num_cores):
    """Batch tile: multiple of 8, sized to a chip-aware VMEM budget.

    Only multi-TensorCore chips (v7x) get a forced >=2-block grid; on
    single-TC v5e/v6e we keep the largest tile that fits the budget.
    """
    n8 = _round_up(max(N, 1), 8)
    # Per-row VMEM (f32): double-buffered x tile + gx scratch (both directions)
    # + one transient projection result + small h / out tiles.
    bytes_per_row = 4 * (2 * T * D + 3 * 3 * T * HP + 4 * HP)
    budget = min(int(vmem_cap * 0.4), 40 * 1024 * 1024)
    cap = max(8, (budget // bytes_per_row) // 8 * 8)
    bn = min(n8, cap)
    if num_cores >= 2 and n8 >= 16:
        # Ensure at least two grid blocks so both TensorCores get work.
        bn = min(bn, max(8, _round_up((n8 + 1) // 2, 8)))
    return int(bn)


def _bigru_kernel(x_ref, wih_f_ref, wih_b_ref, bif_ref, bib_ref,
                  whh_f_ref, whh_b_ref, bhn_f_ref, bhn_b_ref,
                  out_ref, gxf_ref, gxb_ref):
    """Bidirectional single-layer GRU over one batch tile.

    x_ref:    (T, BN, D)     embedded pinyin ids, time-major, f32.
    wih_*:    (D, 3*HP)      input weights, gate order [r|z|n], zero-padded.
    bi*_ref:  (1, 3*HP)      b_ih (all gates) + b_hh for r/z gates, folded.
    whh_*:    (HP, 3*HP)     recurrent weights (transposed, zero-padded).
    bhn_*:    (1, HP)        b_hn (the only hidden bias inside r * (.)).
    out_ref:  (BN, HP)       0.5 * (h_fwd_final + h_bwd_final); padded lanes 0.
    gx*_ref:  (T, BN, 3*HP)  VMEM scratch holding the precomputed input gates.
    """
    T, bn, D = x_ref.shape
    HP = out_ref.shape[1]

    # ---- Preamble: input projection for ALL timesteps and both directions as
    # two wide MXU matmuls (M = T*bn).  Keeps the serial loop body minimal and
    # avoids any gx round-trip through HBM.
    x2 = x_ref[...].reshape(T * bn, D)
    gxf_ref[...] = (
        jnp.dot(x2, wih_f_ref[...], preferred_element_type=jnp.float32)
        + bif_ref[...]).reshape(T, bn, 3 * HP)
    gxb_ref[...] = (
        jnp.dot(x2, wih_b_ref[...], preferred_element_type=jnp.float32)
        + bib_ref[...]).reshape(T, bn, 3 * HP)

    # Recurrent weights / biases loaded once; small and loop-invariant.
    whh_f = whh_f_ref[...]
    whh_b = whh_b_ref[...]
    bhn_f = bhn_f_ref[...]
    bhn_b = bhn_b_ref[...]

    def cell(h, gx, whh, bhn):
        # PyTorch GRUCell, gate order [r | z | n].  One fused
        # (bn, HP) @ (HP, 3*HP) recurrent matmul; all slices of the result sit
        # on 128-lane boundaries (HP is a multiple of 128), so no layout cost.
        gh = jnp.dot(h, whh, preferred_element_type=jnp.float32)
        r = jax.nn.sigmoid(gx[:, :HP] + gh[:, :HP])
        z = jax.nn.sigmoid(gx[:, HP:2 * HP] + gh[:, HP:2 * HP])
        n = jnp.tanh(gx[:, 2 * HP:] + r * (gh[:, 2 * HP:] + bhn))
        return (1.0 - z) * n + z * h

    h0 = jnp.zeros((bn, HP), jnp.float32)

    def step(t, carry):
        h_f, h_b = carry
        h_f = cell(h_f, gxf_ref[t], whh_f, bhn_f)
        h_b = cell(h_b, gxb_ref[T - 1 - t], whh_b, bhn_b)
        return (h_f, h_b)

    # Short serial recurrence, fully unrolled so the independent fwd/bwd
    # directions interleave on the MXU.
    h_f, h_b = lax.fori_loop(0, T, step, (h0, h0), unroll=True)

    # hn.mean(0, keepdim=True) over the 2 directions; lane-dense (BN, HP) store.
    out_ref[...] = 0.5 * (h_f + h_b)


def embedding_network_forward(sen_pyids, params, *, seq_len, hidden_size,
                              max_sen_len, block_n=None):
    """Pallas implementation of EmbeddingNetwork.forward(sen_pyids, max_sen_len)."""
    H = hidden_size
    HP = _round_up(H, 128)
    D = params["pyemb"].shape[1]  # 30

    ids = sen_pyids.reshape(-1, seq_len)          # (N, T)
    N, T = ids.shape

    vmem_cap = _tpu_vmem_capacity_bytes()
    num_cores = _tpu_num_tensorcores()
    if block_n is None:
        block_n = _choose_block_n(N, T, HP, D, vmem_cap, num_cores)
    assert block_n % 8 == 0 or block_n >= N, block_n
    NP = _round_up(N, block_n)                    # padded batch (dummy rows sliced off)

    # Embedding gather emitted directly in time-major (T, NP, D) layout; padded
    # batch rows use id 0 (they never touch real rows and are discarded below).
    ids_t = jnp.zeros((T, NP), ids.dtype).at[:, :N].set(ids.T)
    x = jnp.take(params["pyemb"], ids_t, axis=0).astype(jnp.float32)   # (T, NP, D)

    def pad_gates(a):
        # (..., 3H) -> (..., 3*HP), zero-padded per gate block.
        if HP == H:
            return a
        a3 = a.reshape(a.shape[:-1] + (3, H))
        a3 = jnp.pad(a3, [(0, 0)] * (a3.ndim - 1) + [(0, HP - H)])
        return a3.reshape(a.shape[:-1] + (3 * HP,))

    def make_bi(bih, bhh):
        # Fold b_ih (all gates) + b_hh (r, z gates only); b_hn stays separate.
        b = bih + jnp.concatenate(
            [bhh[:, :2 * H], jnp.zeros((1, H), jnp.float32)], axis=1)
        return pad_gates(b)

    def make_whh(whh):
        # (H, 3H) -> (HP, 3*HP), zero-padded per gate (fused-gate layout).
        w = whh.reshape(H, 3, H)
        w = jnp.pad(w, ((0, HP - H), (0, 0), (0, HP - H)))
        return w.reshape(HP, 3 * HP)

    def make_bhn(bhh):
        # (1, 3H) -> (1, HP)
        return jnp.pad(bhh[:, 2 * H:], ((0, 0), (0, HP - H)))

    wih_f = pad_gates(params["wih_f"])
    wih_b = pad_gates(params["wih_b"])
    bi_f = make_bi(params["bih_f"], params["bhh_f"])
    bi_b = make_bi(params["bih_b"], params["bhh_b"])
    whh_f = make_whh(params["whh_f"])
    whh_b = make_whh(params["whh_b"])
    bhn_f = make_bhn(params["bhh_f"])
    bhn_b = make_bhn(params["bhh_b"])

    # Leave headroom for compiler-internal scratch; chip-aware (64 MiB on v7x).
    vmem_limit = int(min(vmem_cap * 3 // 4, 100 * 1024 * 1024))

    out_padded = pl.pallas_call(
        _bigru_kernel,
        out_shape=jax.ShapeDtypeStruct((NP, HP), jnp.float32),
        grid_spec=pltpu.PrefetchScalarGridSpec(
            num_scalar_prefetch=0,
            grid=(NP // block_n,),
            in_specs=[
                pl.BlockSpec((T, block_n, D), lambda i: (0, i, 0)),   # x
                pl.BlockSpec((D, 3 * HP), lambda i: (0, 0)),          # wih_f
                pl.BlockSpec((D, 3 * HP), lambda i: (0, 0)),          # wih_b
                pl.BlockSpec((1, 3 * HP), lambda i: (0, 0)),          # bi_f
                pl.BlockSpec((1, 3 * HP), lambda i: (0, 0)),          # bi_b
                pl.BlockSpec((HP, 3 * HP), lambda i: (0, 0)),         # whh_f
                pl.BlockSpec((HP, 3 * HP), lambda i: (0, 0)),         # whh_b
                pl.BlockSpec((1, HP), lambda i: (0, 0)),              # bhn_f
                pl.BlockSpec((1, HP), lambda i: (0, 0)),              # bhn_b
            ],
            out_specs=pl.BlockSpec((block_n, HP), lambda i: (i, 0)),
            scratch_shapes=[
                pltpu.VMEM((T, block_n, 3 * HP), jnp.float32),        # gx fwd
                pltpu.VMEM((T, block_n, 3 * HP), jnp.float32),        # gx bwd
            ]),
        compiler_params=pltpu.CompilerParams(
            dimension_semantics=("parallel",),
            vmem_limit_bytes=vmem_limit),
    )(x, wih_f, wih_b, bi_f, bi_b, whh_f, whh_b, bhn_f, bhn_b)

    final = out_padded[:N, :H]
    # (1, N, H).reshape(-1, max_sen_len, H) == (N // max_sen_len, max_sen_len, H)
    return final.reshape(-1, max_sen_len, H)


def _ref_forward(sen_pyids, params, *, seq_len, hidden_size, max_sen_len):
    """Pure-JAX reference (mirrors torch.nn.GRU, bidirectional, batch_first).

    Matmul precision pinned to float32 so the reference matches the kernel's
    full-f32 MXU dots within the 1e-4 check.
    """
    H = hidden_size
    with jax.default_matmul_precision("float32"):
        ids = sen_pyids.reshape(-1, seq_len)
        emb = jnp.take(params["pyemb"], ids, axis=0).astype(jnp.float32)  # (N, T, D)
        x = jnp.transpose(emb, (1, 0, 2))                                 # (T, N, D)

        def run_dir(x_seq, wih, whh, bih, bhh):
            def cell(h, x_t):
                gx = x_t @ wih + bih
                gh = h @ whh + bhh
                r = jax.nn.sigmoid(gx[:, :H] + gh[:, :H])
                z = jax.nn.sigmoid(gx[:, H:2 * H] + gh[:, H:2 * H])
                n = jnp.tanh(gx[:, 2 * H:] + r * gh[:, 2 * H:])
                return (1.0 - z) * n + z * h, None
            h0 = jnp.zeros((x_seq.shape[1], H), jnp.float32)
            h_final, _ = lax.scan(cell, h0, x_seq)
            return h_final

        h_f = run_dir(x, params["wih_f"], params["whh_f"],
                      params["bih_f"], params["bhh_f"])
        h_b = run_dir(x[::-1], params["wih_b"], params["whh_b"],
                      params["bih_b"], params["bhh_b"])
        final = 0.5 * (h_f + h_b)
    return final.reshape(-1, max_sen_len, H)


def init_params(key, *, num_embeddings, hidden_size):
    """Deterministic parameter init (shapes per nn.Embedding / nn.GRU)."""
    H = hidden_size
    bound = 1.0 / (H ** 0.5)
    ks = jax.random.split(key, 9)

    def u(k, shape):
        return jax.random.uniform(k, shape, jnp.float32, -bound, bound)

    return {
        # nn.Embedding(num_embeddings, 30): N(0, 1)
        "pyemb": jax.random.normal(ks[0], (num_embeddings, PYDIM), jnp.float32),
        # forward direction (PyTorch weight_ih_l0 is (3H, D); stored transposed,
        # gate order [r | z | n])
        "wih_f": u(ks[1], (PYDIM, 3 * H)),
        "whh_f": u(ks[2], (H, 3 * H)),
        "bih_f": u(ks[3], (1, 3 * H)),
        "bhh_f": u(ks[4], (1, 3 * H)),
        # backward direction
        "wih_b": u(ks[5], (PYDIM, 3 * H)),
        "whh_b": u(ks[6], (H, 3 * H)),
        "bih_b": u(ks[7], (1, 3 * H)),
        "bhh_b": u(ks[8], (1, 3 * H)),
    }


if __name__ == "__main__":
    key = jax.random.PRNGKey(0)
    k_params, k_ids = jax.random.split(key)

    # Small config consistent with the module's forward.
    B = 2              # sentences
    MAX_SEN_LEN = 4    # max_sen_len argument
    PYLEN = 8          # self.seq_len (pinyin length per character)
    HIDDEN = 32        # config.hidden_size
    NUM_EMB = 40       # num_embeddings

    params = init_params(k_params, num_embeddings=NUM_EMB, hidden_size=HIDDEN)
    # sen_pyids: one pinyin sequence per character position of each sentence.
    sen_pyids = jax.random.randint(k_ids, (B, MAX_SEN_LEN, PYLEN), 0, NUM_EMB,
                                   dtype=jnp.int32)

    fwd = functools.partial(embedding_network_forward,
                            seq_len=PYLEN, hidden_size=HIDDEN,
                            max_sen_len=MAX_SEN_LEN)
    out = jax.block_until_ready(fwd(sen_pyids, params))

    ref = _ref_forward(sen_pyids, params, seq_len=PYLEN, hidden_size=HIDDEN,
                       max_sen_len=MAX_SEN_LEN)

    assert out.shape == (B, MAX_SEN_LEN, HIDDEN), out.shape
    assert jnp.allclose(out, ref, atol=1e-4, rtol=1e-4), \
        float(jnp.max(jnp.abs(out - ref)))
    print("KERNEL_OK")
</pallas_src>

<mosaic_0001>
module attributes {stable_mosaic.version = 11 : i64} {
  func.func @_bigru_kernel(%arg0: i32, %arg1: memref<8x8x30xf32, #tpu.memory_space<vmem>>, %arg2: memref<30x384xf32, #tpu.memory_space<vmem>>, %arg3: memref<30x384xf32, #tpu.memory_space<vmem>>, %arg4: memref<1x384xf32, #tpu.memory_space<vmem>>, %arg5: memref<1x384xf32, #tpu.memory_space<vmem>>, %arg6: memref<128x384xf32, #tpu.memory_space<vmem>>, %arg7: memref<128x384xf32, #tpu.memory_space<vmem>>, %arg8: memref<1x128xf32, #tpu.memory_space<vmem>>, %arg9: memref<1x128xf32, #tpu.memory_space<vmem>>, %arg10: memref<8x128xf32, #tpu.memory_space<vmem>>, %arg11: memref<8x8x384xf32, #tpu.memory_space<vmem>>, %arg12: memref<8x8x384xf32, #tpu.memory_space<vmem>>) attributes {dimension_semantics = [#tpu.dimension_semantics<parallel>], iteration_bounds = array<i64: 1>, scalar_prefetch = 0 : i64, scratch_operands = 2 : i64, tpu.core_type = #tpu.core_type<tc>, window_params = [{transform_indices = @transform_0, window_bounds = array<i64: 8, 8, 30>}, {pipeline_mode = #tpu.pipeline_mode<synchronous>, transform_indices = @transform_1, window_bounds = array<i64: 30, 384>}, {pipeline_mode = #tpu.pipeline_mode<synchronous>, transform_indices = @transform_2, window_bounds = array<i64: 30, 384>}, {pipeline_mode = #tpu.pipeline_mode<synchronous>, transform_indices = @transform_3, window_bounds = array<i64: 1, 384>}, {pipeline_mode = #tpu.pipeline_mode<synchronous>, transform_indices = @transform_4, window_bounds = array<i64: 1, 384>}, {pipeline_mode = #tpu.pipeline_mode<synchronous>, transform_indices = @transform_5, window_bounds = array<i64: 128, 384>}, {pipeline_mode = #tpu.pipeline_mode<synchronous>, transform_indices = @transform_6, window_bounds = array<i64: 128, 384>}, {pipeline_mode = #tpu.pipeline_mode<synchronous>, transform_indices = @transform_7, window_bounds = array<i64: 1, 128>}, {pipeline_mode = #tpu.pipeline_mode<synchronous>, transform_indices = @transform_8, window_bounds = array<i64: 1, 128>}, {transform_indices = @transform_9, window_bounds = array<i64: 8, 128>}]} {
    %c0 = arith.constant 0 : index
    %c0_0 = arith.constant 0 : index
    %c0_1 = arith.constant 0 : index
    %0 = vector.load %arg1[%c0, %c0_0, %c0_1] : memref<8x8x30xf32, #tpu.memory_space<vmem>>, vector<8x8x30xf32>
    %1 = vector.shape_cast %0 : vector<8x8x30xf32> to vector<64x30xf32>
    %c0_2 = arith.constant 0 : index
    %c0_3 = arith.constant 0 : index
    %2 = vector.load %arg2[%c0_2, %c0_3] : memref<30x384xf32, #tpu.memory_space<vmem>>, vector<30x384xf32>
    %cst = arith.constant dense<0.000000e+00> : vector<64x384xf32>
    %3 = tpu.matmul %1, %2, %cst {dimension_numbers = #tpu.dot_dimension_numbers<[1], [0], [0], [1], [0, 0, 1, 1], [], []>} : vector<64x30xf32>, vector<30x384xf32>, vector<64x384xf32> -> vector<64x384xf32>
    %c0_4 = arith.constant 0 : index
    %c0_5 = arith.constant 0 : index
    %4 = vector.load %arg4[%c0_4, %c0_5] : memref<1x384xf32, #tpu.memory_space<vmem>>, vector<1x384xf32>
    %5 = vector.broadcast %4 : vector<1x384xf32> to vector<64x384xf32>
    %6 = arith.addf %3, %5 : vector<64x384xf32>
    %7 = vector.shape_cast %6 : vector<64x384xf32> to vector<8x8x384xf32>
    %c0_6 = arith.constant 0 : index
    %c0_7 = arith.constant 0 : index
    %c0_8 = arith.constant 0 : index
    %8 = vector.load %arg11[%c0_6, %c0_7, %c0_8] : memref<8x8x384xf32, #tpu.memory_space<vmem>>, vector<8x8x384xf32>
    tpu.vector_store %arg11[%c0_6, %c0_7, %c0_8], %7 {strides = array<i32>} : memref<8x8x384xf32, #tpu.memory_space<vmem>>, vector<8x8x384xf32>,
    %c0_9 = arith.constant 0 : index
    %c0_10 = arith.constant 0 : index
    %9 = vector.load %arg3[%c0_9, %c0_10] : memref<30x384xf32, #tpu.memory_space<vmem>>, vector<30x384xf32>
    %cst_11 = arith.constant dense<0.000000e+00> : vector<64x384xf32>
    %10 = tpu.matmul %1, %9, %cst_11 {dimension_numbers = #tpu.dot_dimension_numbers<[1], [0], [0], [1], [0, 0, 1, 1], [], []>} : vector<64x30xf32>, vector<30x384xf32>, vector<64x384xf32> -> vector<64x384xf32>
    %c0_12 = arith.constant 0 : index
    %c0_13 = arith.constant 0 : index
    %11 = vector.load %arg5[%c0_12, %c0_13] : memref<1x384xf32, #tpu.memory_space<vmem>>, vector<1x384xf32>
    %12 = vector.broadcast %11 : vector<1x384xf32> to vector<64x384xf32>
    %13 = arith.addf %10, %12 : vector<64x384xf32>
    %14 = vector.shape_cast %13 : vector<64x384xf32> to vector<8x8x384xf32>
    %c0_14 = arith.constant 0 : index
    %c0_15 = arith.constant 0 : index
    %c0_16 = arith.constant 0 : index
    %15 = vector.load %arg12[%c0_14, %c0_15, %c0_16] : memref<8x8x384xf32, #tpu.memory_space<vmem>>, vector<8x8x384xf32>
    tpu.vector_store %arg12[%c0_14, %c0_15, %c0_16], %14 {strides = array<i32>} : memref<8x8x384xf32, #tpu.memory_space<vmem>>, vector<8x8x384xf32>,
    %c0_17 = arith.constant 0 : index
    %c0_18 = arith.constant 0 : index
    %16 = vector.load %arg6[%c0_17, %c0_18] : memref<128x384xf32, #tpu.memory_space<vmem>>, vector<128x384xf32>
    %c0_19 = arith.constant 0 : index
    %c0_20 = arith.constant 0 : index
    %17 = vector.load %arg7[%c0_19, %c0_20] : memref<128x384xf32, #tpu.memory_space<vmem>>, vector<128x384xf32>
    %c0_21 = arith.constant 0 : index
    %c0_22 = arith.constant 0 : index
    %18 = vector.load %arg8[%c0_21, %c0_22] : memref<1x128xf32, #tpu.memory_space<vmem>>, vector<1x128xf32>
    %c0_23 = arith.constant 0 : index
    %c0_24 = arith.constant 0 : index
    %19 = vector.load %arg9[%c0_23, %c0_24] : memref<1x128xf32, #tpu.memory_space<vmem>>, vector<1x128xf32>
    %cst_25 = arith.constant 0.000000e+00 : f32
    %20 = vector.broadcast %cst_25 : f32 to vector<8x128xf32>
    %c0_i32 = arith.constant 0 : i32
    %21 = arith.index_cast %c0_i32 : i32 to index
    %c0_26 = arith.constant 0 : index
    %c0_27 = arith.constant 0 : index
    %22 = vector.load %arg11[%21, %c0_26, %c0_27] : memref<8x8x384xf32, #tpu.memory_space<vmem>>, vector<1x8x384xf32>
    %23 = vector.shape_cast %22 : vector<1x8x384xf32> to vector<8x384xf32>
    %cst_28 = arith.constant dense<0.000000e+00> : vector<8x384xf32>
    %24 = tpu.matmul %20, %16, %cst_28 {dimension_numbers = #tpu.dot_dimension_numbers<[1], [0], [0], [1], [0, 0, 1, 1], [], []>} : vector<8x128xf32>, vector<128x384xf32>, vector<8x384xf32> -> vector<8x384xf32>
    %25 = vector.extract_strided_slice %23 {offsets = [0, 0], sizes = [8, 128], strides = [1, 1]} : vector<8x384xf32> to vector<8x128xf32>
    %26 = vector.extract_strided_slice %24 {offsets = [0, 0], sizes = [8, 128], strides = [1, 1]} : vector<8x384xf32> to vector<8x128xf32>
    %27 = arith.addf %25, %26 : vector<8x128xf32>
    %28 = arith.negf %27 : vector<8x128xf32>
    %29 = math.exp %28 : vector<8x128xf32>
    %cst_29 = arith.constant 1.000000e+00 : f32
    %30 = vector.broadcast %cst_29 : f32 to vector<8x128xf32>
    %31 = arith.addf %30, %29 : vector<8x128xf32>
    %32 = arith.divf %30, %31 : vector<8x128xf32>
    %33 = vector.extract_strided_slice %23 {offsets = [0, 128], sizes = [8, 128], strides = [1, 1]} : vector<8x384xf32> to vector<8x128xf32>
    %34 = vector.extract_strided_slice %24 {offsets = [0, 128], sizes = [8, 128], strides = [1, 1]} : vector<8x384xf32> to vector<8x128xf32>
    %35 = arith.addf %33, %34 : vector<8x128xf32>
    %36 = arith.negf %35 : vector<8x128xf32>
    %37 = math.exp %36 : vector<8x128xf32>
    %cst_30 = arith.constant 1.000000e+00 : f32
    %38 = vector.broadcast %cst_30 : f32 to vector<8x128xf32>
    %39 = arith.addf %38, %37 : vector<8x128xf32>
    %40 = arith.divf %38, %39 : vector<8x128xf32>
    %41 = vector.extract_strided_slice %23 {offsets = [0, 256], sizes = [8, 128], strides = [1, 1]} : vector<8x384xf32> to vector<8x128xf32>
    %42 = vector.extract_strided_slice %24 {offsets = [0, 256], sizes = [8, 128], strides = [1, 1]} : vector<8x384xf32> to vector<8x128xf32>
    %43 = vector.broadcast %18 : vector<1x128xf32> to vector<8x128xf32>
    %44 = arith.addf %42, %43 : vector<8x128xf32>
    %45 = arith.mulf %32, %44 : vector<8x128xf32>
    %46 = arith.addf %41, %45 : vector<8x128xf32>
    %47 = math.tanh %46 : vector<8x128xf32>
    %cst_31 = arith.constant 1.000000e+00 : f32
    %48 = vector.broadcast %cst_31 : f32 to vector<8x128xf32>
    %49 = arith.subf %48, %40 : vector<8x128xf32>
    %50 = arith.mulf %49, %47 : vector<8x128xf32>
    %51 = arith.mulf %40, %20 : vector<8x128xf32>
    %52 = arith.addf %50, %51 : vector<8x128xf32>
    %c7_i32 = arith.constant 7 : i32
    %53 = arith.subi %c7_i32, %c0_i32 : i32
    %54 = arith.index_cast %53 : i32 to index
    %c0_32 = arith.constant 0 : index
    %c0_33 = arith.constant 0 : index
    %55 = vector.load %arg12[%54, %c0_32, %c0_33] : memref<8x8x384xf32, #tpu.memory_space<vmem>>, vector<1x8x384xf32>
    %56 = vector.shape_cast %55 : vector<1x8x384xf32> to vector<8x384xf32>
    %cst_34 = arith.constant dense<0.000000e+00> : vector<8x384xf32>
    %57 = tpu.matmul %20, %17, %cst_34 {dimension_numbers = #tpu.dot_dimension_numbers<[1], [0], [0], [1], [0, 0, 1, 1], [], []>} : vector<8x128xf32>, vector<128x384xf32>, vector<8x384xf32> -> vector<8x384xf32>
    %58 = vector.extract_strided_slice %56 {offsets = [0, 0], sizes = [8, 128], strides = [1, 1]} : vector<8x384xf32> to vector<8x128xf32>
    %59 = vector.extract_strided_slice %57 {offsets = [0, 0], sizes = [8, 128], strides = [1, 1]} : vector<8x384xf32> to vector<8x128xf32>
    %60 = arith.addf %58, %59 : vector<8x128xf32>
    %61 = arith.negf %60 : vector<8x128xf32>
    %62 = math.exp %61 : vector<8x128xf32>
    %cst_35 = arith.constant 1.000000e+00 : f32
    %63 = vector.broadcast %cst_35 : f32 to vector<8x128xf32>
    %64 = arith.addf %63, %62 : vector<8x128xf32>
    %65 = arith.divf %63, %64 : vector<8x128xf32>
    %66 = vector.extract_strided_slice %56 {offsets = [0, 128], sizes = [8, 128], strides = [1, 1]} : vector<8x384xf32> to vector<8x128xf32>
    %67 = vector.extract_strided_slice %57 {offsets = [0, 128], sizes = [8, 128], strides = [1, 1]} : vector<8x384xf32> to vector<8x128xf32>
    %68 = arith.addf %66, %67 : vector<8x128xf32>
    %69 = arith.negf %68 : vector<8x128xf32>
    %70 = math.exp %69 : vector<8x128xf32>
    %cst_36 = arith.constant 1.000000e+00 : f32
    %71 = vector.broadcast %cst_36 : f32 to vector<8x128xf32>
    %72 = arith.addf %71, %70 : vector<8x128xf32>
    %73 = arith.divf %71, %72 : vector<8x128xf32>
    %74 = vector.extract_strided_slice %56 {offsets = [0, 256], sizes = [8, 128], strides = [1, 1]} : vector<8x384xf32> to vector<8x128xf32>
    %75 = vector.extract_strided_slice %57 {offsets = [0, 256], sizes = [8, 128], strides = [1, 1]} : vector<8x384xf32> to vector<8x128xf32>
    %76 = vector.broadcast %19 : vector<1x128xf32> to vector<8x128xf32>
    %77 = arith.addf %75, %76 : vector<8x128xf32>
    %78 = arith.mulf %65, %77 : vector<8x128xf32>
    %79 = arith.addf %74, %78 : vector<8x128xf32>
    %80 = math.tanh %79 : vector<8x128xf32>
    %cst_37 = arith.constant 1.000000e+00 : f32
    %81 = vector.broadcast %cst_37 : f32 to vector<8x128xf32>
    %82 = arith.subf %81, %73 : vector<8x128xf32>
    %83 = arith.mulf %82, %80 : vector<8x128xf32>
    %84 = arith.mulf %73, %20 : vector<8x128xf32>
    %85 = arith.addf %83, %84 : vector<8x128xf32>
    %c1_i32 = arith.constant 1 : i32
    %86 = arith.index_cast %c1_i32 : i32 to index
    %c0_38 = arith.constant 0 : index
    %c0_39 = arith.constant 0 : index
    %87 = vector.load %arg11[%86, %c0_38, %c0_39] : memref<8x8x384xf32, #tpu.memory_space<vmem>>, vector<1x8x384xf32>
    %88 = vector.shape_cast %87 : vector<1x8x384xf32> to vector<8x384xf32>
    %cst_40 = arith.constant dense<0.000000e+00> : vector<8x384xf32>
    %89 = tpu.matmul %52, %16, %cst_40 {dimension_numbers = #tpu.dot_dimension_numbers<[1], [0], [0], [1], [0, 0, 1, 1], [], []>} : vector<8x128xf32>, vector<128x384xf32>, vector<8x384xf32> -> vector<8x384xf32>
    %90 = vector.extract_strided_slice %88 {offsets = [0, 0], sizes = [8, 128], strides = [1, 1]} : vector<8x384xf32> to vector<8x128xf32>
    %91 = vector.extract_strided_slice %89 {offsets = [0, 0], sizes = [8, 128], strides = [1, 1]} : vector<8x384xf32> to vector<8x128xf32>
    %92 = arith.addf %90, %91 : vector<8x128xf32>
    %93 = arith.negf %92 : vector<8x128xf32>
    %94 = math.exp %93 : vector<8x128xf32>
    %cst_41 = arith.constant 1.000000e+00 : f32
    %95 = vector.broadcast %cst_41 : f32 to vector<8x128xf32>
    %96 = arith.addf %95, %94 : vector<8x128xf32>
    %97 = arith.divf %95, %96 : vector<8x128xf32>
    %98 = vector.extract_strided_slice %88 {offsets = [0, 128], sizes = [8, 128], strides = [1, 1]} : vector<8x384xf32> to vector<8x128xf32>
    %99 = vector.extract_strided_slice %89 {offsets = [0, 128], sizes = [8, 128], strides = [1, 1]} : vector<8x384xf32> to vector<8x128xf32>
    %100 = arith.addf %98, %99 : vector<8x128xf32>
    %101 = arith.negf %100 : vector<8x128xf32>
    %102 = math.exp %101 : vector<8x128xf32>
    %cst_42 = arith.constant 1.000000e+00 : f32
    %103 = vector.broadcast %cst_42 : f32 to vector<8x128xf32>
    %104 = arith.addf %103, %102 : vector<8x128xf32>
    %105 = arith.divf %103, %104 : vector<8x128xf32>
    %106 = vector.extract_strided_slice %88 {offsets = [0, 256], sizes = [8, 128], strides = [1, 1]} : vector<8x384xf32> to vector<8x128xf32>
    %107 = vector.extract_strided_slice %89 {offsets = [0, 256], sizes = [8, 128], strides = [1, 1]} : vector<8x384xf32> to vector<8x128xf32>
    %108 = vector.broadcast %18 : vector<1x128xf32> to vector<8x128xf32>
    %109 = arith.addf %107, %108 : vector<8x128xf32>
    %110 = arith.mulf %97, %109 : vector<8x128xf32>
    %111 = arith.addf %106, %110 : vector<8x128xf32>
    %112 = math.tanh %111 : vector<8x128xf32>
    %cst_43 = arith.constant 1.000000e+00 : f32
    %113 = vector.broadcast %cst_43 : f32 to vector<8x128xf32>
    %114 = arith.subf %113, %105 : vector<8x128xf32>
    %115 = arith.mulf %114, %112 : vector<8x128xf32>
    %116 = arith.mulf %105, %52 : vector<8x128xf32>
    %117 = arith.addf %115, %116 : vector<8x128xf32>
    %c7_i32_44 = arith.constant 7 : i32
    %118 = arith.subi %c7_i32_44, %c1_i32 : i32
    %119 = arith.index_cast %118 : i32 to index
    %c0_45 = arith.constant 0 : index
    %c0_46 = arith.constant 0 : index
    %120 = vector.load %arg12[%119, %c0_45, %c0_46] : memref<8x8x384xf32, #tpu.memory_space<vmem>>, vector<1x8x384xf32>
    %121 = vector.shape_cast %120 : vector<1x8x384xf32> to vector<8x384xf32>
    %cst_47 = arith.constant dense<0.000000e+00> : vector<8x384xf32>
    %122 = tpu.matmul %85, %17, %cst_47 {dimension_numbers = #tpu.dot_dimension_numbers<[1], [0], [0], [1], [0, 0, 1, 1], [], []>} : vector<8x128xf32>, vector<128x384xf32>, vector<8x384xf32> -> vector<8x384xf32>
    %123 = vector.extract_strided_slice %121 {offsets = [0, 0], sizes = [8, 128], strides = [1, 1]} : vector<8x384xf32> to vector<8x128xf32>
    %124 = vector.extract_strided_slice %122 {offsets = [0, 0], sizes = [8, 128], strides = [1, 1]} : vector<8x384xf32> to vector<8x128xf32>
    %125 = arith.addf %123, %124 : vector<8x128xf32>
    %126 = arith.negf %125 : vector<8x128xf32>
    %127 = math.exp %126 : vector<8x128xf32>
    %cst_48 = arith.constant 1.000000e+00 : f32
    %128 = vector.broadcast %cst_48 : f32 to vector<8x128xf32>
    %129 = arith.addf %128, %127 : vector<8x128xf32>
    %130 = arith.divf %128, %129 : vector<8x128xf32>
    %131 = vector.extract_strided_slice %121 {offsets = [0, 128], sizes = [8, 128], strides = [1, 1]} : vector<8x384xf32> to vector<8x128xf32>
    %132 = vector.extract_strided_slice %122 {offsets = [0, 128], sizes = [8, 128], strides = [1, 1]} : vector<8x384xf32> to vector<8x128xf32>
    %133 = arith.addf %131, %132 : vector<8x128xf32>
    %134 = arith.negf %133 : vector<8x128xf32>
    %135 = math.exp %134 : vector<8x128xf32>
    %cst_49 = arith.constant 1.000000e+00 : f32
    %136 = vector.broadcast %cst_49 : f32 to vector<8x128xf32>
    %137 = arith.addf %136, %135 : vector<8x128xf32>
    %138 = arith.divf %136, %137 : vector<8x128xf32>
    %139 = vector.extract_strided_slice %121 {offsets = [0, 256], sizes = [8, 128], strides = [1, 1]} : vector<8x384xf32> to vector<8x128xf32>
    %140 = vector.extract_strided_slice %122 {offsets = [0, 256], sizes = [8, 128], strides = [1, 1]} : vector<8x384xf32> to vector<8x128xf32>
    %141 = vector.broadcast %19 : vector<1x128xf32> to vector<8x128xf32>
    %142 = arith.addf %140, %141 : vector<8x128xf32>
    %143 = arith.mulf %130, %142 : vector<8x128xf32>
    %144 = arith.addf %139, %143 : vector<8x128xf32>
    %145 = math.tanh %144 : vector<8x128xf32>
    %cst_50 = arith.constant 1.000000e+00 : f32
    %146 = vector.broadcast %cst_50 : f32 to vector<8x128xf32>
    %147 = arith.subf %146, %138 : vector<8x128xf32>
    %148 = arith.mulf %147, %145 : vector<8x128xf32>
    %149 = arith.mulf %138, %85 : vector<8x128xf32>
    %150 = arith.addf %148, %149 : vector<8x128xf32>
    %c2_i32 = arith.constant 2 : i32
    %151 = arith.index_cast %c2_i32 : i32 to index
    %c0_51 = arith.constant 0 : index
    %c0_52 = arith.constant 0 : index
    %152 = vector.load %arg11[%151, %c0_51, %c0_52] : memref<8x8x384xf32, #tpu.memory_space<vmem>>, vector<1x8x384xf32>
    %153 = vector.shape_cast %152 : vector<1x8x384xf32> to vector<8x384xf32>
    %cst_53 = arith.constant dense<0.000000e+00> : vector<8x384xf32>
    %154 = tpu.matmul %117, %16, %cst_53 {dimension_numbers = #tpu.dot_dimension_numbers<[1], [0], [0], [1], [0, 0, 1, 1], [], []>} : vector<8x128xf32>, vector<128x384xf32>, vector<8x384xf32> -> vector<8x384xf32>
    %155 = vector.extract_strided_slice %153 {offsets = [0, 0], sizes = [8, 128], strides = [1, 1]} : vector<8x384xf32> to vector<8x128xf32>
    %156 = vector.extract_strided_slice %154 {offsets = [0, 0], sizes = [8, 128], strides = [1, 1]} : vector<8x384xf32> to vector<8x128xf32>
    %157 = arith.addf %155, %156 : vector<8x128xf32>
    %158 = arith.negf %157 : vector<8x128xf32>
    %159 = math.exp %158 : vector<8x128xf32>
    %cst_54 = arith.constant 1.000000e+00 : f32
    %160 = vector.broadcast %cst_54 : f32 to vector<8x128xf32>
    %161 = arith.addf %160, %159 : vector<8x128xf32>
    %162 = arith.divf %160, %161 : vector<8x128xf32>
    %163 = vector.extract_strided_slice %153 {offsets = [0, 128], sizes = [8, 128], strides = [1, 1]} : vector<8x384xf32> to vector<8x128xf32>
    %164 = vector.extract_strided_slice %154 {offsets = [0, 128], sizes = [8, 128], strides = [1, 1]} : vector<8x384xf32> to vector<8x128xf32>
    %165 = arith.addf %163, %164 : vector<8x128xf32>
    %166 = arith.negf %165 : vector<8x128xf32>
    %167 = math.exp %166 : vector<8x128xf32>
    %cst_55 = arith.constant 1.000000e+00 : f32
    %168 = vector.broadcast %cst_55 : f32 to vector<8x128xf32>
    %169 = arith.addf %168, %167 : vector<8x128xf32>
    %170 = arith.divf %168, %169 : vector<8x128xf32>
    %171 = vector.extract_strided_slice %153 {offsets = [0, 256], sizes = [8, 128], strides = [1, 1]} : vector<8x384xf32> to vector<8x128xf32>
    %172 = vector.extract_strided_slice %154 {offsets = [0, 256], sizes = [8, 128], strides = [1, 1]} : vector<8x384xf32> to vector<8x128xf32>
    %173 = vector.broadcast %18 : vector<1x128xf32> to vector<8x128xf32>
    %174 = arith.addf %172, %173 : vector<8x128xf32>
    %175 = arith.mulf %162, %174 : vector<8x128xf32>
    %176 = arith.addf %171, %175 : vector<8x128xf32>
    %177 = math.tanh %176 : vector<8x128xf32>
    %cst_56 = arith.constant 1.000000e+00 : f32
    %178 = vector.broadcast %cst_56 : f32 to vector<8x128xf32>
    %179 = arith.subf %178, %170 : vector<8x128xf32>
    %180 = arith.mulf %179, %177 : vector<8x128xf32>
    %181 = arith.mulf %170, %117 : vector<8x128xf32>
    %182 = arith.addf %180, %181 : vector<8x128xf32>
    %c7_i32_57 = arith.constant 7 : i32
    %183 = arith.subi %c7_i32_57, %c2_i32 : i32
    %184 = arith.index_cast %183 : i32 to index
    %c0_58 = arith.constant 0 : index
    %c0_59 = arith.constant 0 : index
    %185 = vector.load %arg12[%184, %c0_58, %c0_59] : memref<8x8x384xf32, #tpu.memory_space<vmem>>, vector<1x8x384xf32>
    %186 = vector.shape_cast %185 : vector<1x8x384xf32> to vector<8x384xf32>
    %cst_60 = arith.constant dense<0.000000e+00> : vector<8x384xf32>
    %187 = tpu.matmul %150, %17, %cst_60 {dimension_numbers = #tpu.dot_dimension_numbers<[1], [0], [0], [1], [0, 0, 1, 1], [], []>} : vector<8x128xf32>, vector<128x384xf32>, vector<8x384xf32> -> vector<8x384xf32>
    %188 = vector.extract_strided_slice %186 {offsets = [0, 0], sizes = [8, 128], strides = [1, 1]} : vector<8x384xf32> to vector<8x128xf32>
    %189 = vector.extract_strided_slice %187 {offsets = [0, 0], sizes = [8, 128], strides = [1, 1]} : vector<8x384xf32> to vector<8x128xf32>
    %190 = arith.addf %188, %189 : vector<8x128xf32>
    %191 = arith.negf %190 : vector<8x128xf32>
    %192 = math.exp %191 : vector<8x128xf32>
    %cst_61 = arith.constant 1.000000e+00 : f32
    %193 = vector.broadcast %cst_61 : f32 to vector<8x128xf32>
    %194 = arith.addf %193, %192 : vector<8x128xf32>
    %195 = arith.divf %193, %194 : vector<8x128xf32>
    %196 = vector.extract_strided_slice %186 {offsets = [0, 128], sizes = [8, 128], strides = [1, 1]} : vector<8x384xf32> to vector<8x128xf32>
    %197 = vector.extract_strided_slice %187 {offsets = [0, 128], sizes = [8, 128], strides = [1, 1]} : vector<8x384xf32> to vector<8x128xf32>
    %198 = arith.addf %196, %197 : vector<8x128xf32>
    %199 = arith.negf %198 : vector<8x128xf32>
    %200 = math.exp %199 : vector<8x128xf32>
    %cst_62 = arith.constant 1.000000e+00 : f32
    %201 = vector.broadcast %cst_62 : f32 to vector<8x128xf32>
    %202 = arith.addf %201, %200 : vector<8x128xf32>
    %203 = arith.divf %201, %202 : vector<8x128xf32>
    %204 = vector.extract_strided_slice %186 {offsets = [0, 256], sizes = [8, 128], strides = [1, 1]} : vector<8x384xf32> to vector<8x128xf32>
    %205 = vector.extract_strided_slice %187 {offsets = [0, 256], sizes = [8, 128], strides = [1, 1]} : vector<8x384xf32> to vector<8x128xf32>
    %206 = vector.broadcast %19 : vector<1x128xf32> to vector<8x128xf32>
    %207 = arith.addf %205, %206 : vector<8x128xf32>
    %208 = arith.mulf %195, %207 : vector<8x128xf32>
    %209 = arith.addf %204, %208 : vector<8x128xf32>
    %210 = math.tanh %209 : vector<8x128xf32>
    %cst_63 = arith.constant 1.000000e+00 : f32
    %211 = vector.broadcast %cst_63 : f32 to vector<8x128xf32>
    %212 = arith.subf %211, %203 : vector<8x128xf32>
    %213 = arith.mulf %212, %210 : vector<8x128xf32>
    %214 = arith.mulf %203, %150 : vector<8x128xf32>
    %215 = arith.addf %213, %214 : vector<8x128xf32>
    %c3_i32 = arith.constant 3 : i32
    %216 = arith.index_cast %c3_i32 : i32 to index
    %c0_64 = arith.constant 0 : index
    %c0_65 = arith.constant 0 : index
    %217 = vector.load %arg11[%216, %c0_64, %c0_65] : memref<8x8x384xf32, #tpu.memory_space<vmem>>, vector<1x8x384xf32>
    %218 = vector.shape_cast %217 : vector<1x8x384xf32> to vector<8x384xf32>
    %cst_66 = arith.constant dense<0.000000e+00> : vector<8x384xf32>
    %219 = tpu.matmul %182, %16, %cst_66 {dimension_numbers = #tpu.dot_dimension_numbers<[1], [0], [0], [1], [0, 0, 1, 1], [], []>} : vector<8x128xf32>, vector<128x384xf32>, vector<8x384xf32> -> vector<8x384xf32>
    %220 = vector.extract_strided_slice %218 {offsets = [0, 0], sizes = [8, 128], strides = [1, 1]} : vector<8x384xf32> to vector<8x128xf32>
    %221 = vector.extract_strided_slice %219 {offsets = [0, 0], sizes = [8, 128], strides = [1, 1]} : vector<8x384xf32> to vector<8x128xf32>
    %222 = arith.addf %220, %221 : vector<8x128xf32>
    %223 = arith.negf %222 : vector<8x128xf32>
    %224 = math.exp %223 : vector<8x128xf32>
    %cst_67 = arith.constant 1.000000e+00 : f32
    %225 = vector.broadcast %cst_67 : f32 to vector<8x128xf32>
    %226 = arith.addf %225, %224 : vector<8x128xf32>
    %227 = arith.divf %225, %226 : vector<8x128xf32>
    %228 = vector.extract_strided_slice %218 {offsets = [0, 128], sizes = [8, 128], strides = [1, 1]} : vector<8x384xf32> to vector<8x128xf32>
    %229 = vector.extract_strided_slice %219 {offsets = [0, 128], sizes = [8, 128], strides = [1, 1]} : vector<8x384xf32> to vector<8x128xf32>
    %230 = arith.addf %228, %229 : vector<8x128xf32>
    %231 = arith.negf %230 : vector<8x128xf32>
    %232 = math.exp %231 : vector<8x128xf32>
    %cst_68 = arith.constant 1.000000e+00 : f32
    %233 = vector.broadcast %cst_68 : f32 to vector<8x128xf32>
    %234 = arith.addf %233, %232 : vector<8x128xf32>
    %235 = arith.divf %233, %234 : vector<8x128xf32>
    %236 = vector.extract_strided_slice %218 {offsets = [0, 256], sizes = [8, 128], strides = [1, 1]} : vector<8x384xf32> to vector<8x128xf32>
    %237 = vector.extract_strided_slice %219 {offsets = [0, 256], sizes = [8, 128], strides = [1, 1]} : vector<8x384xf32> to vector<8x128xf32>
    %238 = vector.broadcast %18 : vector<1x128xf32> to vector<8x128xf32>
    %239 = arith.addf %237, %238 : vector<8x128xf32>
    %240 = arith.mulf %227, %239 : vector<8x128xf32>
    %241 = arith.addf %236, %240 : vector<8x128xf32>
    %242 = math.tanh %241 : vector<8x128xf32>
    %cst_69 = arith.constant 1.000000e+00 : f32
    %243 = vector.broadcast %cst_69 : f32 to vector<8x128xf32>
    %244 = arith.subf %243, %235 : vector<8x128xf32>
    %245 = arith.mulf %244, %242 : vector<8x128xf32>
    %246 = arith.mulf %235, %182 : vector<8x128xf32>
    %247 = arith.addf %245, %246 : vector<8x128xf32>
    %c7_i32_70 = arith.constant 7 : i32
    %248 = arith.subi %c7_i32_70, %c3_i32 : i32
    %249 = arith.index_cast %248 : i32 to index
    %c0_71 = arith.constant 0 : index
    %c0_72 = arith.constant 0 : index
    %250 = vector.load %arg12[%249, %c0_71, %c0_72] : memref<8x8x384xf32, #tpu.memory_space<vmem>>, vector<1x8x384xf32>
    %251 = vector.shape_cast %250 : vector<1x8x384xf32> to vector<8x384xf32>
    %cst_73 = arith.constant dense<0.000000e+00> : vector<8x384xf32>
    %252 = tpu.matmul %215, %17, %cst_73 {dimension_numbers = #tpu.dot_dimension_numbers<[1], [0], [0], [1], [0, 0, 1, 1], [], []>} : vector<8x128xf32>, vector<128x384xf32>, vector<8x384xf32> -> vector<8x384xf32>
    %253 = vector.extract_strided_slice %251 {offsets = [0, 0], sizes = [8, 128], strides = [1, 1]} : vector<8x384xf32> to vector<8x128xf32>
    %254 = vector.extract_strided_slice %252 {offsets = [0, 0], sizes = [8, 128], strides = [1, 1]} : vector<8x384xf32> to vector<8x128xf32>
    %255 = arith.addf %253, %254 : vector<8x128xf32>
    %256 = arith.negf %255 : vector<8x128xf32>
    %257 = math.exp %256 : vector<8x128xf32>
    %cst_74 = arith.constant 1.000000e+00 : f32
    %258 = vector.broadcast %cst_74 : f32 to vector<8x128xf32>
    %259 = arith.addf %258, %257 : vector<8x128xf32>
    %260 = arith.divf %258, %259 : vector<8x128xf32>
    %261 = vector.extract_strided_slice %251 {offsets = [0, 128], sizes = [8, 128], strides = [1, 1]} : vector<8x384xf32> to vector<8x128xf32>
    %262 = vector.extract_strided_slice %252 {offsets = [0, 128], sizes = [8, 128], strides = [1, 1]} : vector<8x384xf32> to vector<8x128xf32>
    %263 = arith.addf %261, %262 : vector<8x128xf32>
    %264 = arith.negf %263 : vector<8x128xf32>
    %265 = math.exp %264 : vector<8x128xf32>
    %cst_75 = arith.constant 1.000000e+00 : f32
    %266 = vector.broadcast %cst_75 : f32 to vector<8x128xf32>
    %267 = arith.addf %266, %265 : vector<8x128xf32>
    %268 = arith.divf %266, %267 : vector<8x128xf32>
    %269 = vector.extract_strided_slice %251 {offsets = [0, 256], sizes = [8, 128], strides = [1, 1]} : vector<8x384xf32> to vector<8x128xf32>
    %270 = vector.extract_strided_slice %252 {offsets = [0, 256], sizes = [8, 128], strides = [1, 1]} : vector<8x384xf32> to vector<8x128xf32>
    %271 = vector.broadcast %19 : vector<1x128xf32> to vector<8x128xf32>
    %272 = arith.addf %270, %271 : vector<8x128xf32>
    %273 = arith.mulf %260, %272 : vector<8x128xf32>
    %274 = arith.addf %269, %273 : vector<8x128xf32>
    %275 = math.tanh %274 : vector<8x128xf32>
    %cst_76 = arith.constant 1.000000e+00 : f32
    %276 = vector.broadcast %cst_76 : f32 to vector<8x128xf32>
    %277 = arith.subf %276, %268 : vector<8x128xf32>
    %278 = arith.mulf %277, %275 : vector<8x128xf32>
    %279 = arith.mulf %268, %215 : vector<8x128xf32>
    %280 = arith.addf %278, %279 : vector<8x128xf32>
    %c4_i32 = arith.constant 4 : i32
    %281 = arith.index_cast %c4_i32 : i32 to index
    %c0_77 = arith.constant 0 : index
    %c0_78 = arith.constant 0 : index
    %282 = vector.load %arg11[%281, %c0_77, %c0_78] : memref<8x8x384xf32, #tpu.memory_space<vmem>>, vector<1x8x384xf32>
    %283 = vector.shape_cast %282 : vector<1x8x384xf32> to vector<8x384xf32>
    %cst_79 = arith.constant dense<0.000000e+00> : vector<8x384xf32>
    %284 = tpu.matmul %247, %16, %cst_79 {dimension_numbers = #tpu.dot_dimension_numbers<[1], [0], [0], [1], [0, 0, 1, 1], [], []>} : vector<8x128xf32>, vector<128x384xf32>, vector<8x384xf32> -> vector<8x384xf32>
    %285 = vector.extract_strided_slice %283 {offsets = [0, 0], sizes = [8, 128], strides = [1, 1]} : vector<8x384xf32> to vector<8x128xf32>
    %286 = vector.extract_strided_slice %284 {offsets = [0, 0], sizes = [8, 128], strides = [1, 1]} : vector<8x384xf32> to vector<8x128xf32>
    %287 = arith.addf %285, %286 : vector<8x128xf32>
    %288 = arith.negf %287 : vector<8x128xf32>
    %289 = math.exp %288 : vector<8x128xf32>
    %cst_80 = arith.constant 1.000000e+00 : f32
    %290 = vector.broadcast %cst_80 : f32 to vector<8x128xf32>
    %291 = arith.addf %290, %289 : vector<8x128xf32>
    %292 = arith.divf %290, %291 : vector<8x128xf32>
    %293 = vector.extract_strided_slice %283 {offsets = [0, 128], sizes = [8, 128], strides = [1, 1]} : vector<8x384xf32> to vector<8x128xf32>
    %294 = vector.extract_strided_slice %284 {offsets = [0, 128], sizes = [8, 128], strides = [1, 1]} : vector<8x384xf32> to vector<8x128xf32>
    %295 = arith.addf %293, %294 : vector<8x128xf32>
    %296 = arith.negf %295 : vector<8x128xf32>
    %297 = math.exp %296 : vector<8x128xf32>
    %cst_81 = arith.constant 1.000000e+00 : f32
    %298 = vector.broadcast %cst_81 : f32 to vector<8x128xf32>
    %299 = arith.addf %298, %297 : vector<8x128xf32>
    %300 = arith.divf %298, %299 : vector<8x128xf32>
    %301 = vector.extract_strided_slice %283 {offsets = [0, 256], sizes = [8, 128], strides = [1, 1]} : vector<8x384xf32> to vector<8x128xf32>
    %302 = vector.extract_strided_slice %284 {offsets = [0, 256], sizes = [8, 128], strides = [1, 1]} : vector<8x384xf32> to vector<8x128xf32>
    %303 = vector.broadcast %18 : vector<1x128xf32> to vector<8x128xf32>
    %304 = arith.addf %302, %303 : vector<8x128xf32>
    %305 = arith.mulf %292, %304 : vector<8x128xf32>
    %306 = arith.addf %301, %305 : vector<8x128xf32>
    %307 = math.tanh %306 : vector<8x128xf32>
    %cst_82 = arith.constant 1.000000e+00 : f32
    %308 = vector.broadcast %cst_82 : f32 to vector<8x128xf32>
    %309 = arith.subf %308, %300 : vector<8x128xf32>
    %310 = arith.mulf %309, %307 : vector<8x128xf32>
    %311 = arith.mulf %300, %247 : vector<8x128xf32>
    %312 = arith.addf %310, %311 : vector<8x128xf32>
    %c7_i32_83 = arith.constant 7 : i32
    %313 = arith.subi %c7_i32_83, %c4_i32 : i32
    %314 = arith.index_cast %313 : i32 to index
    %c0_84 = arith.constant 0 : index
    %c0_85 = arith.constant 0 : index
    %315 = vector.load %arg12[%314, %c0_84, %c0_85] : memref<8x8x384xf32, #tpu.memory_space<vmem>>, vector<1x8x384xf32>
    %316 = vector.shape_cast %315 : vector<1x8x384xf32> to vector<8x384xf32>
    %cst_86 = arith.constant dense<0.000000e+00> : vector<8x384xf32>
    %317 = tpu.matmul %280, %17, %cst_86 {dimension_numbers = #tpu.dot_dimension_numbers<[1], [0], [0], [1], [0, 0, 1, 1], [], []>} : vector<8x128xf32>, vector<128x384xf32>, vector<8x384xf32> -> vector<8x384xf32>
    %318 = vector.extract_strided_slice %316 {offsets = [0, 0], sizes = [8, 128], strides = [1, 1]} : vector<8x384xf32> to vector<8x128xf32>
    %319 = vector.extract_strided_slice %317 {offsets = [0, 0], sizes = [8, 128], strides = [1, 1]} : vector<8x384xf32> to vector<8x128xf32>
    %320 = arith.addf %318, %319 : vector<8x128xf32>
    %321 = arith.negf %320 : vector<8x128xf32>
    %322 = math.exp %321 : vector<8x128xf32>
    %cst_87 = arith.constant 1.000000e+00 : f32
    %323 = vector.broadcast %cst_87 : f32 to vector<8x128xf32>
    %324 = arith.addf %323, %322 : vector<8x128xf32>
    %325 = arith.divf %323, %324 : vector<8x128xf32>
    %326 = vector.extract_strided_slice %316 {offsets = [0, 128], sizes = [8, 128], strides = [1, 1]} : vector<8x384xf32> to vector<8x128xf32>
    %327 = vector.extract_strided_slice %317 {offsets = [0, 128], sizes = [8, 128], strides = [1, 1]} : vector<8x384xf32> to vector<8x128xf32>
    %328 = arith.addf %326, %327 : vector<8x128xf32>
    %329 = arith.negf %328 : vector<8x128xf32>
    %330 = math.exp %329 : vector<8x128xf32>
    %cst_88 = arith.constant 1.000000e+00 : f32
    %331 = vector.broadcast %cst_88 : f32 to vector<8x128xf32>
    %332 = arith.addf %331, %330 : vector<8x128xf32>
    %333 = arith.divf %331, %332 : vector<8x128xf32>
    %334 = vector.extract_strided_slice %316 {offsets = [0, 256], sizes = [8, 128], strides = [1, 1]} : vector<8x384xf32> to vector<8x128xf32>
    %335 = vector.extract_strided_slice %317 {offsets = [0, 256], sizes = [8, 128], strides = [1, 1]} : vector<8x384xf32> to vector<8x128xf32>
    %336 = vector.broadcast %19 : vector<1x128xf32> to vector<8x128xf32>
    %337 = arith.addf %335, %336 : vector<8x128xf32>
    %338 = arith.mulf %325, %337 : vector<8x128xf32>
    %339 = arith.addf %334, %338 : vector<8x128xf32>
    %340 = math.tanh %339 : vector<8x128xf32>
    %cst_89 = arith.constant 1.000000e+00 : f32
    %341 = vector.broadcast %cst_89 : f32 to vector<8x128xf32>
    %342 = arith.subf %341, %333 : vector<8x128xf32>
    %343 = arith.mulf %342, %340 : vector<8x128xf32>
    %344 = arith.mulf %333, %280 : vector<8x128xf32>
    %345 = arith.addf %343, %344 : vector<8x128xf32>
    %c5_i32 = arith.constant 5 : i32
    %346 = arith.index_cast %c5_i32 : i32 to index
    %c0_90 = arith.constant 0 : index
    %c0_91 = arith.constant 0 : index
    %347 = vector.load %arg11[%346, %c0_90, %c0_91] : memref<8x8x384xf32, #tpu.memory_space<vmem>>, vector<1x8x384xf32>
    %348 = vector.shape_cast %347 : vector<1x8x384xf32> to vector<8x384xf32>
    %cst_92 = arith.constant dense<0.000000e+00> : vector<8x384xf32>
    %349 = tpu.matmul %312, %16, %cst_92 {dimension_numbers = #tpu.dot_dimension_numbers<[1], [0], [0], [1], [0, 0, 1, 1], [], []>} : vector<8x128xf32>, vector<128x384xf32>, vector<8x384xf32> -> vector<8x384xf32>
    %350 = vector.extract_strided_slice %348 {offsets = [0, 0], sizes = [8, 128], strides = [1, 1]} : vector<8x384xf32> to vector<8x128xf32>
    %351 = vector.extract_strided_slice %349 {offsets = [0, 0], sizes = [8, 128], strides = [1, 1]} : vector<8x384xf32> to vector<8x128xf32>
    %352 = arith.addf %350, %351 : vector<8x128xf32>
    %353 = arith.negf %352 : vector<8x128xf32>
    %354 = math.exp %353 : vector<8x128xf32>
    %cst_93 = arith.constant 1.000000e+00 : f32
    %355 = vector.broadcast %cst_93 : f32 to vector<8x128xf32>
    %356 = arith.addf %355, %354 : vector<8x128xf32>
    %357 = arith.divf %355, %356 : vector<8x128xf32>
    %358 = vector.extract_strided_slice %348 {offsets = [0, 128], sizes = [8, 128], strides = [1, 1]} : vector<8x384xf32> to vector<8x128xf32>
    %359 = vector.extract_strided_slice %349 {offsets = [0, 128], sizes = [8, 128], strides = [1, 1]} : vector<8x384xf32> to vector<8x128xf32>
    %360 = arith.addf %358, %359 : vector<8x128xf32>
    %361 = arith.negf %360 : vector<8x128xf32>
    %362 = math.exp %361 : vector<8x128xf32>
    %cst_94 = arith.constant 1.000000e+00 : f32
    %363 = vector.broadcast %cst_94 : f32 to vector<8x128xf32>
    %364 = arith.addf %363, %362 : vector<8x128xf32>
    %365 = arith.divf %363, %364 : vector<8x128xf32>
    %366 = vector.extract_strided_slice %348 {offsets = [0, 256], sizes = [8, 128], strides = [1, 1]} : vector<8x384xf32> to vector<8x128xf32>
    %367 = vector.extract_strided_slice %349 {offsets = [0, 256], sizes = [8, 128], strides = [1, 1]} : vector<8x384xf32> to vector<8x128xf32>
    %368 = vector.broadcast %18 : vector<1x128xf32> to vector<8x128xf32>
    %369 = arith.addf %367, %368 : vector<8x128xf32>
    %370 = arith.mulf %357, %369 : vector<8x128xf32>
    %371 = arith.addf %366, %370 : vector<8x128xf32>
    %372 = math.tanh %371 : vector<8x128xf32>
    %cst_95 = arith.constant 1.000000e+00 : f32
    %373 = vector.broadcast %cst_95 : f32 to vector<8x128xf32>
    %374 = arith.subf %373, %365 : vector<8x128xf32>
    %375 = arith.mulf %374, %372 : vector<8x128xf32>
    %376 = arith.mulf %365, %312 : vector<8x128xf32>
    %377 = arith.addf %375, %376 : vector<8x128xf32>
    %c7_i32_96 = arith.constant 7 : i32
    %378 = arith.subi %c7_i32_96, %c5_i32 : i32
    %379 = arith.index_cast %378 : i32 to index
    %c0_97 = arith.constant 0 : index
    %c0_98 = arith.constant 0 : index
    %380 = vector.load %arg12[%379, %c0_97, %c0_98] : memref<8x8x384xf32, #tpu.memory_space<vmem>>, vector<1x8x384xf32>
    %381 = vector.shape_cast %380 : vector<1x8x384xf32> to vector<8x384xf32>
    %cst_99 = arith.constant dense<0.000000e+00> : vector<8x384xf32>
    %382 = tpu.matmul %345, %17, %cst_99 {dimension_numbers = #tpu.dot_dimension_numbers<[1], [0], [0], [1], [0, 0, 1, 1], [], []>} : vector<8x128xf32>, vector<128x384xf32>, vector<8x384xf32> -> vector<8x384xf32>
    %383 = vector.extract_strided_slice %381 {offsets = [0, 0], sizes = [8, 128], strides = [1, 1]} : vector<8x384xf32> to vector<8x128xf32>
    %384 = vector.extract_strided_slice %382 {offsets = [0, 0], sizes = [8, 128], strides = [1, 1]} : vector<8x384xf32> to vector<8x128xf32>
    %385 = arith.addf %383, %384 : vector<8x128xf32>
    %386 = arith.negf %385 : vector<8x128xf32>
    %387 = math.exp %386 : vector<8x128xf32>
    %cst_100 = arith.constant 1.000000e+00 : f32
    %388 = vector.broadcast %cst_100 : f32 to vector<8x128xf32>
    %389 = arith.addf %388, %387 : vector<8x128xf32>
    %390 = arith.divf %388, %389 : vector<8x128xf32>
    %391 = vector.extract_strided_slice %381 {offsets = [0, 128], sizes = [8, 128], strides = [1, 1]} : vector<8x384xf32> to vector<8x128xf32>
    %392 = vector.extract_strided_slice %382 {offsets = [0, 128], sizes = [8, 128], strides = [1, 1]} : vector<8x384xf32> to vector<8x128xf32>
    %393 = arith.addf %391, %392 : vector<8x128xf32>
    %394 = arith.negf %393 : vector<8x128xf32>
    %395 = math.exp %394 : vector<8x128xf32>
    %cst_101 = arith.constant 1.000000e+00 : f32
    %396 = vector.broadcast %cst_101 : f32 to vector<8x128xf32>
    %397 = arith.addf %396, %395 : vector<8x128xf32>
    %398 = arith.divf %396, %397 : vector<8x128xf32>
    %399 = vector.extract_strided_slice %381 {offsets = [0, 256], sizes = [8, 128], strides = [1, 1]} : vector<8x384xf32> to vector<8x128xf32>
    %400 = vector.extract_strided_slice %382 {offsets = [0, 256], sizes = [8, 128], strides = [1, 1]} : vector<8x384xf32> to vector<8x128xf32>
    %401 = vector.broadcast %19 : vector<1x128xf32> to vector<8x128xf32>
    %402 = arith.addf %400, %401 : vector<8x128xf32>
    %403 = arith.mulf %390, %402 : vector<8x128xf32>
    %404 = arith.addf %399, %403 : vector<8x128xf32>
    %405 = math.tanh %404 : vector<8x128xf32>
    %cst_102 = arith.constant 1.000000e+00 : f32
    %406 = vector.broadcast %cst_102 : f32 to vector<8x128xf32>
    %407 = arith.subf %406, %398 : vector<8x128xf32>
    %408 = arith.mulf %407, %405 : vector<8x128xf32>
    %409 = arith.mulf %398, %345 : vector<8x128xf32>
    %410 = arith.addf %408, %409 : vector<8x128xf32>
    %c6_i32 = arith.constant 6 : i32
    %411 = arith.index_cast %c6_i32 : i32 to index
    %c0_103 = arith.constant 0 : index
    %c0_104 = arith.constant 0 : index
    %412 = vector.load %arg11[%411, %c0_103, %c0_104] : memref<8x8x384xf32, #tpu.memory_space<vmem>>, vector<1x8x384xf32>
    %413 = vector.shape_cast %412 : vector<1x8x384xf32> to vector<8x384xf32>
    %cst_105 = arith.constant dense<0.000000e+00> : vector<8x384xf32>
    %414 = tpu.matmul %377, %16, %cst_105 {dimension_numbers = #tpu.dot_dimension_numbers<[1], [0], [0], [1], [0, 0, 1, 1], [], []>} : vector<8x128xf32>, vector<128x384xf32>, vector<8x384xf32> -> vector<8x384xf32>
    %415 = vector.extract_strided_slice %413 {offsets = [0, 0], sizes = [8, 128], strides = [1, 1]} : vector<8x384xf32> to vector<8x128xf32>
    %416 = vector.extract_strided_slice %414 {offsets = [0, 0], sizes = [8, 128], strides = [1, 1]} : vector<8x384xf32> to vector<8x128xf32>
    %417 = arith.addf %415, %416 : vector<8x128xf32>
    %418 = arith.negf %417 : vector<8x128xf32>
    %419 = math.exp %418 : vector<8x128xf32>
    %cst_106 = arith.constant 1.000000e+00 : f32
    %420 = vector.broadcast %cst_106 : f32 to vector<8x128xf32>
    %421 = arith.addf %420, %419 : vector<8x128xf32>
    %422 = arith.divf %420, %421 : vector<8x128xf32>
    %423 = vector.extract_strided_slice %413 {offsets = [0, 128], sizes = [8, 128], strides = [1, 1]} : vector<8x384xf32> to vector<8x128xf32>
    %424 = vector.extract_strided_slice %414 {offsets = [0, 128], sizes = [8, 128], strides = [1, 1]} : vector<8x384xf32> to vector<8x128xf32>
    %425 = arith.addf %423, %424 : vector<8x128xf32>
    %426 = arith.negf %425 : vector<8x128xf32>
    %427 = math.exp %426 : vector<8x128xf32>
    %cst_107 = arith.constant 1.000000e+00 : f32
    %428 = vector.broadcast %cst_107 : f32 to vector<8x128xf32>
    %429 = arith.addf %428, %427 : vector<8x128xf32>
    %430 = arith.divf %428, %429 : vector<8x128xf32>
    %431 = vector.extract_strided_slice %413 {offsets = [0, 256], sizes = [8, 128], strides = [1, 1]} : vector<8x384xf32> to vector<8x128xf32>
    %432 = vector.extract_strided_slice %414 {offsets = [0, 256], sizes = [8, 128], strides = [1, 1]} : vector<8x384xf32> to vector<8x128xf32>
    %433 = vector.broadcast %18 : vector<1x128xf32> to vector<8x128xf32>
    %434 = arith.addf %432, %433 : vector<8x128xf32>
    %435 = arith.mulf %422, %434 : vector<8x128xf32>
    %436 = arith.addf %431, %435 : vector<8x128xf32>
    %437 = math.tanh %436 : vector<8x128xf32>
    %cst_108 = arith.constant 1.000000e+00 : f32
    %438 = vector.broadcast %cst_108 : f32 to vector<8x128xf32>
    %439 = arith.subf %438, %430 : vector<8x128xf32>
    %440 = arith.mulf %439, %437 : vector<8x128xf32>
    %441 = arith.mulf %430, %377 : vector<8x128xf32>
    %442 = arith.addf %440, %441 : vector<8x128xf32>
    %c7_i32_109 = arith.constant 7 : i32
    %443 = arith.subi %c7_i32_109, %c6_i32 : i32
    %444 = arith.index_cast %443 : i32 to index
    %c0_110 = arith.constant 0 : index
    %c0_111 = arith.constant 0 : index
    %445 = vector.load %arg12[%444, %c0_110, %c0_111] : memref<8x8x384xf32, #tpu.memory_space<vmem>>, vector<1x8x384xf32>
    %446 = vector.shape_cast %445 : vector<1x8x384xf32> to vector<8x384xf32>
    %cst_112 = arith.constant dense<0.000000e+00> : vector<8x384xf32>
    %447 = tpu.matmul %410, %17, %cst_112 {dimension_numbers = #tpu.dot_dimension_numbers<[1], [0], [0], [1], [0, 0, 1, 1], [], []>} : vector<8x128xf32>, vector<128x384xf32>, vector<8x384xf32> -> vector<8x384xf32>
    %448 = vector.extract_strided_slice %446 {offsets = [0, 0], sizes = [8, 128], strides = [1, 1]} : vector<8x384xf32> to vector<8x128xf32>
    %449 = vector.extract_strided_slice %447 {offsets = [0, 0], sizes = [8, 128], strides = [1, 1]} : vector<8x384xf32> to vector<8x128xf32>
    %450 = arith.addf %448, %449 : vector<8x128xf32>
    %451 = arith.negf %450 : vector<8x128xf32>
    %452 = math.exp %451 : vector<8x128xf32>
    %cst_113 = arith.constant 1.000000e+00 : f32
    %453 = vector.broadcast %cst_113 : f32 to vector<8x128xf32>
    %454 = arith.addf %453, %452 : vector<8x128xf32>
    %455 = arith.divf %453, %454 : vector<8x128xf32>
    %456 = vector.extract_strided_slice %446 {offsets = [0, 128], sizes = [8, 128], strides = [1, 1]} : vector<8x384xf32> to vector<8x128xf32>
    %457 = vector.extract_strided_slice %447 {offsets = [0, 128], sizes = [8, 128], strides = [1, 1]} : vector<8x384xf32> to vector<8x128xf32>
    %458 = arith.addf %456, %457 : vector<8x128xf32>
    %459 = arith.negf %458 : vector<8x128xf32>
    %460 = math.exp %459 : vector<8x128xf32>
    %cst_114 = arith.constant 1.000000e+00 : f32
    %461 = vector.broadcast %cst_114 : f32 to vector<8x128xf32>
    %462 = arith.addf %461, %460 : vector<8x128xf32>
    %463 = arith.divf %461, %462 : vector<8x128xf32>
    %464 = vector.extract_strided_slice %446 {offsets = [0, 256], sizes = [8, 128], strides = [1, 1]} : vector<8x384xf32> to vector<8x128xf32>
    %465 = vector.extract_strided_slice %447 {offsets = [0, 256], sizes = [8, 128], strides = [1, 1]} : vector<8x384xf32> to vector<8x128xf32>
    %466 = vector.broadcast %19 : vector<1x128xf32> to vector<8x128xf32>
    %467 = arith.addf %465, %466 : vector<8x128xf32>
    %468 = arith.mulf %455, %467 : vector<8x128xf32>
    %469 = arith.addf %464, %468 : vector<8x128xf32>
    %470 = math.tanh %469 : vector<8x128xf32>
    %cst_115 = arith.constant 1.000000e+00 : f32
    %471 = vector.broadcast %cst_115 : f32 to vector<8x128xf32>
    %472 = arith.subf %471, %463 : vector<8x128xf32>
    %473 = arith.mulf %472, %470 : vector<8x128xf32>
    %474 = arith.mulf %463, %410 : vector<8x128xf32>
    %475 = arith.addf %473, %474 : vector<8x128xf32>
    %c7_i32_116 = arith.constant 7 : i32
    %476 = arith.index_cast %c7_i32_116 : i32 to index
    %c0_117 = arith.constant 0 : index
    %c0_118 = arith.constant 0 : index
    %477 = vector.load %arg11[%476, %c0_117, %c0_118] : memref<8x8x384xf32, #tpu.memory_space<vmem>>, vector<1x8x384xf32>
    %478 = vector.shape_cast %477 : vector<1x8x384xf32> to vector<8x384xf32>
    %cst_119 = arith.constant dense<0.000000e+00> : vector<8x384xf32>
    %479 = tpu.matmul %442, %16, %cst_119 {dimension_numbers = #tpu.dot_dimension_numbers<[1], [0], [0], [1], [0, 0, 1, 1], [], []>} : vector<8x128xf32>, vector<128x384xf32>, vector<8x384xf32> -> vector<8x384xf32>
    %480 = vector.extract_strided_slice %478 {offsets = [0, 0], sizes = [8, 128], strides = [1, 1]} : vector<8x384xf32> to vector<8x128xf32>
    %481 = vector.extract_strided_slice %479 {offsets = [0, 0], sizes = [8, 128], strides = [1, 1]} : vector<8x384xf32> to vector<8x128xf32>
    %482 = arith.addf %480, %481 : vector<8x128xf32>
    %483 = arith.negf %482 : vector<8x128xf32>
    %484 = math.exp %483 : vector<8x128xf32>
    %cst_120 = arith.constant 1.000000e+00 : f32
    %485 = vector.broadcast %cst_120 : f32 to vector<8x128xf32>
    %486 = arith.addf %485, %484 : vector<8x128xf32>
    %487 = arith.divf %485, %486 : vector<8x128xf32>
    %488 = vector.extract_strided_slice %478 {offsets = [0, 128], sizes = [8, 128], strides = [1, 1]} : vector<8x384xf32> to vector<8x128xf32>
    %489 = vector.extract_strided_slice %479 {offsets = [0, 128], sizes = [8, 128], strides = [1, 1]} : vector<8x384xf32> to vector<8x128xf32>
    %490 = arith.addf %488, %489 : vector<8x128xf32>
    %491 = arith.negf %490 : vector<8x128xf32>
    %492 = math.exp %491 : vector<8x128xf32>
    %cst_121 = arith.constant 1.000000e+00 : f32
    %493 = vector.broadcast %cst_121 : f32 to vector<8x128xf32>
    %494 = arith.addf %493, %492 : vector<8x128xf32>
    %495 = arith.divf %493, %494 : vector<8x128xf32>
    %496 = vector.extract_strided_slice %478 {offsets = [0, 256], sizes = [8, 128], strides = [1, 1]} : vector<8x384xf32> to vector<8x128xf32>
    %497 = vector.extract_strided_slice %479 {offsets = [0, 256], sizes = [8, 128], strides = [1, 1]} : vector<8x384xf32> to vector<8x128xf32>
    %498 = vector.broadcast %18 : vector<1x128xf32> to vector<8x128xf32>
    %499 = arith.addf %497, %498 : vector<8x128xf32>
    %500 = arith.mulf %487, %499 : vector<8x128xf32>
    %501 = arith.addf %496, %500 : vector<8x128xf32>
    %502 = math.tanh %501 : vector<8x128xf32>
    %cst_122 = arith.constant 1.000000e+00 : f32
    %503 = vector.broadcast %cst_122 : f32 to vector<8x128xf32>
    %504 = arith.subf %503, %495 : vector<8x128xf32>
    %505 = arith.mulf %504, %502 : vector<8x128xf32>
    %506 = arith.mulf %495, %442 : vector<8x128xf32>
    %507 = arith.addf %505, %506 : vector<8x128xf32>
    %c7_i32_123 = arith.constant 7 : i32
    %508 = arith.subi %c7_i32_123, %c7_i32_116 : i32
    %509 = arith.index_cast %508 : i32 to index
    %c0_124 = arith.constant 0 : index
    %c0_125 = arith.constant 0 : index
    %510 = vector.load %arg12[%509, %c0_124, %c0_125] : memref<8x8x384xf32, #tpu.memory_space<vmem>>, vector<1x8x384xf32>
    %511 = vector.shape_cast %510 : vector<1x8x384xf32> to vector<8x384xf32>
    %cst_126 = arith.constant dense<0.000000e+00> : vector<8x384xf32>
    %512 = tpu.matmul %475, %17, %cst_126 {dimension_numbers = #tpu.dot_dimension_numbers<[1], [0], [0], [1], [0, 0, 1, 1], [], []>} : vector<8x128xf32>, vector<128x384xf32>, vector<8x384xf32> -> vector<8x384xf32>
    %513 = vector.extract_strided_slice %511 {offsets = [0, 0], sizes = [8, 128], strides = [1, 1]} : vector<8x384xf32> to vector<8x128xf32>
    %514 = vector.extract_strided_slice %512 {offsets = [0, 0], sizes = [8, 128], strides = [1, 1]} : vector<8x384xf32> to vector<8x128xf32>
    %515 = arith.addf %513, %514 : vector<8x128xf32>
    %516 = arith.negf %515 : vector<8x128xf32>
    %517 = math.exp %516 : vector<8x128xf32>
    %cst_127 = arith.constant 1.000000e+00 : f32
    %518 = vector.broadcast %cst_127 : f32 to vector<8x128xf32>
    %519 = arith.addf %518, %517 : vector<8x128xf32>
    %520 = arith.divf %518, %519 : vector<8x128xf32>
    %521 = vector.extract_strided_slice %511 {offsets = [0, 128], sizes = [8, 128], strides = [1, 1]} : vector<8x384xf32> to vector<8x128xf32>
    %522 = vector.extract_strided_slice %512 {offsets = [0, 128], sizes = [8, 128], strides = [1, 1]} : vector<8x384xf32> to vector<8x128xf32>
    %523 = arith.addf %521, %522 : vector<8x128xf32>
    %524 = arith.negf %523 : vector<8x128xf32>
    %525 = math.exp %524 : vector<8x128xf32>
    %cst_128 = arith.constant 1.000000e+00 : f32
    %526 = vector.broadcast %cst_128 : f32 to vector<8x128xf32>
    %527 = arith.addf %526, %525 : vector<8x128xf32>
    %528 = arith.divf %526, %527 : vector<8x128xf32>
    %529 = vector.extract_strided_slice %511 {offsets = [0, 256], sizes = [8, 128], strides = [1, 1]} : vector<8x384xf32> to vector<8x128xf32>
    %530 = vector.extract_strided_slice %512 {offsets = [0, 256], sizes = [8, 128], strides = [1, 1]} : vector<8x384xf32> to vector<8x128xf32>
    %531 = vector.broadcast %19 : vector<1x128xf32> to vector<8x128xf32>
    %532 = arith.addf %530, %531 : vector<8x128xf32>
    %533 = arith.mulf %520, %532 : vector<8x128xf32>
    %534 = arith.addf %529, %533 : vector<8x128xf32>
    %535 = math.tanh %534 : vector<8x128xf32>
    %cst_129 = arith.constant 1.000000e+00 : f32
    %536 = vector.broadcast %cst_129 : f32 to vector<8x128xf32>
    %537 = arith.subf %536, %528 : vector<8x128xf32>
    %538 = arith.mulf %537, %535 : vector<8x128xf32>
    %539 = arith.mulf %528, %475 : vector<8x128xf32>
    %540 = arith.addf %538, %539 : vector<8x128xf32>
    %c8_i32 = arith.constant 8 : i32
    %541 = arith.addf %507, %540 : vector<8x128xf32>
    %cst_130 = arith.constant 5.000000e-01 : f32
    %542 = vector.broadcast %cst_130 : f32 to vector<8x128xf32>
    %543 = arith.mulf %542, %541 : vector<8x128xf32>
    %c0_131 = arith.constant 0 : index
    %c0_132 = arith.constant 0 : index
    %544 = vector.load %arg10[%c0_131, %c0_132] : memref<8x128xf32, #tpu.memory_space<vmem>>, vector<8x128xf32>
    tpu.vector_store %arg10[%c0_131, %c0_132], %543 {strides = array<i32>} : memref<8x128xf32, #tpu.memory_space<vmem>>, vector<8x128xf32>,
    return
  }
  func.func @transform_0(%arg0: i32) -> (i32, i32, i32) {
    %c0_i32 = arith.constant 0 : i32
    %c0_i32_0 = arith.constant 0 : i32
    %c0_i32_1 = arith.constant 0 : i32
    return %c0_i32, %arg0, %c0_i32_0 : i32, i32, i32
  }
  func.func @transform_1(%arg0: i32) -> (i32, i32) {
    %c0_i32 = arith.constant 0 : i32
    %c0_i32_0 = arith.constant 0 : i32
    %c0_i32_1 = arith.constant 0 : i32
    return %c0_i32, %c0_i32_0 : i32, i32
  }
  func.func @transform_2(%arg0: i32) -> (i32, i32) {
    %c0_i32 = arith.constant 0 : i32
    %c0_i32_0 = arith.constant 0 : i32
    %c0_i32_1 = arith.constant 0 : i32
    return %c0_i32, %c0_i32_0 : i32, i32
  }
  func.func @transform_3(%arg0: i32) -> (i32, i32) {
    %c0_i32 = arith.constant 0 : i32
    %c0_i32_0 = arith.constant 0 : i32
    %c0_i32_1 = arith.constant 0 : i32
    return %c0_i32, %c0_i32_0 : i32, i32
  }
  func.func @transform_4(%arg0: i32) -> (i32, i32) {
    %c0_i32 = arith.constant 0 : i32
    %c0_i32_0 = arith.constant 0 : i32
    %c0_i32_1 = arith.constant 0 : i32
    return %c0_i32, %c0_i32_0 : i32, i32
  }
  func.func @transform_5(%arg0: i32) -> (i32, i32) {
    %c0_i32 = arith.constant 0 : i32
    %c0_i32_0 = arith.constant 0 : i32
    %c0_i32_1 = arith.constant 0 : i32
    return %c0_i32, %c0_i32_0 : i32, i32
  }
  func.func @transform_6(%arg0: i32) -> (i32, i32) {
    %c0_i32 = arith.constant 0 : i32
    %c0_i32_0 = arith.constant 0 : i32
    %c0_i32_1 = arith.constant 0 : i32
    return %c0_i32, %c0_i32_0 : i32, i32
  }
  func.func @transform_7(%arg0: i32) -> (i32, i32) {
    %c0_i32 = arith.constant 0 : i32
    %c0_i32_0 = arith.constant 0 : i32
    %c0_i32_1 = arith.constant 0 : i32
    return %c0_i32, %c0_i32_0 : i32, i32
  }
  func.func @transform_8(%arg0: i32) -> (i32, i32) {
    %c0_i32 = arith.constant 0 : i32
    %c0_i32_0 = arith.constant 0 : i32
    %c0_i32_1 = arith.constant 0 : i32
    return %c0_i32, %c0_i32_0 : i32, i32
  }
  func.func @transform_9(%arg0: i32) -> (i32, i32) {
    %c0_i32 = arith.constant 0 : i32
    %c0_i32_0 = arith.constant 0 : i32
    return %arg0, %c0_i32 : i32, i32
  }
}

</mosaic_0001>

<llo_original>
// kernel: tpu_custom_call.1
$region0: #{tpu_custom_call.1}
  #allocation0 [shape = 'u32[]', space=smem, size = 0x4, offset = 0x4, fixed_abs, tag = 'smem constant byte address 0x4 - core index']
  #allocation1 [shape = 'u32[72,128]{1,0:T(1,128)}', space=vmem, size = 0x9000, scoped, tag = 'internal scratch']
  #allocation2 [shape = 'f32[8,8,384]{2,1,0:T(8,128)}', space=vmem, size = 0x18000, scoped, tag = 'scratch operand']
  #allocation3 [shape = 'f32[8,8,384]{2,1,0:T(8,128)}', space=vmem, size = 0x18000, scoped, tag = 'scratch operand']
  %s0 = inlined_call_operand.hbm [shape: f32[8,8,30], index: 0, kind: input, shape index: {}]
  %s1 = inlined_call_operand.hbm [shape: f32[30,384], index: 1, kind: input, shape index: {}]
  %s2 = inlined_call_operand.hbm [shape: f32[30,384], index: 2, kind: input, shape index: {}]
  %s3 = inlined_call_operand.hbm [shape: f32[1,384], index: 3, kind: input, shape index: {}]
  %s4 = inlined_call_operand.vmem [shape: f32[1,384], index: 4, kind: input, shape index: {}]
  %s5 = inlined_call_operand.hbm [shape: f32[128,384], index: 5, kind: input, shape index: {}]
  %s6 = inlined_call_operand.hbm [shape: f32[128,384], index: 6, kind: input, shape index: {}]
  %s7 = inlined_call_operand.vmem [shape: f32[1,128], index: 7, kind: input, shape index: {}]
  %s8 = inlined_call_operand.vmem [shape: f32[1,128], index: 8, kind: input, shape index: {}]
  %s9 = inlined_call_operand.hbm [shape: f32[8,128], index: 9, kind: output, shape index: {}]
  %s10 = sld [smem:[#allocation0]]
  $region70: #{tpu_custom_call.1} parent=0
    _
  %s12 = ssub.s32 1, %s10
  %s13 = scalar_select 0, %s12, %s10
  $region1: #{tpu_custom_call.1} parent=0
    #allocation4 [shape = 'u8[32768]{0}', space=vmem, size = 0x8000, scoped, tag = 'input window, operand 0, single buffered']
    #allocation5 [shape = 's32[1]{0}', space=sflag, size = 0x4, scoped, tag = 'scoped memory for tpu_custom_call.1']
    #allocation6 [shape = 's32[1]{0}', space=sflag, size = 0x4, scoped, tag = 'scoped memory for tpu_custom_call.1']
    #allocation7 [shape = 'u8[49152]{0}', space=vmem, size = 0xc000, scoped, tag = 'input window, operand 1, single buffered']
    #allocation8 [shape = 's32[1]{0}', space=sflag, size = 0x4, scoped, tag = 'scoped memory for tpu_custom_call.1']
    #allocation9 [shape = 'u8[49152]{0}', space=vmem, size = 0xc000, scoped, tag = 'input window, operand 2, single buffered']
    #allocation10 [shape = 'u8[1536]{0}', space=vmem, size = 0x800, scoped, tag = 'input window, operand 3, single buffered']
    #allocation11 [shape = 's32[1]{0}', space=sflag, size = 0x4, scoped, tag = 'scoped memory for tpu_custom_call.1']
    #allocation12 [shape = 'u8[196608]{0}', space=vmem, size = 0x30000, scoped, tag = 'input window, operand 5, single buffered']
    #allocation13 [shape = 'u8[196608]{0}', space=vmem, size = 0x30000, scoped, tag = 'input window, operand 6, single buffered']
    #allocation14 [shape = 's32[1]{0}', space=sflag, size = 0x4, scoped, tag = 'scoped memory for tpu_custom_call.1']
    #allocation15 [shape = 'u8[4096]{0}', space=vmem, size = 0x1000, scoped, tag = 'output window, operand 0, single buffered']
    %14 = vsyncpa [#allocation5], 0
    %15 = vsyncpa [#allocation8], 0
    %16 = vsyncpa [#allocation11], 0
    %17 = vsyncpa [#allocation14], 0
    %18 = vsyncpa [#allocation6], 0
    // Predicated region
    $region2: #{tpu_custom_call.1} parent=1 // pred_check
      _
    $region3: #{tpu_custom_call.1} parent=1 // pred_check_branch
      %20 = sbr.rel (0) target = $region5
    $region4: #{tpu_custom_call.1} parent=1 // pred_region
      %22 = vsyncadd [#allocation5], 0
      %s23 = sshll.u32 %s0, 4
      %s24 = int_to_ptr.hbm [resolvable:$true] %s23
      %s25 = sshll.u32 [#allocation4], 4
      %s26 = int_to_ptr.vmem [resolvable:$true] %s25
      %31 = dma.hbm_to_vmem [thread:$0]  %s24, 1024, %s26, [#allocation5], 128, 128, 8
    $region5: #{tpu_custom_call.1} parent=1 // pred_fallthru
      _
    // Predicated region
    $region6: #{tpu_custom_call.1} parent=1 // pred_check
      _
    $region7: #{tpu_custom_call.1} parent=1 // pred_check_branch
      %33 = sbr.rel (0) target = $region9
    $region8: #{tpu_custom_call.1} parent=1 // pred_region
      %35 = vsyncadd [#allocation8], 0
      %s36 = sshll.u32 %s1, 4
      %s37 = int_to_ptr.hbm [resolvable:$true] %s36
      %s38 = sshll.u32 [#allocation7], 4
      %s39 = int_to_ptr.vmem [resolvable:$true] %s38
      %44 = dma.hbm_to_vmem [thread:$0]  %s37, 1536, %s39, [#allocation8], 384, 384, 24
    $region9: #{tpu_custom_call.1} parent=1 // pred_fallthru
      _
    // Predicated region
    $region10: #{tpu_custom_call.1} parent=1 // pred_check
      _
    $region11: #{tpu_custom_call.1} parent=1 // pred_check_branch
      %46 = sbr.rel (0) target = $region13
    $region12: #{tpu_custom_call.1} parent=1 // pred_region
      %48 = vsyncadd [#allocation8], 0
      %s49 = sshll.u32 %s2, 4
      %s50 = int_to_ptr.hbm [resolvable:$true] %s49
      %s51 = sshll.u32 [#allocation9], 4
      %s52 = int_to_ptr.vmem [resolvable:$true] %s51
      %57 = dma.hbm_to_vmem [thread:$0]  %s50, 1536, %s52, [#allocation8], 384, 384, 24
    $region13: #{tpu_custom_call.1} parent=1 // pred_fallthru
      _
    // Predicated region
    $region14: #{tpu_custom_call.1} parent=1 // pred_check
      _
    $region15: #{tpu_custom_call.1} parent=1 // pred_check_branch
      %59 = sbr.rel (0) target = $region17
    $region16: #{tpu_custom_call.1} parent=1 // pred_region
      %61 = vsyncadd [#allocation11], 0
      %s63 = sshll.u32 %s3, 4
      %s64 = int_to_ptr.hbm [resolvable:$true] %s63
      %s65 = sshll.u32 [#allocation10], 4
      %s66 = int_to_ptr.vmem [resolvable:$true] %s65
      %68 = dma.hbm_to_vmem [thread:$0]  %s64, 48, %s66, [#allocation11]
    $region17: #{tpu_custom_call.1} parent=1 // pred_fallthru
      _
    // Predicated region
    $region18: #{tpu_custom_call.1} parent=1 // pred_check
      _
    $region19: #{tpu_custom_call.1} parent=1 // pred_check_branch
      %70 = sbr.rel (0) target = $region21
    $region20: #{tpu_custom_call.1} parent=1 // pred_region
      _
    $region21: #{tpu_custom_call.1} parent=1 // pred_fallthru
      _
    // Predicated region
    $region22: #{tpu_custom_call.1} parent=1 // pred_check
      _
    $region23: #{tpu_custom_call.1} parent=1 // pred_check_branch
      %72 = sbr.rel (0) target = $region25
    $region24: #{tpu_custom_call.1} parent=1 // pred_region
      %74 = vsyncadd [#allocation11], 0
      %s75 = sshll.u32 %s5, 4
      %s76 = int_to_ptr.hbm [resolvable:$true] %s75
      %s77 = sshll.u32 [#allocation12], 4
      %s78 = int_to_ptr.vmem [resolvable:$true] %s77
      %83 = dma.hbm_to_vmem [thread:$0]  %s76, 6144, %s78, [#allocation11], 384, 384, 24
    $region25: #{tpu_custom_call.1} parent=1 // pred_fallthru
      _
    // Predicated region
    $region26: #{tpu_custom_call.1} parent=1 // pred_check
      _
    $region27: #{tpu_custom_call.1} parent=1 // pred_check_branch
      %85 = sbr.rel (0) target = $region29
    $region28: #{tpu_custom_call.1} parent=1 // pred_region
      %87 = vsyncadd [#allocation14], 0
      %s88 = sshll.u32 %s6, 4
      %s89 = int_to_ptr.hbm [resolvable:$true] %s88
      %s90 = sshll.u32 [#allocation13], 4
      %s91 = int_to_ptr.vmem [resolvable:$true] %s90
      %96 = dma.hbm_to_vmem [thread:$0]  %s89, 6144, %s91, [#allocation14], 384, 384, 24
    $region29: #{tpu_custom_call.1} parent=1 // pred_fallthru
      _
    // Predicated region
    $region30: #{tpu_custom_call.1} parent=1 // pred_check
      _
    $region31: #{tpu_custom_call.1} parent=1 // pred_check_branch
      %98 = sbr.rel (0) target = $region33
    $region32: #{tpu_custom_call.1} parent=1 // pred_region
      _
    $region33: #{tpu_custom_call.1} parent=1 // pred_fallthru
      _
    // Predicated region
    $region34: #{tpu_custom_call.1} parent=1 // pred_check
      _
    $region35: #{tpu_custom_call.1} parent=1 // pred_check_branch
      %100 = sbr.rel (0) target = $region37
    $region36: #{tpu_custom_call.1} parent=1 // pred_region
      _
    $region37: #{tpu_custom_call.1} parent=1 // pred_fallthru
      _
    // Predicated region
    $region38: #{tpu_custom_call.1} parent=1 // pred_check
      _
    $region39: #{tpu_custom_call.1} parent=1 // pred_check_branch
      %102 = sbr.rel (0) target = $region41
    $region40: #{tpu_custom_call.1} parent=1 // pred_region
      %104 = dma.done [#allocation5], 1024
    $region41: #{tpu_custom_call.1} parent=1 // pred_fallthru
      _
    // Predicated region
    $region42: #{tpu_custom_call.1} parent=1 // pred_check
      _
    $region43: #{tpu_custom_call.1} parent=1 // pred_check_branch
      %106 = sbr.rel (0) target = $region45
    $region44: #{tpu_custom_call.1} parent=1 // pred_region
      %108 = dma.done [#allocation8], 1536
    $region45: #{tpu_custom_call.1} parent=1 // pred_fallthru
      _
    // Predicated region
    $region46: #{tpu_custom_call.1} parent=1 // pred_check
      _
    $region47: #{tpu_custom_call.1} parent=1 // pred_check_branch
      %110 = sbr.rel (0) target = $region49
    $region48: #{tpu_custom_call.1} parent=1 // pred_region
      %112 = dma.done [#allocation8], 1536
    $region49: #{tpu_custom_call.1} parent=1 // pred_fallthru
      _
    // Predicated region
    $region50: #{tpu_custom_call.1} parent=1 // pred_check
      _
    $region51: #{tpu_custom_call.1} parent=1 // pred_check_branch
      %114 = sbr.rel (0) target = $region53
    $region52: #{tpu_custom_call.1} parent=1 // pred_region
      %116 = dma.done [#allocation11], 48
    $region53: #{tpu_custom_call.1} parent=1 // pred_fallthru
      _
    // Predicated region
    $region54: #{tpu_custom_call.1} parent=1 // pred_check
      _
    $region55: #{tpu_custom_call.1} parent=1 // pred_check_branch
      %118 = sbr.rel (0) target = $region57
    $region56: #{tpu_custom_call.1} parent=1 // pred_region
      %120 = dma.done [#allocation11], 6144
    $region57: #{tpu_custom_call.1} parent=1 // pred_fallthru
      _
    // Predicated region
    $region58: #{tpu_custom_call.1} parent=1 // pred_check
      _
    $region59: #{tpu_custom_call.1} parent=1 // pred_check_branch
      %122 = sbr.rel (0) target = $region61
    $region60: #{tpu_custom_call.1} parent=1 // pred_region
      %124 = dma.done [#allocation14], 6144
    $region61: #{tpu_custom_call.1} parent=1 // pred_fallthru
      _
    %v125 = vld [vmem:[#allocation4] sm:$0xff]
    %v126 = vld [vmem:[#allocation4 + $0x8] sm:$0xff]
    %v127 = vld [vmem:[#allocation4 + $0x10] sm:$0xff]
    %v128 = vld [vmem:[#allocation4 + $0x18] sm:$0xff]
    %v129 = vld [vmem:[#allocation4 + $0x20] sm:$0xff]
    %v130 = vld [vmem:[#allocation4 + $0x28] sm:$0xff]
    %v131 = vld [vmem:[#allocation4 + $0x30] sm:$0xff]
    %v132 = vld [vmem:[#allocation4 + $0x38] sm:$0xff]
    %v133 = vld [vmem:[#allocation7] sm:$0xff]
    %v134 = vld [vmem:[#allocation7 + $0x8] sm:$0xff]
    %v135 = vld [vmem:[#allocation7 + $0x10] sm:$0xff]
    %v136 = vld [vmem:[#allocation7 + $0x18] sm:$0xff]
    %v137 = vld [vmem:[#allocation7 + $0x20] sm:$0xff]
    %v138 = vld [vmem:[#allocation7 + $0x28] sm:$0xff]
    %v139 = vld [vmem:[#allocation7 + $0x30] sm:$0xff]
    %v140 = vld [vmem:[#allocation7 + $0x38] sm:$0xff]
    %v141 = vld [vmem:[#allocation7 + $0x40] sm:$0xff]
    %v142 = vld [vmem:[#allocation7 + $0x48] sm:$0x3f]
    %v143 = vld [vmem:[#allocation7 + $0x50] sm:$0x3f]
    %v144 = vld [vmem:[#allocation7 + $0x58] sm:$0x3f]
    %v145 = vld [vmem:[#allocation10] sm:$0x7]
    %v147 = vperm.slane %v145, 0
    %v148 = vperm.slane %v145, 1
    %v149 = vperm.slane %v145, 2
    %vm153 = vcmask 244736
    %v155 = vsel %vm153, %v125, 0
    %v158 = vsel %vm153, %v126, 0
    %v161 = vsel %vm153, %v127, 0
    %v164 = vsel %vm153, %v128, 0
    %v167 = vsel %vm153, %v129, 0
    %v170 = vsel %vm153, %v130, 0
    %v173 = vsel %vm153, %v131, 0
    %v176 = vsel %vm153, %v132, 0
    %vm178 = vcmask 1045504
    %v180 = vsel %vm178, %v142, 0
    %v183 = vsel %vm178, %v143, 0
    %v186 = vsel %vm178, %v144, 0
    %188 = vmatpush.msra.mxu0 0.0
    %189 = vmatpush.msra.mxu0 0.0
    %190 = vmatpush.msra.mxu0 0.0
    %191 = vmatpush.msra.mxu0 0.0
    %192 = vmatpush.msra.mxu0 0.0
    %193 = vmatpush.msra.mxu0 0.0
    %194 = vmatpush.msra.mxu0 0.0
    %195 = vmatpush.msra.mxu0 0.0
    %196 = vmatpush.msra.mxu0 0.0
    %197 = vmatpush.msra.mxu0 0.0
    %198 = vmatpush.msra.mxu0 0.0
    %199 = vmatpush.msra.mxu0 0.0
    %200 = vmatpush.msra.mxu0 %v180
    %201 = vmatpush.msra.mxu0 %v139
    %202 = vmatpush.msra.mxu0 %v136
    %203 = vmatpush.msra.mxu0 %v133
    %204 = vmatmul.f32.gmra.mxu0 %v155
    %v205 = vpop.f32.mrf.mxu0
    %v206 = vadd.f32 %v147, %v205
    %207 = vmatmul.f32.gmra.mxu0 %v158
    %v208 = vpop.f32.mrf.mxu0
    %v209 = vadd.f32 %v147, %v208
    %210 = vmatmul.f32.gmra.mxu0 %v161
    %v211 = vpop.f32.mrf.mxu0
    %v212 = vadd.f32 %v147, %v211
    %213 = vmatmul.f32.gmra.mxu0 %v164
    %v214 = vpop.f32.mrf.mxu0
    %v215 = vadd.f32 %v147, %v214
    %216 = vmatmul.f32.gmra.mxu0 %v167
    %v217 = vpop.f32.mrf.mxu0
    %v218 = vadd.f32 %v147, %v217
    %219 = vmatmul.f32.gmra.mxu0 %v170
    %v220 = vpop.f32.mrf.mxu0
    %v221 = vadd.f32 %v147, %v220
    %222 = vmatmul.f32.gmra.mxu0 %v173
    %v223 = vpop.f32.mrf.mxu0
    %v224 = vadd.f32 %v147, %v223
    %225 = vmatmul.f32.gmra.mxu0 %v176
    %v226 = vpop.f32.mrf.mxu0
    %v227 = vadd.f32 %v147, %v226
    %228 = vdwg.mxu0
    %229 = vmatpush.msra.mxu0 0.0
    %230 = vmatpush.msra.mxu0 0.0
    %231 = vmatpush.msra.mxu0 0.0
    %232 = vmatpush.msra.mxu0 0.0
    %233 = vmatpush.msra.mxu0 0.0
    %234 = vmatpush.msra.mxu0 0.0
    %235 = vmatpush.msra.mxu0 0.0
    %236 = vmatpush.msra.mxu0 0.0
    %237 = vmatpush.msra.mxu0 0.0
    %238 = vmatpush.msra.mxu0 0.0
    %239 = vmatpush.msra.mxu0 0.0
    %240 = vmatpush.msra.mxu0 0.0
    %241 = vmatpush.msra.mxu0 %v183
    %242 = vmatpush.msra.mxu0 %v140
    %243 = vmatpush.msra.mxu0 %v137
    %244 = vmatpush.msra.mxu0 %v134
    %245 = vmatmul.f32.gmra.mxu0 %v155
    %v246 = vpop.f32.mrf.mxu0
    %v247 = vadd.f32 %v148, %v246
    %248 = vmatmul.f32.gmra.mxu0 %v158
    %v249 = vpop.f32.mrf.mxu0
    %v250 = vadd.f32 %v148, %v249
    %251 = vmatmul.f32.gmra.mxu0 %v161
    %v252 = vpop.f32.mrf.mxu0
    %v253 = vadd.f32 %v148, %v252
    %254 = vmatmul.f32.gmra.mxu0 %v164
    %v255 = vpop.f32.mrf.mxu0
    %v256 = vadd.f32 %v148, %v255
    %257 = vmatmul.f32.gmra.mxu0 %v167
    %v258 = vpop.f32.mrf.mxu0
    %v259 = vadd.f32 %v148, %v258
    %260 = vmatmul.f32.gmra.mxu0 %v170
    %v261 = vpop.f32.mrf.mxu0
    %v262 = vadd.f32 %v148, %v261
    %263 = vmatmul.f32.gmra.mxu0 %v173
    %v264 = vpop.f32.mrf.mxu0
    %v265 = vadd.f32 %v148, %v264
    %266 = vmatmul.f32.gmra.mxu0 %v176
    %v267 = vpop.f32.mrf.mxu0
    %v268 = vadd.f32 %v148, %v267
    %269 = vdwg.mxu0
    %270 = vmatpush.msra.mxu0 0.0
    %271 = vmatpush.msra.mxu0 0.0
    %272 = vmatpush.msra.mxu0 0.0
    %273 = vmatpush.msra.mxu0 0.0
    %274 = vmatpush.msra.mxu0 0.0
    %275 = vmatpush.msra.mxu0 0.0
    %276 = vmatpush.msra.mxu0 0.0
    %277 = vmatpush.msra.mxu0 0.0
    %278 = vmatpush.msra.mxu0 0.0
    %279 = vmatpush.msra.mxu0 0.0
    %280 = vmatpush.msra.mxu0 0.0
    %281 = vmatpush.msra.mxu0 0.0
    %282 = vmatpush.msra.mxu0 %v186
    %283 = vmatpush.msra.mxu0 %v141
    %284 = vmatpush.msra.mxu0 %v138
    %285 = vmatpush.msra.mxu0 %v135
    %286 = vmatmul.f32.gmra.mxu0 %v155
    %v287 = vpop.f32.mrf.mxu0
    %v288 = vadd.f32 %v149, %v287
    %289 = vmatmul.f32.gmra.mxu0 %v158
    %v290 = vpop.f32.mrf.mxu0
    %v291 = vadd.f32 %v149, %v290
    %292 = vmatmul.f32.gmra.mxu0 %v161
    %v293 = vpop.f32.mrf.mxu0
    %v294 = vadd.f32 %v149, %v293
    %295 = vmatmul.f32.gmra.mxu0 %v164
    %v296 = vpop.f32.mrf.mxu0
    %v297 = vadd.f32 %v149, %v296
    %298 = vmatmul.f32.gmra.mxu0 %v167
    %v299 = vpop.f32.mrf.mxu0
    %v300 = vadd.f32 %v149, %v299
    %301 = vmatmul.f32.gmra.mxu0 %v170
    %v302 = vpop.f32.mrf.mxu0
    %v303 = vadd.f32 %v149, %v302
    %304 = vmatmul.f32.gmra.mxu0 %v173
    %v305 = vpop.f32.mrf.mxu0
    %v306 = vadd.f32 %v149, %v305
    %307 = vmatmul.f32.gmra.mxu0 %v176
    %v308 = vpop.f32.mrf.mxu0
    %v309 = vadd.f32 %v149, %v308
    %310 = vdwg.mxu0
    %311 = vst [vmem:[#allocation2] sm:$0xff] %v206
    %312 = vst [vmem:[#allocation2 + $0x8] sm:$0xff] %v247
    %313 = vst [vmem:[#allocation2 + $0x10] sm:$0xff] %v288
    %314 = vst [vmem:[#allocation2 + $0x18] sm:$0xff] %v209
    %315 = vst [vmem:[#allocation2 + $0x20] sm:$0xff] %v250
    %316 = vst [vmem:[#allocation2 + $0x28] sm:$0xff] %v291
    %317 = vst [vmem:[#allocation2 + $0x30] sm:$0xff] %v212
    %318 = vst [vmem:[#allocation2 + $0x38] sm:$0xff] %v253
    %319 = vst [vmem:[#allocation2 + $0x40] sm:$0xff] %v294
    %320 = vst [vmem:[#allocation2 + $0x48] sm:$0xff] %v215
    %321 = vst [vmem:[#allocation2 + $0x50] sm:$0xff] %v256
    %322 = vst [vmem:[#allocation2 + $0x58] sm:$0xff] %v297
    %323 = vst [vmem:[#allocation2 + $0x60] sm:$0xff] %v218
    %324 = vst [vmem:[#allocation2 + $0x68] sm:$0xff] %v259
    %325 = vst [vmem:[#allocation2 + $0x70] sm:$0xff] %v300
    %326 = vst [vmem:[#allocation2 + $0x78] sm:$0xff] %v221
    %327 = vst [vmem:[#allocation2 + $0x80] sm:$0xff] %v262
    %328 = vst [vmem:[#allocation2 + $0x88] sm:$0xff] %v303
    %329 = vst [vmem:[#allocation2 + $0x90] sm:$0xff] %v224
    %330 = vst [vmem:[#allocation2 + $0x98] sm:$0xff] %v265
    %331 = vst [vmem:[#allocation2 + $0xa0] sm:$0xff] %v306
    %332 = vst [vmem:[#allocation2 + $0xa8] sm:$0xff] %v227
    %333 = vst [vmem:[#allocation2 + $0xb0] sm:$0xff] %v268
    %334 = vst [vmem:[#allocation2 + $0xb8] sm:$0xff] %v309
    %v335 = vld [vmem:[#allocation9] sm:$0xff]
    %v336 = vld [vmem:[#allocation9 + $0x8] sm:$0xff]
    %v337 = vld [vmem:[#allocation9 + $0x10] sm:$0xff]
    %v338 = vld [vmem:[#allocation9 + $0x18] sm:$0xff]
    %v339 = vld [vmem:[#allocation9 + $0x20] sm:$0xff]
    %v340 = vld [vmem:[#allocation9 + $0x28] sm:$0xff]
    %v341 = vld [vmem:[#allocation9 + $0x30] sm:$0xff]
    %v342 = vld [vmem:[#allocation9 + $0x38] sm:$0xff]
    %v343 = vld [vmem:[#allocation9 + $0x40] sm:$0xff]
    %v344 = vld [vmem:[#allocation9 + $0x48] sm:$0x3f]
    %v345 = vld [vmem:[#allocation9 + $0x50] sm:$0x3f]
    %v346 = vld [vmem:[#allocation9 + $0x58] sm:$0x3f]
    %v347 = vld [vmem:[%s4] sm:$0x7]
    %v349 = vperm.slane %v347, 0
    %v350 = vperm.slane %v347, 1
    %v351 = vperm.slane %v347, 2
    %v356 = vsel %vm178, %v344, 0
    %v359 = vsel %vm178, %v345, 0
    %v362 = vsel %vm178, %v346, 0
    %364 = vmatpush.msra.mxu0 0.0
    %365 = vmatpush.msra.mxu0 0.0
    %366 = vmatpush.msra.mxu0 0.0
    %367 = vmatpush.msra.mxu0 0.0
    %368 = vmatpush.msra.mxu0 0.0
    %369 = vmatpush.msra.mxu0 0.0
    %370 = vmatpush.msra.mxu0 0.0
    %371 = vmatpush.msra.mxu0 0.0
    %372 = vmatpush.msra.mxu0 0.0
    %373 = vmatpush.msra.mxu0 0.0
    %374 = vmatpush.msra.mxu0 0.0
    %375 = vmatpush.msra.mxu0 0.0
    %376 = vmatpush.msra.mxu0 %v356
    %377 = vmatpush.msra.mxu0 %v341
    %378 = vmatpush.msra.mxu0 %v338
    %379 = vmatpush.msra.mxu0 %v335
    %380 = vmatmul.f32.gmra.mxu0 %v155
    %v381 = vpop.f32.mrf.mxu0
    %v382 = vadd.f32 %v349, %v381
    %383 = vmatmul.f32.gmra.mxu0 %v158
    %v384 = vpop.f32.mrf.mxu0
    %v385 = vadd.f32 %v349, %v384
    %386 = vmatmul.f32.gmra.mxu0 %v161
    %v387 = vpop.f32.mrf.mxu0
    %v388 = vadd.f32 %v349, %v387
    %389 = vmatmul.f32.gmra.mxu0 %v164
    %v390 = vpop.f32.mrf.mxu0
    %v391 = vadd.f32 %v349, %v390
    %392 = vmatmul.f32.gmra.mxu0 %v167
    %v393 = vpop.f32.mrf.mxu0
    %v394 = vadd.f32 %v349, %v393
    %395 = vmatmul.f32.gmra.mxu0 %v170
    %v396 = vpop.f32.mrf.mxu0
    %v397 = vadd.f32 %v349, %v396
    %398 = vmatmul.f32.gmra.mxu0 %v173
    %v399 = vpop.f32.mrf.mxu0
    %v400 = vadd.f32 %v349, %v399
    %401 = vmatmul.f32.gmra.mxu0 %v176
    %v402 = vpop.f32.mrf.mxu0
    %v403 = vadd.f32 %v349, %v402
    %404 = vdwg.mxu0
    %405 = vmatpush.msra.mxu0 0.0
    %406 = vmatpush.msra.mxu0 0.0
    %407 = vmatpush.msra.mxu0 0.0
    %408 = vmatpush.msra.mxu0 0.0
    %409 = vmatpush.msra.mxu0 0.0
    %410 = vmatpush.msra.mxu0 0.0
    %411 = vmatpush.msra.mxu0 0.0
    %412 = vmatpush.msra.mxu0 0.0
    %413 = vmatpush.msra.mxu0 0.0
    %414 = vmatpush.msra.mxu0 0.0
    %415 = vmatpush.msra.mxu0 0.0
    %416 = vmatpush.msra.mxu0 0.0
    %417 = vmatpush.msra.mxu0 %v359
    %418 = vmatpush.msra.mxu0 %v342
    %419 = vmatpush.msra.mxu0 %v339
    %420 = vmatpush.msra.mxu0 %v336
    %421 = vmatmul.f32.gmra.mxu0 %v155
    %v422 = vpop.f32.mrf.mxu0
    %v423 = vadd.f32 %v350, %v422
    %424 = vmatmul.f32.gmra.mxu0 %v158
    %v425 = vpop.f32.mrf.mxu0
    %v426 = vadd.f32 %v350, %v425
    %427 = vmatmul.f32.gmra.mxu0 %v161
    %v428 = vpop.f32.mrf.mxu0
    %v429 = vadd.f32 %v350, %v428
    %430 = vmatmul.f32.gmra.mxu0 %v164
    %v431 = vpop.f32.mrf.mxu0
    %v432 = vadd.f32 %v350, %v431
    %433 = vmatmul.f32.gmra.mxu0 %v167
    %v434 = vpop.f32.mrf.mxu0
    %v435 = vadd.f32 %v350, %v434
    %436 = vmatmul.f32.gmra.mxu0 %v170
    %v437 = vpop.f32.mrf.mxu0
    %v438 = vadd.f32 %v350, %v437
    %439 = vmatmul.f32.gmra.mxu0 %v173
    %v440 = vpop.f32.mrf.mxu0
    %v441 = vadd.f32 %v350, %v440
    %442 = vmatmul.f32.gmra.mxu0 %v176
    %v443 = vpop.f32.mrf.mxu0
    %v444 = vadd.f32 %v350, %v443
    %445 = vdwg.mxu0
    %446 = vmatpush.msra.mxu0 0.0
    %447 = vmatpush.msra.mxu0 0.0
    %448 = vmatpush.msra.mxu0 0.0
    %449 = vmatpush.msra.mxu0 0.0
    %450 = vmatpush.msra.mxu0 0.0
    %451 = vmatpush.msra.mxu0 0.0
    %452 = vmatpush.msra.mxu0 0.0
    %453 = vmatpush.msra.mxu0 0.0
    %454 = vmatpush.msra.mxu0 0.0
    %455 = vmatpush.msra.mxu0 0.0
    %456 = vmatpush.msra.mxu0 0.0
    %457 = vmatpush.msra.mxu0 0.0
    %458 = vmatpush.msra.mxu0 %v362
    %459 = vmatpush.msra.mxu0 %v343
    %460 = vmatpush.msra.mxu0 %v340
    %461 = vmatpush.msra.mxu0 %v337
    %462 = vmatmul.f32.gmra.mxu0 %v155
    %v463 = vpop.f32.mrf.mxu0
    %v464 = vadd.f32 %v351, %v463
    %465 = vmatmul.f32.gmra.mxu0 %v158
    %v466 = vpop.f32.mrf.mxu0
    %v467 = vadd.f32 %v351, %v466
    %468 = vmatmul.f32.gmra.mxu0 %v161
    %v469 = vpop.f32.mrf.mxu0
    %v470 = vadd.f32 %v351, %v469
    %471 = vmatmul.f32.gmra.mxu0 %v164
    %v472 = vpop.f32.mrf.mxu0
    %v473 = vadd.f32 %v351, %v472
    %474 = vmatmul.f32.gmra.mxu0 %v167
    %v475 = vpop.f32.mrf.mxu0
    %v476 = vadd.f32 %v351, %v475
    %477 = vmatmul.f32.gmra.mxu0 %v170
    %v478 = vpop.f32.mrf.mxu0
    %v479 = vadd.f32 %v351, %v478
    %480 = vmatmul.f32.gmra.mxu0 %v173
    %v481 = vpop.f32.mrf.mxu0
    %v482 = vadd.f32 %v351, %v481
    %483 = vmatmul.f32.gmra.mxu0 %v176
    %v484 = vpop.f32.mrf.mxu0
    %v485 = vadd.f32 %v351, %v484
    %486 = vdwg.mxu0
    %487 = vst [vmem:[#allocation3] sm:$0xff] %v382
    %488 = vst [vmem:[#allocation3 + $0x8] sm:$0xff] %v423
    %489 = vst [vmem:[#allocation3 + $0x10] sm:$0xff] %v464
    %490 = vst [vmem:[#allocation3 + $0x18] sm:$0xff] %v385
    %491 = vst [vmem:[#allocation3 + $0x20] sm:$0xff] %v426
    %492 = vst [vmem:[#allocation3 + $0x28] sm:$0xff] %v467
    %493 = vst [vmem:[#allocation3 + $0x30] sm:$0xff] %v388
    %494 = vst [vmem:[#allocation3 + $0x38] sm:$0xff] %v429
    %495 = vst [vmem:[#allocation3 + $0x40] sm:$0xff] %v470
    %496 = vst [vmem:[#allocation3 + $0x48] sm:$0xff] %v391
    %497 = vst [vmem:[#allocation3 + $0x50] sm:$0xff] %v432
    %498 = vst [vmem:[#allocation3 + $0x58] sm:$0xff] %v473
    %499 = vst [vmem:[#allocation3 + $0x60] sm:$0xff] %v394
    %500 = vst [vmem:[#allocation3 + $0x68] sm:$0xff] %v435
    %501 = vst [vmem:[#allocation3 + $0x70] sm:$0xff] %v476
    %502 = vst [vmem:[#allocation3 + $0x78] sm:$0xff] %v397
    %503 = vst [vmem:[#allocation3 + $0x80] sm:$0xff] %v438
    %504 = vst [vmem:[#allocation3 + $0x88] sm:$0xff] %v479
    %505 = vst [vmem:[#allocation3 + $0x90] sm:$0xff] %v400
    %506 = vst [vmem:[#allocation3 + $0x98] sm:$0xff] %v441
    %507 = vst [vmem:[#allocation3 + $0xa0] sm:$0xff] %v482
    %508 = vst [vmem:[#allocation3 + $0xa8] sm:$0xff] %v403
    %509 = vst [vmem:[#allocation3 + $0xb0] sm:$0xff] %v444
    %510 = vst [vmem:[#allocation3 + $0xb8] sm:$0xff] %v485
    %v511 = vld [vmem:[#allocation12] sm:$0xff]
    %v512 = vld [vmem:[#allocation12 + $0x8] sm:$0xff]
    %v513 = vld [vmem:[#allocation12 + $0x10] sm:$0xff]
    %v514 = vld [vmem:[#allocation12 + $0x18] sm:$0xff]
    %v515 = vld [vmem:[#allocation12 + $0x20] sm:$0xff]
    %v516 = vld [vmem:[#allocation12 + $0x28] sm:$0xff]
    %v517 = vld [vmem:[#allocation12 + $0x30] sm:$0xff]
    %v518 = vld [vmem:[#allocation12 + $0x38] sm:$0xff]
    %v519 = vld [vmem:[#allocation12 + $0x40] sm:$0xff]
    %v520 = vld [vmem:[#allocation12 + $0x48] sm:$0xff]
    %v521 = vld [vmem:[#allocation12 + $0x50] sm:$0xff]
    %v522 = vld [vmem:[#allocation12 + $0x58] sm:$0xff]
    %v523 = vld [vmem:[#allocation12 + $0x60] sm:$0xff]
    %v524 = vld [vmem:[#allocation12 + $0x68] sm:$0xff]
    %v525 = vld [vmem:[#allocation12 + $0x70] sm:$0xff]
    %v526 = vld [vmem:[#allocation12 + $0x78] sm:$0xff]
    %v527 = vld [vmem:[#allocation12 + $0x80] sm:$0xff]
    %v528 = vld [vmem:[#allocation12 + $0x88] sm:$0xff]
    %v529 = vld [vmem:[#allocation12 + $0x90] sm:$0xff]
    %v530 = vld [vmem:[#allocation12 + $0x98] sm:$0xff]
    %v531 = vld [vmem:[#allocation12 + $0xa0] sm:$0xff]
    %v532 = vld [vmem:[#allocation12 + $0xa8] sm:$0xff]
    %v533 = vld [vmem:[#allocation12 + $0xb0] sm:$0xff]
    %v534 = vld [vmem:[#allocation12 + $0xb8] sm:$0xff]
    %v535 = vld [vmem:[#allocation12 + $0xc0] sm:$0xff]
    %v536 = vld [vmem:[#allocation12 + $0xc8] sm:$0xff]
    %v537 = vld [vmem:[#allocation12 + $0xd0] sm:$0xff]
    %v538 = vld [vmem:[#allocation12 + $0xd8] sm:$0xff]
    %v539 = vld [vmem:[#allocation12 + $0xe0] sm:$0xff]
    %v540 = vld [vmem:[#allocation12 + $0xe8] sm:$0xff]
    %v541 = vld [vmem:[#allocation12 + $0xf0] sm:$0xff]
    %v542 = vld [vmem:[#allocation12 + $0xf8] sm:$0xff]
    %v543 = vld [vmem:[#allocation12 + $0x100] sm:$0xff]
    %v544 = vld [vmem:[#allocation12 + $0x108] sm:$0xff]
    %v545 = vld [vmem:[#allocation12 + $0x110] sm:$0xff]
    %v546 = vld [vmem:[#allocation12 + $0x118] sm:$0xff]
    %v547 = vld [vmem:[#allocation12 + $0x120] sm:$0xff]
    %v548 = vld [vmem:[#allocation12 + $0x128] sm:$0xff]
    %v549 = vld [vmem:[#allocation12 + $0x130] sm:$0xff]
    %v550 = vld [vmem:[#allocation12 + $0x138] sm:$0xff]
    %v551 = vld [vmem:[#allocation12 + $0x140] sm:$0xff]
    %v552 = vld [vmem:[#allocation12 + $0x148] sm:$0xff]
    %v553 = vld [vmem:[#allocation12 + $0x150] sm:$0xff]
    %v554 = vld [vmem:[#allocation12 + $0x158] sm:$0xff]
    %v555 = vld [vmem:[#allocation12 + $0x160] sm:$0xff]
    %v556 = vld [vmem:[#allocation12 + $0x168] sm:$0xff]
    %v557 = vld [vmem:[#allocation12 + $0x170] sm:$0xff]
    %v558 = vld [vmem:[#allocation12 + $0x178] sm:$0xff]
    %v559 = vld [vmem:[#allocation13] sm:$0xff]
    %v560 = vld [vmem:[#allocation13 + $0x8] sm:$0xff]
    %v561 = vld [vmem:[#allocation13 + $0x10] sm:$0xff]
    %v562 = vld [vmem:[#allocation13 + $0x18] sm:$0xff]
    %v563 = vld [vmem:[#allocation13 + $0x20] sm:$0xff]
    %v564 = vld [vmem:[#allocation13 + $0x28] sm:$0xff]
    %v565 = vld [vmem:[#allocation13 + $0x30] sm:$0xff]
    %v566 = vld [vmem:[#allocation13 + $0x38] sm:$0xff]
    %v567 = vld [vmem:[#allocation13 + $0x40] sm:$0xff]
    %v568 = vld [vmem:[#allocation13 + $0x48] sm:$0xff]
    %v569 = vld [vmem:[#allocation13 + $0x50] sm:$0xff]
    %v570 = vld [vmem:[#allocation13 + $0x58] sm:$0xff]
    %v571 = vld [vmem:[#allocation13 + $0x60] sm:$0xff]
    %v572 = vld [vmem:[#allocation13 + $0x68] sm:$0xff]
    %v573 = vld [vmem:[#allocation13 + $0x70] sm:$0xff]
    %v574 = vld [vmem:[#allocation13 + $0x78] sm:$0xff]
    %v575 = vld [vmem:[#allocation13 + $0x80] sm:$0xff]
    %v576 = vld [vmem:[#allocation13 + $0x88] sm:$0xff]
    %v577 = vld [vmem:[#allocation13 + $0x90] sm:$0xff]
    %v578 = vld [vmem:[#allocation13 + $0x98] sm:$0xff]
    %v579 = vld [vmem:[#allocation13 + $0xa0] sm:$0xff]
    %v580 = vld [vmem:[#allocation13 + $0xa8] sm:$0xff]
    %v581 = vld [vmem:[#allocation13 + $0xb0] sm:$0xff]
    %v582 = vld [vmem:[#allocation13 + $0xb8] sm:$0xff]
    %v583 = vld [vmem:[#allocation13 + $0xc0] sm:$0xff]
    %v584 = vld [vmem:[#allocation13 + $0xc8] sm:$0xff]
    %v585 = vld [vmem:[#allocation13 + $0xd0] sm:$0xff]
    %v586 = vld [vmem:[#allocation13 + $0xd8] sm:$0xff]
    %v587 = vld [vmem:[#allocation13 + $0xe0] sm:$0xff]
    %v588 = vld [vmem:[#allocation13 + $0xe8] sm:$0xff]
    %v589 = vld [vmem:[#allocation13 + $0xf0] sm:$0xff]
    %v590 = vld [vmem:[#allocation13 + $0xf8] sm:$0xff]
    %v591 = vld [vmem:[#allocation13 + $0x100] sm:$0xff]
    %v592 = vld [vmem:[#allocation13 + $0x108] sm:$0xff]
    %v593 = vld [vmem:[#allocation13 + $0x110] sm:$0xff]
    %v594 = vld [vmem:[#allocation13 + $0x118] sm:$0xff]
    %v595 = vld [vmem:[#allocation13 + $0x120] sm:$0xff]
    %v596 = vld [vmem:[#allocation13 + $0x128] sm:$0xff]
    %v597 = vld [vmem:[#allocation13 + $0x130] sm:$0xff]
    %v598 = vld [vmem:[#allocation13 + $0x138] sm:$0xff]
    %v599 = vld [vmem:[#allocation13 + $0x140] sm:$0xff]
    %v600 = vld [vmem:[#allocation13 + $0x148] sm:$0xff]
    %v601 = vld [vmem:[#allocation13 + $0x150] sm:$0xff]
    %v602 = vld [vmem:[#allocation13 + $0x158] sm:$0xff]
    %v603 = vld [vmem:[#allocation13 + $0x160] sm:$0xff]
    %v604 = vld [vmem:[#allocation13 + $0x168] sm:$0xff]
    %v605 = vld [vmem:[#allocation13 + $0x170] sm:$0xff]
    %v606 = vld [vmem:[#allocation13 + $0x178] sm:$0xff]
    %v607 = vld [vmem:[%s7] sm:$0x1]
    %v608 = vld [vmem:[%s8] sm:$0x1]
    %v609 = vld [vmem:[#allocation2] sm:$0xff]
    %v610 = vld [vmem:[#allocation2 + $0x8] sm:$0xff]
    %v611 = vld [vmem:[#allocation2 + $0x10] sm:$0xff]
    %612 = vmatpush.msra.mxu0 %v556
    %613 = vmatpush.msra.mxu0 %v553
    %614 = vmatpush.msra.mxu0 %v550
    %615 = vmatpush.msra.mxu0 %v547
    %616 = vmatpush.msra.mxu0 %v544
    %617 = vmatpush.msra.mxu0 %v541
    %618 = vmatpush.msra.mxu0 %v538
    %619 = vmatpush.msra.mxu0 %v535
    %620 = vmatpush.msra.mxu0 %v532
    %621 = vmatpush.msra.mxu0 %v529
    %622 = vmatpush.msra.mxu0 %v526
    %623 = vmatpush.msra.mxu0 %v523
    %624 = vmatpush.msra.mxu0 %v520
    %625 = vmatpush.msra.mxu0 %v517
    %626 = vmatpush.msra.mxu0 %v514
    %627 = vmatpush.msra.mxu0 %v511
    %628 = vmatmul.f32.gmra.mxu0 0.0
    %v629 = vpop.f32.mrf.mxu0
    %v630 = vadd.f32 0.0, %v629
    %631 = vdwg.mxu0
    %632 = vmatpush.msra.mxu0 %v557
    %633 = vmatpush.msra.mxu0 %v554
    %634 = vmatpush.msra.mxu0 %v551
    %635 = vmatpush.msra.mxu0 %v548
    %636 = vmatpush.msra.mxu0 %v545
    %637 = vmatpush.msra.mxu0 %v542
    %638 = vmatpush.msra.mxu0 %v539
    %639 = vmatpush.msra.mxu0 %v536
    %640 = vmatpush.msra.mxu0 %v533
    %641 = vmatpush.msra.mxu0 %v530
    %642 = vmatpush.msra.mxu0 %v527
    %643 = vmatpush.msra.mxu0 %v524
    %644 = vmatpush.msra.mxu0 %v521
    %645 = vmatpush.msra.mxu0 %v518
    %646 = vmatpush.msra.mxu0 %v515
    %647 = vmatpush.msra.mxu0 %v512
    %648 = vmatmul.f32.gmra.mxu0 0.0
    %v649 = vpop.f32.mrf.mxu0
    %v650 = vadd.f32 0.0, %v649
    %651 = vdwg.mxu0
    %652 = vmatpush.msra.mxu0 %v558
    %653 = vmatpush.msra.mxu0 %v555
    %654 = vmatpush.msra.mxu0 %v552
    %655 = vmatpush.msra.mxu0 %v549
    %656 = vmatpush.msra.mxu0 %v546
    %657 = vmatpush.msra.mxu0 %v543
    %658 = vmatpush.msra.mxu0 %v540
    %659 = vmatpush.msra.mxu0 %v537
    %660 = vmatpush.msra.mxu0 %v534
    %661 = vmatpush.msra.mxu0 %v531
    %662 = vmatpush.msra.mxu0 %v528
    %663 = vmatpush.msra.mxu0 %v525
    %664 = vmatpush.msra.mxu0 %v522
    %665 = vmatpush.msra.mxu0 %v519
    %666 = vmatpush.msra.mxu0 %v516
    %667 = vmatpush.msra.mxu0 %v513
    %668 = vmatmul.f32.gmra.mxu0 0.0
    %v669 = vpop.f32.mrf.mxu0
    %v670 = vadd.f32 0.0, %v669
    %671 = vdwg.mxu0
    %v672 = vadd.f32 %v609, %v630
    %v673 = vxor.u32 %v672, 2147483648
    %v674 = vmul.f32 %v673, 1.442695
    %v675 = vpow.pop %v674
    %v676 = vadd.f32 %v675, 1.0
    %v677 = vrcp.pop %v676
    %v678 = vmul.f32 %v676, %v677
    %v679 = vsub.f32 1.0, %v678
    %v680 = vmul.f32 %v677, %v679
    %v681 = vadd.f32 %v677, %v680
    %vm682 = vweird.f32 %v676
    %vm683 = vweird.f32 %v677
    %vm684 = vmor %vm682, %vm683
    %v685 = vsel %vm684, %v677, %v681
    %v686 = vand.u32 2147483647, %v676
    %vm687 = vcmp.eq.f32.partialorder %v686, 8.507059e+37
    %v688 = vand.u32 %v676, 2147483648
    %v689 = vor.u32 1.1754944e-38, %v688
    %v690 = vsel %vm687, %v689, %v685
    %v691 = vmul.f32 1.0, %v690
    %v692 = vadd.f32 %v610, %v650
    %v693 = vxor.u32 %v692, 2147483648
    %v694 = vmul.f32 %v693, 1.442695
    %v695 = vpow.pop %v694
    %v696 = vadd.f32 %v695, 1.0
    %v697 = vrcp.pop %v696
    %v698 = vmul.f32 %v696, %v697
    %v699 = vsub.f32 1.0, %v698
    %v700 = vmul.f32 %v697, %v699
    %v701 = vadd.f32 %v697, %v700
    %vm702 = vweird.f32 %v696
    %vm703 = vweird.f32 %v697
    %vm704 = vmor %vm702, %vm703
    %v705 = vsel %vm704, %v697, %v701
    %v706 = vand.u32 2147483647, %v696
    %vm707 = vcmp.eq.f32.partialorder %v706, 8.507059e+37
    %v708 = vand.u32 %v696, 2147483648
    %v709 = vor.u32 1.1754944e-38, %v708
    %v710 = vsel %vm707, %v709, %v705
    %v711 = vmul.f32 1.0, %v710
    %v713 = vperm.slane %v607, 0
    %v715 = vadd.f32 %v670, %v713
    %v716 = vmul.f32 %v691, %v715
    %v717 = vadd.f32 %v611, %v716
    %v718 = vtanh.pop %v717
    %v719 = vsub.f32 1.0, %v711
    %v720 = vmul.f32 %v719, %v718
    %v721 = vmul.f32 %v711, 0.0
    %v722 = vadd.f32 %v720, %v721
    %s723 = scalar_lea.vmem [#allocation3], 168
    %v724 = vld [vmem:[%s723] sm:$0xff]
    %v725 = vld [vmem:[%s723 + $0x8] sm:$0xff]
    %v726 = vld [vmem:[%s723 + $0x10] sm:$0xff]
    %727 = vmatpush.msra.mxu0 %v604
    %728 = vmatpush.msra.mxu0 %v601
    %729 = vmatpush.msra.mxu0 %v598
    %730 = vmatpush.msra.mxu0 %v595
    %731 = vmatpush.msra.mxu0 %v592
    %732 = vmatpush.msra.mxu0 %v589
    %733 = vmatpush.msra.mxu0 %v586
    %734 = vmatpush.msra.mxu0 %v583
    %735 = vmatpush.msra.mxu0 %v580
    %736 = vmatpush.msra.mxu0 %v577
    %737 = vmatpush.msra.mxu0 %v574
    %738 = vmatpush.msra.mxu0 %v571
    %739 = vmatpush.msra.mxu0 %v568
    %740 = vmatpush.msra.mxu0 %v565
    %741 = vmatpush.msra.mxu0 %v562
    %742 = vmatpush.msra.mxu0 %v559
    %743 = vmatmul.f32.gmra.mxu0 0.0
    %v744 = vpop.f32.mrf.mxu0
    %v745 = vadd.f32 0.0, %v744
    %746 = vdwg.mxu0
    %747 = vmatpush.msra.mxu0 %v605
    %748 = vmatpush.msra.mxu0 %v602
    %749 = vmatpush.msra.mxu0 %v599
    %750 = vmatpush.msra.mxu0 %v596
    %751 = vmatpush.msra.mxu0 %v593
    %752 = vmatpush.msra.mxu0 %v590
    %753 = vmatpush.msra.mxu0 %v587
    %754 = vmatpush.msra.mxu0 %v584
    %755 = vmatpush.msra.mxu0 %v581
    %756 = vmatpush.msra.mxu0 %v578
    %757 = vmatpush.msra.mxu0 %v575
    %758 = vmatpush.msra.mxu0 %v572
    %759 = vmatpush.msra.mxu0 %v569
    %760 = vmatpush.msra.mxu0 %v566
    %761 = vmatpush.msra.mxu0 %v563
    %762 = vmatpush.msra.mxu0 %v560
    %763 = vmatmul.f32.gmra.mxu0 0.0
    %v764 = vpop.f32.mrf.mxu0
    %v765 = vadd.f32 0.0, %v764
    %766 = vdwg.mxu0
    %767 = vmatpush.msra.mxu0 %v606
    %768 = vmatpush.msra.mxu0 %v603
    %769 = vmatpush.msra.mxu0 %v600
    %770 = vmatpush.msra.mxu0 %v597
    %771 = vmatpush.msra.mxu0 %v594
    %772 = vmatpush.msra.mxu0 %v591
    %773 = vmatpush.msra.mxu0 %v588
    %774 = vmatpush.msra.mxu0 %v585
    %775 = vmatpush.msra.mxu0 %v582
    %776 = vmatpush.msra.mxu0 %v579
    %777 = vmatpush.msra.mxu0 %v576
    %778 = vmatpush.msra.mxu0 %v573
    %779 = vmatpush.msra.mxu0 %v570
    %780 = vmatpush.msra.mxu0 %v567
    %781 = vmatpush.msra.mxu0 %v564
    %782 = vmatpush.msra.mxu0 %v561
    %783 = vmatmul.f32.gmra.mxu0 0.0
    %v784 = vpop.f32.mrf.mxu0
    %v785 = vadd.f32 0.0, %v784
    %786 = vdwg.mxu0
    %v787 = vadd.f32 %v724, %v745
    %v788 = vxor.u32 %v787, 2147483648
    %v789 = vmul.f32 %v788, 1.442695
    %v790 = vpow.pop %v789
    %v791 = vadd.f32 %v790, 1.0
    %v792 = vrcp.pop %v791
    %v793 = vmul.f32 %v791, %v792
    %v794 = vsub.f32 1.0, %v793
    %v795 = vmul.f32 %v792, %v794
    %v796 = vadd.f32 %v792, %v795
    %vm797 = vweird.f32 %v791
    %vm798 = vweird.f32 %v792
    %vm799 = vmor %vm797, %vm798
    %v800 = vsel %vm799, %v792, %v796
    %v801 = vand.u32 2147483647, %v791
    %vm802 = vcmp.eq.f32.partialorder %v801, 8.507059e+37
    %v803 = vand.u32 %v791, 2147483648
    %v804 = vor.u32 1.1754944e-38, %v803
    %v805 = vsel %vm802, %v804, %v800
    %v806 = vmul.f32 1.0, %v805
    %v807 = vadd.f32 %v725, %v765
    %v808 = vxor.u32 %v807, 2147483648
    %v809 = vmul.f32 %v808, 1.442695
    %v810 = vpow.pop %v809
    %v811 = vadd.f32 %v810, 1.0
    %v812 = vrcp.pop %v811
    %v813 = vmul.f32 %v811, %v812
    %v814 = vsub.f32 1.0, %v813
    %v815 = vmul.f32 %v812, %v814
    %v816 = vadd.f32 %v812, %v815
    %vm817 = vweird.f32 %v811
    %vm818 = vweird.f32 %v812
    %vm819 = vmor %vm817, %vm818
    %v820 = vsel %vm819, %v812, %v816
    %v821 = vand.u32 2147483647, %v811
    %vm822 = vcmp.eq.f32.partialorder %v821, 8.507059e+37
    %v823 = vand.u32 %v811, 2147483648
    %v824 = vor.u32 1.1754944e-38, %v823
    %v825 = vsel %vm822, %v824, %v820
    %v826 = vmul.f32 1.0, %v825
    %v828 = vperm.slane %v608, 0
    %v830 = vadd.f32 %v785, %v828
    %v831 = vmul.f32 %v806, %v830
    %v832 = vadd.f32 %v726, %v831
    %v833 = vtanh.pop %v832
    %v834 = vsub.f32 1.0, %v826
    %v835 = vmul.f32 %v834, %v833
    %v836 = vmul.f32 %v826, 0.0
    %v837 = vadd.f32 %v835, %v836
    %s838 = scalar_lea.vmem [#allocation2], 24
    %v839 = vld [vmem:[%s838] sm:$0xff]
    %v840 = vld [vmem:[%s838 + $0x8] sm:$0xff]
    %v841 = vld [vmem:[%s838 + $0x10] sm:$0xff]
    %842 = vmatpush.msra.mxu0 %v556
    %843 = vmatpush.msra.mxu0 %v553
    %844 = vmatpush.msra.mxu0 %v550
    %845 = vmatpush.msra.mxu0 %v547
    %846 = vmatpush.msra.mxu0 %v544
    %847 = vmatpush.msra.mxu0 %v541
    %848 = vmatpush.msra.mxu0 %v538
    %849 = vmatpush.msra.mxu0 %v535
    %850 = vmatpush.msra.mxu0 %v532
    %851 = vmatpush.msra.mxu0 %v529
    %852 = vmatpush.msra.mxu0 %v526
    %853 = vmatpush.msra.mxu0 %v523
    %854 = vmatpush.msra.mxu0 %v520
    %855 = vmatpush.msra.mxu0 %v517
    %856 = vmatpush.msra.mxu0 %v514
    %857 = vmatpush.msra.mxu0 %v511
    %858 = vmatmul.f32.gmra.mxu0 %v722
    %v859 = vpop.f32.mrf.mxu0
    %v860 = vadd.f32 0.0, %v859
    %861 = vdwg.mxu0
    %862 = vmatpush.msra.mxu0 %v557
    %863 = vmatpush.msra.mxu0 %v554
    %864 = vmatpush.msra.mxu0 %v551
    %865 = vmatpush.msra.mxu0 %v548
    %866 = vmatpush.msra.mxu0 %v545
    %867 = vmatpush.msra.mxu0 %v542
    %868 = vmatpush.msra.mxu0 %v539
    %869 = vmatpush.msra.mxu0 %v536
    %870 = vmatpush.msra.mxu0 %v533
    %871 = vmatpush.msra.mxu0 %v530
    %872 = vmatpush.msra.mxu0 %v527
    %873 = vmatpush.msra.mxu0 %v524
    %874 = vmatpush.msra.mxu0 %v521
    %875 = vmatpush.msra.mxu0 %v518
    %876 = vmatpush.msra.mxu0 %v515
    %877 = vmatpush.msra.mxu0 %v512
    %878 = vmatmul.f32.gmra.mxu0 %v722
    %v879 = vpop.f32.mrf.mxu0
    %v880 = vadd.f32 0.0, %v879
    %881 = vdwg.mxu0
    %882 = vmatpush.msra.mxu0 %v558
    %883 = vmatpush.msra.mxu0 %v555
    %884 = vmatpush.msra.mxu0 %v552
    %885 = vmatpush.msra.mxu0 %v549
    %886 = vmatpush.msra.mxu0 %v546
    %887 = vmatpush.msra.mxu0 %v543
    %888 = vmatpush.msra.mxu0 %v540
    %889 = vmatpush.msra.mxu0 %v537
    %890 = vmatpush.msra.mxu0 %v534
    %891 = vmatpush.msra.mxu0 %v531
    %892 = vmatpush.msra.mxu0 %v528
    %893 = vmatpush.msra.mxu0 %v525
    %894 = vmatpush.msra.mxu0 %v522
    %895 = vmatpush.msra.mxu0 %v519
    %896 = vmatpush.msra.mxu0 %v516
    %897 = vmatpush.msra.mxu0 %v513
    %898 = vmatmul.f32.gmra.mxu0 %v722
    %v899 = vpop.f32.mrf.mxu0
    %v900 = vadd.f32 0.0, %v899
    %901 = vdwg.mxu0
    %v902 = vadd.f32 %v839, %v860
    %v903 = vxor.u32 %v902, 2147483648
    %v904 = vmul.f32 %v903, 1.442695
    %v905 = vpow.pop %v904
    %v906 = vadd.f32 %v905, 1.0
    %v907 = vrcp.pop %v906
    %v908 = vmul.f32 %v906, %v907
    %v909 = vsub.f32 1.0, %v908
    %v910 = vmul.f32 %v907, %v909
    %v911 = vadd.f32 %v907, %v910
    %vm912 = vweird.f32 %v906
    %vm913 = vweird.f32 %v907
    %vm914 = vmor %vm912, %vm913
    %v915 = vsel %vm914, %v907, %v911
    %v916 = vand.u32 2147483647, %v906
    %vm917 = vcmp.eq.f32.partialorder %v916, 8.507059e+37
    %v918 = vand.u32 %v906, 2147483648
    %v919 = vor.u32 1.1754944e-38, %v918
    %v920 = vsel %vm917, %v919, %v915
    %v921 = vmul.f32 1.0, %v920
    %v922 = vadd.f32 %v840, %v880
    %v923 = vxor.u32 %v922, 2147483648
    %v924 = vmul.f32 %v923, 1.442695
    %v925 = vpow.pop %v924
    %v926 = vadd.f32 %v925, 1.0
    %v927 = vrcp.pop %v926
    %v928 = vmul.f32 %v926, %v927
    %v929 = vsub.f32 1.0, %v928
    %v930 = vmul.f32 %v927, %v929
    %v931 = vadd.f32 %v927, %v930
    %vm932 = vweird.f32 %v926
    %vm933 = vweird.f32 %v927
    %vm934 = vmor %vm932, %vm933
    %v935 = vsel %vm934, %v927, %v931
    %v936 = vand.u32 2147483647, %v926
    %vm937 = vcmp.eq.f32.partialorder %v936, 8.507059e+37
    %v938 = vand.u32 %v926, 2147483648
    %v939 = vor.u32 1.1754944e-38, %v938
    %v940 = vsel %vm937, %v939, %v935
    %v941 = vmul.f32 1.0, %v940
    %v942 = vadd.f32 %v900, %v713
    %v943 = vmul.f32 %v921, %v942
    %v944 = vadd.f32 %v841, %v943
    %v945 = vtanh.pop %v944
    %v946 = vsub.f32 1.0, %v941
    %v947 = vmul.f32 %v946, %v945
    %v948 = vmul.f32 %v941, %v722
    %v949 = vadd.f32 %v947, %v948
    %s950 = scalar_lea.vmem [#allocation3], 144
    %v951 = vld [vmem:[%s950] sm:$0xff]
    %v952 = vld [vmem:[%s950 + $0x8] sm:$0xff]
    %v953 = vld [vmem:[%s950 + $0x10] sm:$0xff]
    %954 = vmatpush.msra.mxu0 %v604
    %955 = vmatpush.msra.mxu0 %v601
    %956 = vmatpush.msra.mxu0 %v598
    %957 = vmatpush.msra.mxu0 %v595
    %958 = vmatpush.msra.mxu0 %v592
    %959 = vmatpush.msra.mxu0 %v589
    %960 = vmatpush.msra.mxu0 %v586
    %961 = vmatpush.msra.mxu0 %v583
    %962 = vmatpush.msra.mxu0 %v580
    %963 = vmatpush.msra.mxu0 %v577
    %964 = vmatpush.msra.mxu0 %v574
    %965 = vmatpush.msra.mxu0 %v571
    %966 = vmatpush.msra.mxu0 %v568
    %967 = vmatpush.msra.mxu0 %v565
    %968 = vmatpush.msra.mxu0 %v562
    %969 = vmatpush.msra.mxu0 %v559
    %970 = vmatmul.f32.gmra.mxu0 %v837
    %v971 = vpop.f32.mrf.mxu0
    %v972 = vadd.f32 0.0, %v971
    %973 = vdwg.mxu0
    %974 = vmatpush.msra.mxu0 %v605
    %975 = vmatpush.msra.mxu0 %v602
    %976 = vmatpush.msra.mxu0 %v599
    %977 = vmatpush.msra.mxu0 %v596
    %978 = vmatpush.msra.mxu0 %v593
    %979 = vmatpush.msra.mxu0 %v590
    %980 = vmatpush.msra.mxu0 %v587
    %981 = vmatpush.msra.mxu0 %v584
    %982 = vmatpush.msra.mxu0 %v581
    %983 = vmatpush.msra.mxu0 %v578
    %984 = vmatpush.msra.mxu0 %v575
    %985 = vmatpush.msra.mxu0 %v572
    %986 = vmatpush.msra.mxu0 %v569
    %987 = vmatpush.msra.mxu0 %v566
    %988 = vmatpush.msra.mxu0 %v563
    %989 = vmatpush.msra.mxu0 %v560
    %990 = vmatmul.f32.gmra.mxu0 %v837
    %v991 = vpop.f32.mrf.mxu0
    %v992 = vadd.f32 0.0, %v991
    %993 = vdwg.mxu0
    %994 = vmatpush.msra.mxu0 %v606
    %995 = vmatpush.msra.mxu0 %v603
    %996 = vmatpush.msra.mxu0 %v600
    %997 = vmatpush.msra.mxu0 %v597
    %998 = vmatpush.msra.mxu0 %v594
    %999 = vmatpush.msra.mxu0 %v591
    %1000 = vmatpush.msra.mxu0 %v588
    %1001 = vmatpush.msra.mxu0 %v585
    %1002 = vmatpush.msra.mxu0 %v582
    %1003 = vmatpush.msra.mxu0 %v579
    %1004 = vmatpush.msra.mxu0 %v576
    %1005 = vmatpush.msra.mxu0 %v573
    %1006 = vmatpush.msra.mxu0 %v570
    %1007 = vmatpush.msra.mxu0 %v567
    %1008 = vmatpush.msra.mxu0 %v564
    %1009 = vmatpush.msra.mxu0 %v561
    %1010 = vmatmul.f32.gmra.mxu0 %v837
    %v1011 = vpop.f32.mrf.mxu0
    %v1012 = vadd.f32 0.0, %v1011
    %1013 = vdwg.mxu0
    %v1014 = vadd.f32 %v951, %v972
    %v1015 = vxor.u32 %v1014, 2147483648
    %v1016 = vmul.f32 %v1015, 1.442695
    %v1017 = vpow.pop %v1016
    %v1018 = vadd.f32 %v1017, 1.0
    %v1019 = vrcp.pop %v1018
    %v1020 = vmul.f32 %v1018, %v1019
    %v1021 = vsub.f32 1.0, %v1020
    %v1022 = vmul.f32 %v1019, %v1021
    %v1023 = vadd.f32 %v1019, %v1022
    %vm1024 = vweird.f32 %v1018
    %vm1025 = vweird.f32 %v1019
    %vm1026 = vmor %vm1024, %vm1025
    %v1027 = vsel %vm1026, %v1019, %v1023
    %v1028 = vand.u32 2147483647, %v1018
    %vm1029 = vcmp.eq.f32.partialorder %v1028, 8.507059e+37
    %v1030 = vand.u32 %v1018, 2147483648
    %v1031 = vor.u32 1.1754944e-38, %v1030
    %v1032 = vsel %vm1029, %v1031, %v1027
    %v1033 = vmul.f32 1.0, %v1032
    %v1034 = vadd.f32 %v952, %v992
    %v1035 = vxor.u32 %v1034, 2147483648
    %v1036 = vmul.f32 %v1035, 1.442695
    %v1037 = vpow.pop %v1036
    %v1038 = vadd.f32 %v1037, 1.0
    %v1039 = vrcp.pop %v1038
    %v1040 = vmul.f32 %v1038, %v1039
    %v1041 = vsub.f32 1.0, %v1040
    %v1042 = vmul.f32 %v1039, %v1041
    %v1043 = vadd.f32 %v1039, %v1042
    %vm1044 = vweird.f32 %v1038
    %vm1045 = vweird.f32 %v1039
    %vm1046 = vmor %vm1044, %vm1045
    %v1047 = vsel %vm1046, %v1039, %v1043
    %v1048 = vand.u32 2147483647, %v1038
    %vm1049 = vcmp.eq.f32.partialorder %v1048, 8.507059e+37
    %v1050 = vand.u32 %v1038, 2147483648
    %v1051 = vor.u32 1.1754944e-38, %v1050
    %v1052 = vsel %vm1049, %v1051, %v1047
    %v1053 = vmul.f32 1.0, %v1052
    %v1054 = vadd.f32 %v1012, %v828
    %v1055 = vmul.f32 %v1033, %v1054
    %v1056 = vadd.f32 %v953, %v1055
    %v1057 = vtanh.pop %v1056
    %v1058 = vsub.f32 1.0, %v1053
    %v1059 = vmul.f32 %v1058, %v1057
    %v1060 = vmul.f32 %v1053, %v837
    %v1061 = vadd.f32 %v1059, %v1060
    %s1062 = scalar_lea.vmem [#allocation2], 48
    %v1063 = vld [vmem:[%s1062] sm:$0xff]
    %v1064 = vld [vmem:[%s1062 + $0x8] sm:$0xff]
    %v1065 = vld [vmem:[%s1062 + $0x10] sm:$0xff]
    %1066 = vmatpush.msra.mxu0 %v556
    %1067 = vmatpush.msra.mxu0 %v553
    %1068 = vmatpush.msra.mxu0 %v550
    %1069 = vmatpush.msra.mxu0 %v547
    %1070 = vmatpush.msra.mxu0 %v544
    %1071 = vmatpush.msra.mxu0 %v541
    %1072 = vmatpush.msra.mxu0 %v538
    %1073 = vmatpush.msra.mxu0 %v535
    %1074 = vmatpush.msra.mxu0 %v532
    %1075 = vmatpush.msra.mxu0 %v529
    %1076 = vmatpush.msra.mxu0 %v526
    %1077 = vmatpush.msra.mxu0 %v523
    %1078 = vmatpush.msra.mxu0 %v520
    %1079 = vmatpush.msra.mxu0 %v517
    %1080 = vmatpush.msra.mxu0 %v514
    %1081 = vmatpush.msra.mxu0 %v511
    %1082 = vmatmul.f32.gmra.mxu0 %v949
    %v1083 = vpop.f32.mrf.mxu0
    %v1084 = vadd.f32 0.0, %v1083
    %1085 = vdwg.mxu0
    %1086 = vmatpush.msra.mxu0 %v557
    %1087 = vmatpush.msra.mxu0 %v554
    %1088 = vmatpush.msra.mxu0 %v551
    %1089 = vmatpush.msra.mxu0 %v548
    %1090 = vmatpush.msra.mxu0 %v545
    %1091 = vmatpush.msra.mxu0 %v542
    %1092 = vmatpush.msra.mxu0 %v539
    %1093 = vmatpush.msra.mxu0 %v536
    %1094 = vmatpush.msra.mxu0 %v533
    %1095 = vmatpush.msra.mxu0 %v530
    %1096 = vmatpush.msra.mxu0 %v527
    %1097 = vmatpush.msra.mxu0 %v524
    %1098 = vmatpush.msra.mxu0 %v521
    %1099 = vmatpush.msra.mxu0 %v518
    %1100 = vmatpush.msra.mxu0 %v515
    %1101 = vmatpush.msra.mxu0 %v512
    %1102 = vmatmul.f32.gmra.mxu0 %v949
    %v1103 = vpop.f32.mrf.mxu0
    %v1104 = vadd.f32 0.0, %v1103
    %1105 = vdwg.mxu0
    %1106 = vmatpush.msra.mxu0 %v558
    %1107 = vmatpush.msra.mxu0 %v555
    %1108 = vmatpush.msra.mxu0 %v552
    %1109 = vmatpush.msra.mxu0 %v549
    %1110 = vmatpush.msra.mxu0 %v546
    %1111 = vmatpush.msra.mxu0 %v543
    %1112 = vmatpush.msra.mxu0 %v540
    %1113 = vmatpush.msra.mxu0 %v537
    %1114 = vmatpush.msra.mxu0 %v534
    %1115 = vmatpush.msra.mxu0 %v531
    %1116 = vmatpush.msra.mxu0 %v528
    %1117 = vmatpush.msra.mxu0 %v525
    %1118 = vmatpush.msra.mxu0 %v522
    %1119 = vmatpush.msra.mxu0 %v519
    %1120 = vmatpush.msra.mxu0 %v516
    %1121 = vmatpush.msra.mxu0 %v513
    %1122 = vmatmul.f32.gmra.mxu0 %v949
    %v1123 = vpop.f32.mrf.mxu0
    %v1124 = vadd.f32 0.0, %v1123
    %1125 = vdwg.mxu0
    %v1126 = vadd.f32 %v1063, %v1084
    %v1127 = vxor.u32 %v1126, 2147483648
    %v1128 = vmul.f32 %v1127, 1.442695
    %v1129 = vpow.pop %v1128
    %v1130 = vadd.f32 %v1129, 1.0
    %v1131 = vrcp.pop %v1130
    %v1132 = vmul.f32 %v1130, %v1131
    %v1133 = vsub.f32 1.0, %v1132
    %v1134 = vmul.f32 %v1131, %v1133
    %v1135 = vadd.f32 %v1131, %v1134
    %vm1136 = vweird.f32 %v1130
    %vm1137 = vweird.f32 %v1131
    %vm1138 = vmor %vm1136, %vm1137
    %v1139 = vsel %vm1138, %v1131, %v1135
    %v1140 = vand.u32 2147483647, %v1130
    %vm1141 = vcmp.eq.f32.partialorder %v1140, 8.507059e+37
    %v1142 = vand.u32 %v1130, 2147483648
    %v1143 = vor.u32 1.1754944e-38, %v1142
    %v1144 = vsel %vm1141, %v1143, %v1139
    %v1145 = vmul.f32 1.0, %v1144
    %v1146 = vadd.f32 %v1064, %v1104
    %v1147 = vxor.u32 %v1146, 2147483648
    %v1148 = vmul.f32 %v1147, 1.442695
    %v1149 = vpow.pop %v1148
    %v1150 = vadd.f32 %v1149, 1.0
    %v1151 = vrcp.pop %v1150
    %v1152 = vmul.f32 %v1150, %v1151
    %v1153 = vsub.f32 1.0, %v1152
    %v1154 = vmul.f32 %v1151, %v1153
    %v1155 = vadd.f32 %v1151, %v1154
    %vm1156 = vweird.f32 %v1150
    %vm1157 = vweird.f32 %v1151
    %vm1158 = vmor %vm1156, %vm1157
    %v1159 = vsel %vm1158, %v1151, %v1155
    %v1160 = vand.u32 2147483647, %v1150
    %vm1161 = vcmp.eq.f32.partialorder %v1160, 8.507059e+37
    %v1162 = vand.u32 %v1150, 2147483648
    %v1163 = vor.u32 1.1754944e-38, %v1162
    %v1164 = vsel %vm1161, %v1163, %v1159
    %v1165 = vmul.f32 1.0, %v1164
    %v1166 = vadd.f32 %v1124, %v713
    %v1167 = vmul.f32 %v1145, %v1166
    %v1168 = vadd.f32 %v1065, %v1167
    %v1169 = vtanh.pop %v1168
    %v1170 = vsub.f32 1.0, %v1165
    %v1171 = vmul.f32 %v1170, %v1169
    %v1172 = vmul.f32 %v1165, %v949
    %v1173 = vadd.f32 %v1171, %v1172
    %s1174 = scalar_lea.vmem [#allocation3], 120
    %v1175 = vld [vmem:[%s1174] sm:$0xff]
    %v1176 = vld [vmem:[%s1174 + $0x8] sm:$0xff]
    %v1177 = vld [vmem:[%s1174 + $0x10] sm:$0xff]
    %1178 = vmatpush.msra.mxu0 %v604
    %1179 = vmatpush.msra.mxu0 %v601
    %1180 = vmatpush.msra.mxu0 %v598
    %1181 = vmatpush.msra.mxu0 %v595
    %1182 = vmatpush.msra.mxu0 %v592
    %1183 = vmatpush.msra.mxu0 %v589
    %1184 = vmatpush.msra.mxu0 %v586
    %1185 = vmatpush.msra.mxu0 %v583
    %1186 = vmatpush.msra.mxu0 %v580
    %1187 = vmatpush.msra.mxu0 %v577
    %1188 = vmatpush.msra.mxu0 %v574
    %1189 = vmatpush.msra.mxu0 %v571
    %1190 = vmatpush.msra.mxu0 %v568
    %1191 = vmatpush.msra.mxu0 %v565
    %1192 = vmatpush.msra.mxu0 %v562
    %1193 = vmatpush.msra.mxu0 %v559
    %1194 = vmatmul.f32.gmra.mxu0 %v1061
    %v1195 = vpop.f32.mrf.mxu0
    %v1196 = vadd.f32 0.0, %v1195
    %1197 = vdwg.mxu0
    %1198 = vmatpush.msra.mxu0 %v605
    %1199 = vmatpush.msra.mxu0 %v602
    %1200 = vmatpush.msra.mxu0 %v599
    %1201 = vmatpush.msra.mxu0 %v596
    %1202 = vmatpush.msra.mxu0 %v593
    %1203 = vmatpush.msra.mxu0 %v590
    %1204 = vmatpush.msra.mxu0 %v587
    %1205 = vmatpush.msra.mxu0 %v584
    %1206 = vmatpush.msra.mxu0 %v581
    %1207 = vmatpush.msra.mxu0 %v578
    %1208 = vmatpush.msra.mxu0 %v575
    %1209 = vmatpush.msra.mxu0 %v572
    %1210 = vmatpush.msra.mxu0 %v569
    %1211 = vmatpush.msra.mxu0 %v566
    %1212 = vmatpush.msra.mxu0 %v563
    %1213 = vmatpush.msra.mxu0 %v560
    %1214 = vmatmul.f32.gmra.mxu0 %v1061
    %v1215 = vpop.f32.mrf.mxu0
    %v1216 = vadd.f32 0.0, %v1215
    %1217 = vdwg.mxu0
    %1218 = vmatpush.msra.mxu0 %v606
    %1219 = vmatpush.msra.mxu0 %v603
    %1220 = vmatpush.msra.mxu0 %v600
    %1221 = vmatpush.msra.mxu0 %v597
    %1222 = vmatpush.msra.mxu0 %v594
    %1223 = vmatpush.msra.mxu0 %v591
    %1224 = vmatpush.msra.mxu0 %v588
    %1225 = vmatpush.msra.mxu0 %v585
    %1226 = vmatpush.msra.mxu0 %v582
    %1227 = vmatpush.msra.mxu0 %v579
    %1228 = vmatpush.msra.mxu0 %v576
    %1229 = vmatpush.msra.mxu0 %v573
    %1230 = vmatpush.msra.mxu0 %v570
    %1231 = vmatpush.msra.mxu0 %v567
    %1232 = vmatpush.msra.mxu0 %v564
    %1233 = vmatpush.msra.mxu0 %v561
    %1234 = vmatmul.f32.gmra.mxu0 %v1061
    %v1235 = vpop.f32.mrf.mxu0
    %v1236 = vadd.f32 0.0, %v1235
    %1237 = vdwg.mxu0
    %v1238 = vadd.f32 %v1175, %v1196
    %v1239 = vxor.u32 %v1238, 2147483648
    %v1240 = vmul.f32 %v1239, 1.442695
    %v1241 = vpow.pop %v1240
    %v1242 = vadd.f32 %v1241, 1.0
    %v1243 = vrcp.pop %v1242
    %v1244 = vmul.f32 %v1242, %v1243
    %v1245 = vsub.f32 1.0, %v1244
    %v1246 = vmul.f32 %v1243, %v1245
    %v1247 = vadd.f32 %v1243, %v1246
    %vm1248 = vweird.f32 %v1242
    %vm1249 = vweird.f32 %v1243
    %vm1250 = vmor %vm1248, %vm1249
    %v1251 = vsel %vm1250, %v1243, %v1247
    %v1252 = vand.u32 2147483647, %v1242
    %vm1253 = vcmp.eq.f32.partialorder %v1252, 8.507059e+37
    %v1254 = vand.u32 %v1242, 2147483648
    %v1255 = vor.u32 1.1754944e-38, %v1254
    %v1256 = vsel %vm1253, %v1255, %v1251
    %v1257 = vmul.f32 1.0, %v1256
    %v1258 = vadd.f32 %v1176, %v1216
    %v1259 = vxor.u32 %v1258, 2147483648
    %v1260 = vmul.f32 %v1259, 1.442695
    %v1261 = vpow.pop %v1260
    %v1262 = vadd.f32 %v1261, 1.0
    %v1263 = vrcp.pop %v1262
    %v1264 = vmul.f32 %v1262, %v1263
    %v1265 = vsub.f32 1.0, %v1264
    %v1266 = vmul.f32 %v1263, %v1265
    %v1267 = vadd.f32 %v1263, %v1266
    %vm1268 = vweird.f32 %v1262
    %vm1269 = vweird.f32 %v1263
    %vm1270 = vmor %vm1268, %vm1269
    %v1271 = vsel %vm1270, %v1263, %v1267
    %v1272 = vand.u32 2147483647, %v1262
    %vm1273 = vcmp.eq.f32.partialorder %v1272, 8.507059e+37
    %v1274 = vand.u32 %v1262, 2147483648
    %v1275 = vor.u32 1.1754944e-38, %v1274
    %v1276 = vsel %vm1273, %v1275, %v1271
    %v1277 = vmul.f32 1.0, %v1276
    %v1278 = vadd.f32 %v1236, %v828
    %v1279 = vmul.f32 %v1257, %v1278
    %v1280 = vadd.f32 %v1177, %v1279
    %v1281 = vtanh.pop %v1280
    %v1282 = vsub.f32 1.0, %v1277
    %v1283 = vmul.f32 %v1282, %v1281
    %v1284 = vmul.f32 %v1277, %v1061
    %v1285 = vadd.f32 %v1283, %v1284
    %s1286 = scalar_lea.vmem [#allocation2], 72
    %v1287 = vld [vmem:[%s1286] sm:$0xff]
    %v1288 = vld [vmem:[%s1286 + $0x8] sm:$0xff]
    %v1289 = vld [vmem:[%s1286 + $0x10] sm:$0xff]
    %1290 = vmatpush.msra.mxu0 %v556
    %1291 = vmatpush.msra.mxu0 %v553
    %1292 = vmatpush.msra.mxu0 %v550
    %1293 = vmatpush.msra.mxu0 %v547
    %1294 = vmatpush.msra.mxu0 %v544
    %1295 = vmatpush.msra.mxu0 %v541
    %1296 = vmatpush.msra.mxu0 %v538
    %1297 = vmatpush.msra.mxu0 %v535
    %1298 = vmatpush.msra.mxu0 %v532
    %1299 = vmatpush.msra.mxu0 %v529
    %1300 = vmatpush.msra.mxu0 %v526
    %1301 = vmatpush.msra.mxu0 %v523
    %1302 = vmatpush.msra.mxu0 %v520
    %1303 = vmatpush.msra.mxu0 %v517
    %1304 = vmatpush.msra.mxu0 %v514
    %1305 = vmatpush.msra.mxu0 %v511
    %1306 = vmatmul.f32.gmra.mxu0 %v1173
    %v1307 = vpop.f32.mrf.mxu0
    %v1308 = vadd.f32 0.0, %v1307
    %1309 = vdwg.mxu0
    %1310 = vmatpush.msra.mxu0 %v557
    %1311 = vmatpush.msra.mxu0 %v554
    %1312 = vmatpush.msra.mxu0 %v551
    %1313 = vmatpush.msra.mxu0 %v548
    %1314 = vmatpush.msra.mxu0 %v545
    %1315 = vmatpush.msra.mxu0 %v542
    %1316 = vmatpush.msra.mxu0 %v539
    %1317 = vmatpush.msra.mxu0 %v536
    %1318 = vmatpush.msra.mxu0 %v533
    %1319 = vmatpush.msra.mxu0 %v530
    %1320 = vmatpush.msra.mxu0 %v527
    %1321 = vmatpush.msra.mxu0 %v524
    %1322 = vmatpush.msra.mxu0 %v521
    %1323 = vmatpush.msra.mxu0 %v518
    %1324 = vmatpush.msra.mxu0 %v515
    %1325 = vmatpush.msra.mxu0 %v512
    %1326 = vmatmul.f32.gmra.mxu0 %v1173
    %v1327 = vpop.f32.mrf.mxu0
    %v1328 = vadd.f32 0.0, %v1327
    %1329 = vdwg.mxu0
    %1330 = vmatpush.msra.mxu0 %v558
    %1331 = vmatpush.msra.mxu0 %v555
    %1332 = vmatpush.msra.mxu0 %v552
    %1333 = vmatpush.msra.mxu0 %v549
    %1334 = vmatpush.msra.mxu0 %v546
    %1335 = vmatpush.msra.mxu0 %v543
    %1336 = vmatpush.msra.mxu0 %v540
    %1337 = vmatpush.msra.mxu0 %v537
    %1338 = vmatpush.msra.mxu0 %v534
    %1339 = vmatpush.msra.mxu0 %v531
    %1340 = vmatpush.msra.mxu0 %v528
    %1341 = vmatpush.msra.mxu0 %v525
    %1342 = vmatpush.msra.mxu0 %v522
    %1343 = vmatpush.msra.mxu0 %v519
    %1344 = vmatpush.msra.mxu0 %v516
    %1345 = vmatpush.msra.mxu0 %v513
    %1346 = vmatmul.f32.gmra.mxu0 %v1173
    %v1347 = vpop.f32.mrf.mxu0
    %v1348 = vadd.f32 0.0, %v1347
    %1349 = vdwg.mxu0
    %v1350 = vadd.f32 %v1287, %v1308
    %v1351 = vxor.u32 %v1350, 2147483648
    %v1352 = vmul.f32 %v1351, 1.442695
    %v1353 = vpow.pop %v1352
    %v1354 = vadd.f32 %v1353, 1.0
    %v1355 = vrcp.pop %v1354
    %v1356 = vmul.f32 %v1354, %v1355
    %v1357 = vsub.f32 1.0, %v1356
    %v1358 = vmul.f32 %v1355, %v1357
    %v1359 = vadd.f32 %v1355, %v1358
    %vm1360 = vweird.f32 %v1354
    %vm1361 = vweird.f32 %v1355
    %vm1362 = vmor %vm1360, %vm1361
    %v1363 = vsel %vm1362, %v1355, %v1359
    %v1364 = vand.u32 2147483647, %v1354
    %vm1365 = vcmp.eq.f32.partialorder %v1364, 8.507059e+37
    %v1366 = vand.u32 %v1354, 2147483648
    %v1367 = vor.u32 1.1754944e-38, %v1366
    %v1368 = vsel %vm1365, %v1367, %v1363
    %v1369 = vmul.f32 1.0, %v1368
    %v1370 = vadd.f32 %v1288, %v1328
    %v1371 = vxor.u32 %v1370, 2147483648
    %v1372 = vmul.f32 %v1371, 1.442695
    %v1373 = vpow.pop %v1372
    %v1374 = vadd.f32 %v1373, 1.0
    %v1375 = vrcp.pop %v1374
    %v1376 = vmul.f32 %v1374, %v1375
    %v1377 = vsub.f32 1.0, %v1376
    %v1378 = vmul.f32 %v1375, %v1377
    %v1379 = vadd.f32 %v1375, %v1378
    %vm1380 = vweird.f32 %v1374
    %vm1381 = vweird.f32 %v1375
    %vm1382 = vmor %vm1380, %vm1381
    %v1383 = vsel %vm1382, %v1375, %v1379
    %v1384 = vand.u32 2147483647, %v1374
    %vm1385 = vcmp.eq.f32.partialorder %v1384, 8.507059e+37
    %v1386 = vand.u32 %v1374, 2147483648
    %v1387 = vor.u32 1.1754944e-38, %v1386
    %v1388 = vsel %vm1385, %v1387, %v1383
    %v1389 = vmul.f32 1.0, %v1388
    %v1390 = vadd.f32 %v1348, %v713
    %v1391 = vmul.f32 %v1369, %v1390
    %v1392 = vadd.f32 %v1289, %v1391
    %v1393 = vtanh.pop %v1392
    %v1394 = vsub.f32 1.0, %v1389
    %v1395 = vmul.f32 %v1394, %v1393
    %v1396 = vmul.f32 %v1389, %v1173
    %v1397 = vadd.f32 %v1395, %v1396
    %s1398 = scalar_lea.vmem [#allocation3], 96
    %v1399 = vld [vmem:[%s1398] sm:$0xff]
    %v1400 = vld [vmem:[%s1398 + $0x8] sm:$0xff]
    %v1401 = vld [vmem:[%s1398 + $0x10] sm:$0xff]
    %1402 = vmatpush.msra.mxu0 %v604
    %1403 = vmatpush.msra.mxu0 %v601
    %1404 = vmatpush.msra.mxu0 %v598
    %1405 = vmatpush.msra.mxu0 %v595
    %1406 = vmatpush.msra.mxu0 %v592
    %1407 = vmatpush.msra.mxu0 %v589
    %1408 = vmatpush.msra.mxu0 %v586
    %1409 = vmatpush.msra.mxu0 %v583
    %1410 = vmatpush.msra.mxu0 %v580
    %1411 = vmatpush.msra.mxu0 %v577
    %1412 = vmatpush.msra.mxu0 %v574
    %1413 = vmatpush.msra.mxu0 %v571
    %1414 = vmatpush.msra.mxu0 %v568
    %1415 = vmatpush.msra.mxu0 %v565
    %1416 = vmatpush.msra.mxu0 %v562
    %1417 = vmatpush.msra.mxu0 %v559
    %1418 = vmatmul.f32.gmra.mxu0 %v1285
    %v1419 = vpop.f32.mrf.mxu0
    %v1420 = vadd.f32 0.0, %v1419
    %1421 = vdwg.mxu0
    %1422 = vmatpush.msra.mxu0 %v605
    %1423 = vmatpush.msra.mxu0 %v602
    %1424 = vmatpush.msra.mxu0 %v599
    %1425 = vmatpush.msra.mxu0 %v596
    %1426 = vmatpush.msra.mxu0 %v593
    %1427 = vmatpush.msra.mxu0 %v590
    %1428 = vmatpush.msra.mxu0 %v587
    %1429 = vmatpush.msra.mxu0 %v584
    %1430 = vmatpush.msra.mxu0 %v581
    %1431 = vmatpush.msra.mxu0 %v578
    %1432 = vmatpush.msra.mxu0 %v575
    %1433 = vmatpush.msra.mxu0 %v572
    %1434 = vmatpush.msra.mxu0 %v569
    %1435 = vmatpush.msra.mxu0 %v566
    %1436 = vmatpush.msra.mxu0 %v563
    %1437 = vmatpush.msra.mxu0 %v560
    %1438 = vmatmul.f32.gmra.mxu0 %v1285
    %v1439 = vpop.f32.mrf.mxu0
    %v1440 = vadd.f32 0.0, %v1439
    %1441 = vdwg.mxu0
    %1442 = vmatpush.msra.mxu0 %v606
    %1443 = vmatpush.msra.mxu0 %v603
    %1444 = vmatpush.msra.mxu0 %v600
    %1445 = vmatpush.msra.mxu0 %v597
    %1446 = vmatpush.msra.mxu0 %v594
    %1447 = vmatpush.msra.mxu0 %v591
    %1448 = vmatpush.msra.mxu0 %v588
    %1449 = vmatpush.msra.mxu0 %v585
    %1450 = vmatpush.msra.mxu0 %v582
    %1451 = vmatpush.msra.mxu0 %v579
    %1452 = vmatpush.msra.mxu0 %v576
    %1453 = vmatpush.msra.mxu0 %v573
    %1454 = vmatpush.msra.mxu0 %v570
    %1455 = vmatpush.msra.mxu0 %v567
    %1456 = vmatpush.msra.mxu0 %v564
    %1457 = vmatpush.msra.mxu0 %v561
    %1458 = vmatmul.f32.gmra.mxu0 %v1285
    %v1459 = vpop.f32.mrf.mxu0
    %v1460 = vadd.f32 0.0, %v1459
    %1461 = vdwg.mxu0
    %v1462 = vadd.f32 %v1399, %v1420
    %v1463 = vxor.u32 %v1462, 2147483648
    %v1464 = vmul.f32 %v1463, 1.442695
    %v1465 = vpow.pop %v1464
    %v1466 = vadd.f32 %v1465, 1.0
    %v1467 = vrcp.pop %v1466
    %v1468 = vmul.f32 %v1466, %v1467
    %v1469 = vsub.f32 1.0, %v1468
    %v1470 = vmul.f32 %v1467, %v1469
    %v1471 = vadd.f32 %v1467, %v1470
    %vm1472 = vweird.f32 %v1466
    %vm1473 = vweird.f32 %v1467
    %vm1474 = vmor %vm1472, %vm1473
    %v1475 = vsel %vm1474, %v1467, %v1471
    %v1476 = vand.u32 2147483647, %v1466
    %vm1477 = vcmp.eq.f32.partialorder %v1476, 8.507059e+37
    %v1478 = vand.u32 %v1466, 2147483648
    %v1479 = vor.u32 1.1754944e-38, %v1478
    %v1480 = vsel %vm1477, %v1479, %v1475
    %v1481 = vmul.f32 1.0, %v1480
    %v1482 = vadd.f32 %v1400, %v1440
    %v1483 = vxor.u32 %v1482, 2147483648
    %v1484 = vmul.f32 %v1483, 1.442695
    %v1485 = vpow.pop %v1484
    %v1486 = vadd.f32 %v1485, 1.0
    %v1487 = vrcp.pop %v1486
    %v1488 = vmul.f32 %v1486, %v1487
    %v1489 = vsub.f32 1.0, %v1488
    %v1490 = vmul.f32 %v1487, %v1489
    %v1491 = vadd.f32 %v1487, %v1490
    %vm1492 = vweird.f32 %v1486
    %vm1493 = vweird.f32 %v1487
    %vm1494 = vmor %vm1492, %vm1493
    %v1495 = vsel %vm1494, %v1487, %v1491
    %v1496 = vand.u32 2147483647, %v1486
    %vm1497 = vcmp.eq.f32.partialorder %v1496, 8.507059e+37
    %v1498 = vand.u32 %v1486, 2147483648
    %v1499 = vor.u32 1.1754944e-38, %v1498
    %v1500 = vsel %vm1497, %v1499, %v1495
    %v1501 = vmul.f32 1.0, %v1500
    %v1502 = vadd.f32 %v1460, %v828
    %v1503 = vmul.f32 %v1481, %v1502
    %v1504 = vadd.f32 %v1401, %v1503
    %v1505 = vtanh.pop %v1504
    %v1506 = vsub.f32 1.0, %v1501
    %v1507 = vmul.f32 %v1506, %v1505
    %v1508 = vmul.f32 %v1501, %v1285
    %v1509 = vadd.f32 %v1507, %v1508
    %s1510 = scalar_lea.vmem [#allocation2], 96
    %v1511 = vld [vmem:[%s1510] sm:$0xff]
    %v1512 = vld [vmem:[%s1510 + $0x8] sm:$0xff]
    %v1513 = vld [vmem:[%s1510 + $0x10] sm:$0xff]
    %1514 = vmatpush.msra.mxu0 %v556
    %1515 = vmatpush.msra.mxu0 %v553
    %1516 = vmatpush.msra.mxu0 %v550
    %1517 = vmatpush.msra.mxu0 %v547
    %1518 = vmatpush.msra.mxu0 %v544
    %1519 = vmatpush.msra.mxu0 %v541
    %1520 = vmatpush.msra.mxu0 %v538
    %1521 = vmatpush.msra.mxu0 %v535
    %1522 = vmatpush.msra.mxu0 %v532
    %1523 = vmatpush.msra.mxu0 %v529
    %1524 = vmatpush.msra.mxu0 %v526
    %1525 = vmatpush.msra.mxu0 %v523
    %1526 = vmatpush.msra.mxu0 %v520
    %1527 = vmatpush.msra.mxu0 %v517
    %1528 = vmatpush.msra.mxu0 %v514
    %1529 = vmatpush.msra.mxu0 %v511
    %1530 = vmatmul.f32.gmra.mxu0 %v1397
    %v1531 = vpop.f32.mrf.mxu0
    %v1532 = vadd.f32 0.0, %v1531
    %1533 = vdwg.mxu0
    %1534 = vmatpush.msra.mxu0 %v557
    %1535 = vmatpush.msra.mxu0 %v554
    %1536 = vmatpush.msra.mxu0 %v551
    %1537 = vmatpush.msra.mxu0 %v548
    %1538 = vmatpush.msra.mxu0 %v545
    %1539 = vmatpush.msra.mxu0 %v542
    %1540 = vmatpush.msra.mxu0 %v539
    %1541 = vmatpush.msra.mxu0 %v536
    %1542 = vmatpush.msra.mxu0 %v533
    %1543 = vmatpush.msra.mxu0 %v530
    %1544 = vmatpush.msra.mxu0 %v527
    %1545 = vmatpush.msra.mxu0 %v524
    %1546 = vmatpush.msra.mxu0 %v521
    %1547 = vmatpush.msra.mxu0 %v518
    %1548 = vmatpush.msra.mxu0 %v515
    %1549 = vmatpush.msra.mxu0 %v512
    %1550 = vmatmul.f32.gmra.mxu0 %v1397
    %v1551 = vpop.f32.mrf.mxu0
    %v1552 = vadd.f32 0.0, %v1551
    %1553 = vdwg.mxu0
    %1554 = vmatpush.msra.mxu0 %v558
    %1555 = vmatpush.msra.mxu0 %v555
    %1556 = vmatpush.msra.mxu0 %v552
    %1557 = vmatpush.msra.mxu0 %v549
    %1558 = vmatpush.msra.mxu0 %v546
    %1559 = vmatpush.msra.mxu0 %v543
    %1560 = vmatpush.msra.mxu0 %v540
    %1561 = vmatpush.msra.mxu0 %v537
    %1562 = vmatpush.msra.mxu0 %v534
    %1563 = vmatpush.msra.mxu0 %v531
    %1564 = vmatpush.msra.mxu0 %v528
    %1565 = vmatpush.msra.mxu0 %v525
    %1566 = vmatpush.msra.mxu0 %v522
    %1567 = vmatpush.msra.mxu0 %v519
    %1568 = vmatpush.msra.mxu0 %v516
    %1569 = vmatpush.msra.mxu0 %v513
    %1570 = vmatmul.f32.gmra.mxu0 %v1397
    %v1571 = vpop.f32.mrf.mxu0
    %v1572 = vadd.f32 0.0, %v1571
    %1573 = vdwg.mxu0
    %v1574 = vadd.f32 %v1511, %v1532
    %v1575 = vxor.u32 %v1574, 2147483648
    %v1576 = vmul.f32 %v1575, 1.442695
    %v1577 = vpow.pop %v1576
    %v1578 = vadd.f32 %v1577, 1.0
    %v1579 = vrcp.pop %v1578
    %v1580 = vmul.f32 %v1578, %v1579
    %v1581 = vsub.f32 1.0, %v1580
    %v1582 = vmul.f32 %v1579, %v1581
    %v1583 = vadd.f32 %v1579, %v1582
    %vm1584 = vweird.f32 %v1578
    %vm1585 = vweird.f32 %v1579
    %vm1586 = vmor %vm1584, %vm1585
    %v1587 = vsel %vm1586, %v1579, %v1583
    %v1588 = vand.u32 2147483647, %v1578
    %vm1589 = vcmp.eq.f32.partialorder %v1588, 8.507059e+37
    %v1590 = vand.u32 %v1578, 2147483648
    %v1591 = vor.u32 1.1754944e-38, %v1590
    %v1592 = vsel %vm1589, %v1591, %v1587
    %v1593 = vmul.f32 1.0, %v1592
    %v1594 = vadd.f32 %v1512, %v1552
    %v1595 = vxor.u32 %v1594, 2147483648
    %v1596 = vmul.f32 %v1595, 1.442695
    %v1597 = vpow.pop %v1596
    %v1598 = vadd.f32 %v1597, 1.0
    %v1599 = vrcp.pop %v1598
    %v1600 = vmul.f32 %v1598, %v1599
    %v1601 = vsub.f32 1.0, %v1600
    %v1602 = vmul.f32 %v1599, %v1601
    %v1603 = vadd.f32 %v1599, %v1602
    %vm1604 = vweird.f32 %v1598
    %vm1605 = vweird.f32 %v1599
    %vm1606 = vmor %vm1604, %vm1605
    %v1607 = vsel %vm1606, %v1599, %v1603
    %v1608 = vand.u32 2147483647, %v1598
    %vm1609 = vcmp.eq.f32.partialorder %v1608, 8.507059e+37
    %v1610 = vand.u32 %v1598, 2147483648
    %v1611 = vor.u32 1.1754944e-38, %v1610
    %v1612 = vsel %vm1609, %v1611, %v1607
    %v1613 = vmul.f32 1.0, %v1612
    %v1614 = vadd.f32 %v1572, %v713
    %v1615 = vmul.f32 %v1593, %v1614
    %v1616 = vadd.f32 %v1513, %v1615
    %v1617 = vtanh.pop %v1616
    %v1618 = vsub.f32 1.0, %v1613
    %v1619 = vmul.f32 %v1618, %v1617
    %v1620 = vmul.f32 %v1613, %v1397
    %v1621 = vadd.f32 %v1619, %v1620
    %s1622 = scalar_lea.vmem [#allocation3], 72
    %v1623 = vld [vmem:[%s1622] sm:$0xff]
    %v1624 = vld [vmem:[%s1622 + $0x8] sm:$0xff]
    %v1625 = vld [vmem:[%s1622 + $0x10] sm:$0xff]
    %1626 = vmatpush.msra.mxu0 %v604
    %1627 = vmatpush.msra.mxu0 %v601
    %1628 = vmatpush.msra.mxu0 %v598
    %1629 = vmatpush.msra.mxu0 %v595
    %1630 = vmatpush.msra.mxu0 %v592
    %1631 = vmatpush.msra.mxu0 %v589
    %1632 = vmatpush.msra.mxu0 %v586
    %1633 = vmatpush.msra.mxu0 %v583
    %1634 = vmatpush.msra.mxu0 %v580
    %1635 = vmatpush.msra.mxu0 %v577
    %1636 = vmatpush.msra.mxu0 %v574
    %1637 = vmatpush.msra.mxu0 %v571
    %1638 = vmatpush.msra.mxu0 %v568
    %1639 = vmatpush.msra.mxu0 %v565
    %1640 = vmatpush.msra.mxu0 %v562
    %1641 = vmatpush.msra.mxu0 %v559
    %1642 = vmatmul.f32.gmra.mxu0 %v1509
    %v1643 = vpop.f32.mrf.mxu0
    %v1644 = vadd.f32 0.0, %v1643
    %1645 = vdwg.mxu0
    %1646 = vmatpush.msra.mxu0 %v605
    %1647 = vmatpush.msra.mxu0 %v602
    %1648 = vmatpush.msra.mxu0 %v599
    %1649 = vmatpush.msra.mxu0 %v596
    %1650 = vmatpush.msra.mxu0 %v593
    %1651 = vmatpush.msra.mxu0 %v590
    %1652 = vmatpush.msra.mxu0 %v587
    %1653 = vmatpush.msra.mxu0 %v584
    %1654 = vmatpush.msra.mxu0 %v581
    %1655 = vmatpush.msra.mxu0 %v578
    %1656 = vmatpush.msra.mxu0 %v575
    %1657 = vmatpush.msra.mxu0 %v572
    %1658 = vmatpush.msra.mxu0 %v569
    %1659 = vmatpush.msra.mxu0 %v566
    %1660 = vmatpush.msra.mxu0 %v563
    %1661 = vmatpush.msra.mxu0 %v560
    %1662 = vmatmul.f32.gmra.mxu0 %v1509
    %v1663 = vpop.f32.mrf.mxu0
    %v1664 = vadd.f32 0.0, %v1663
    %1665 = vdwg.mxu0
    %1666 = vmatpush.msra.mxu0 %v606
    %1667 = vmatpush.msra.mxu0 %v603
    %1668 = vmatpush.msra.mxu0 %v600
    %1669 = vmatpush.msra.mxu0 %v597
    %1670 = vmatpush.msra.mxu0 %v594
    %1671 = vmatpush.msra.mxu0 %v591
    %1672 = vmatpush.msra.mxu0 %v588
    %1673 = vmatpush.msra.mxu0 %v585
    %1674 = vmatpush.msra.mxu0 %v582
    %1675 = vmatpush.msra.mxu0 %v579
    %1676 = vmatpush.msra.mxu0 %v576
    %1677 = vmatpush.msra.mxu0 %v573
    %1678 = vmatpush.msra.mxu0 %v570
    %1679 = vmatpush.msra.mxu0 %v567
    %1680 = vmatpush.msra.mxu0 %v564
    %1681 = vmatpush.msra.mxu0 %v561
    %1682 = vmatmul.f32.gmra.mxu0 %v1509
    %v1683 = vpop.f32.mrf.mxu0
    %v1684 = vadd.f32 0.0, %v1683
    %1685 = vdwg.mxu0
    %v1686 = vadd.f32 %v1623, %v1644
    %v1687 = vxor.u32 %v1686, 2147483648
    %v1688 = vmul.f32 %v1687, 1.442695
    %v1689 = vpow.pop %v1688
    %v1690 = vadd.f32 %v1689, 1.0
    %v1691 = vrcp.pop %v1690
    %v1692 = vmul.f32 %v1690, %v1691
    %v1693 = vsub.f32 1.0, %v1692
    %v1694 = vmul.f32 %v1691, %v1693
    %v1695 = vadd.f32 %v1691, %v1694
    %vm1696 = vweird.f32 %v1690
    %vm1697 = vweird.f32 %v1691
    %vm1698 = vmor %vm1696, %vm1697
    %v1699 = vsel %vm1698, %v1691, %v1695
    %v1700 = vand.u32 2147483647, %v1690
    %vm1701 = vcmp.eq.f32.partialorder %v1700, 8.507059e+37
    %v1702 = vand.u32 %v1690, 2147483648
    %v1703 = vor.u32 1.1754944e-38, %v1702
    %v1704 = vsel %vm1701, %v1703, %v1699
    %v1705 = vmul.f32 1.0, %v1704
    %v1706 = vadd.f32 %v1624, %v1664
    %v1707 = vxor.u32 %v1706, 2147483648
    %v1708 = vmul.f32 %v1707, 1.442695
    %v1709 = vpow.pop %v1708
    %v1710 = vadd.f32 %v1709, 1.0
    %v1711 = vrcp.pop %v1710
    %v1712 = vmul.f32 %v1710, %v1711
    %v1713 = vsub.f32 1.0, %v1712
    %v1714 = vmul.f32 %v1711, %v1713
    %v1715 = vadd.f32 %v1711, %v1714
    %vm1716 = vweird.f32 %v1710
    %vm1717 = vweird.f32 %v1711
    %vm1718 = vmor %vm1716, %vm1717
    %v1719 = vsel %vm1718, %v1711, %v1715
    %v1720 = vand.u32 2147483647, %v1710
    %vm1721 = vcmp.eq.f32.partialorder %v1720, 8.507059e+37
    %v1722 = vand.u32 %v1710, 2147483648
    %v1723 = vor.u32 1.1754944e-38, %v1722
    %v1724 = vsel %vm1721, %v1723, %v1719
    %v1725 = vmul.f32 1.0, %v1724
    %v1726 = vadd.f32 %v1684, %v828
    %v1727 = vmul.f32 %v1705, %v1726
    %v1728 = vadd.f32 %v1625, %v1727
    %v1729 = vtanh.pop %v1728
    %v1730 = vsub.f32 1.0, %v1725
    %v1731 = vmul.f32 %v1730, %v1729
    %v1732 = vmul.f32 %v1725, %v1509
    %v1733 = vadd.f32 %v1731, %v1732
    %s1734 = scalar_lea.vmem [#allocation2], 120
    %v1735 = vld [vmem:[%s1734] sm:$0xff]
    %v1736 = vld [vmem:[%s1734 + $0x8] sm:$0xff]
    %v1737 = vld [vmem:[%s1734 + $0x10] sm:$0xff]
    %1738 = vmatpush.msra.mxu0 %v556
    %1739 = vmatpush.msra.mxu0 %v553
    %1740 = vmatpush.msra.mxu0 %v550
    %1741 = vmatpush.msra.mxu0 %v547
    %1742 = vmatpush.msra.mxu0 %v544
    %1743 = vmatpush.msra.mxu0 %v541
    %1744 = vmatpush.msra.mxu0 %v538
    %1745 = vmatpush.msra.mxu0 %v535
    %1746 = vmatpush.msra.mxu0 %v532
    %1747 = vmatpush.msra.mxu0 %v529
    %1748 = vmatpush.msra.mxu0 %v526
    %1749 = vmatpush.msra.mxu0 %v523
    %1750 = vmatpush.msra.mxu0 %v520
    %1751 = vmatpush.msra.mxu0 %v517
    %1752 = vmatpush.msra.mxu0 %v514
    %1753 = vmatpush.msra.mxu0 %v511
    %1754 = vmatmul.f32.gmra.mxu0 %v1621
    %v1755 = vpop.f32.mrf.mxu0
    %v1756 = vadd.f32 0.0, %v1755
    %1757 = vdwg.mxu0
    %1758 = vmatpush.msra.mxu0 %v557
    %1759 = vmatpush.msra.mxu0 %v554
    %1760 = vmatpush.msra.mxu0 %v551
    %1761 = vmatpush.msra.mxu0 %v548
    %1762 = vmatpush.msra.mxu0 %v545
    %1763 = vmatpush.msra.mxu0 %v542
    %1764 = vmatpush.msra.mxu0 %v539
    %1765 = vmatpush.msra.mxu0 %v536
    %1766 = vmatpush.msra.mxu0 %v533
    %1767 = vmatpush.msra.mxu0 %v530
    %1768 = vmatpush.msra.mxu0 %v527
    %1769 = vmatpush.msra.mxu0 %v524
    %1770 = vmatpush.msra.mxu0 %v521
    %1771 = vmatpush.msra.mxu0 %v518
    %1772 = vmatpush.msra.mxu0 %v515
    %1773 = vmatpush.msra.mxu0 %v512
    %1774 = vmatmul.f32.gmra.mxu0 %v1621
    %v1775 = vpop.f32.mrf.mxu0
    %v1776 = vadd.f32 0.0, %v1775
    %1777 = vdwg.mxu0
    %1778 = vmatpush.msra.mxu0 %v558
    %1779 = vmatpush.msra.mxu0 %v555
    %1780 = vmatpush.msra.mxu0 %v552
    %1781 = vmatpush.msra.mxu0 %v549
    %1782 = vmatpush.msra.mxu0 %v546
    %1783 = vmatpush.msra.mxu0 %v543
    %1784 = vmatpush.msra.mxu0 %v540
    %1785 = vmatpush.msra.mxu0 %v537
    %1786 = vmatpush.msra.mxu0 %v534
    %1787 = vmatpush.msra.mxu0 %v531
    %1788 = vmatpush.msra.mxu0 %v528
    %1789 = vmatpush.msra.mxu0 %v525
    %1790 = vmatpush.msra.mxu0 %v522
    %1791 = vmatpush.msra.mxu0 %v519
    %1792 = vmatpush.msra.mxu0 %v516
    %1793 = vmatpush.msra.mxu0 %v513
    %1794 = vmatmul.f32.gmra.mxu0 %v1621
    %v1795 = vpop.f32.mrf.mxu0
    %v1796 = vadd.f32 0.0, %v1795
    %1797 = vdwg.mxu0
    %v1798 = vadd.f32 %v1735, %v1756
    %v1799 = vxor.u32 %v1798, 2147483648
    %v1800 = vmul.f32 %v1799, 1.442695
    %v1801 = vpow.pop %v1800
    %v1802 = vadd.f32 %v1801, 1.0
    %v1803 = vrcp.pop %v1802
    %v1804 = vmul.f32 %v1802, %v1803
    %v1805 = vsub.f32 1.0, %v1804
    %v1806 = vmul.f32 %v1803, %v1805
    %v1807 = vadd.f32 %v1803, %v1806
    %vm1808 = vweird.f32 %v1802
    %vm1809 = vweird.f32 %v1803
    %vm1810 = vmor %vm1808, %vm1809
    %v1811 = vsel %vm1810, %v1803, %v1807
    %v1812 = vand.u32 2147483647, %v1802
    %vm1813 = vcmp.eq.f32.partialorder %v1812, 8.507059e+37
    %v1814 = vand.u32 %v1802, 2147483648
    %v1815 = vor.u32 1.1754944e-38, %v1814
    %v1816 = vsel %vm1813, %v1815, %v1811
    %v1817 = vmul.f32 1.0, %v1816
    %v1818 = vadd.f32 %v1736, %v1776
    %v1819 = vxor.u32 %v1818, 2147483648
    %v1820 = vmul.f32 %v1819, 1.442695
    %v1821 = vpow.pop %v1820
    %v1822 = vadd.f32 %v1821, 1.0
    %v1823 = vrcp.pop %v1822
    %v1824 = vmul.f32 %v1822, %v1823
    %v1825 = vsub.f32 1.0, %v1824
    %v1826 = vmul.f32 %v1823, %v1825
    %v1827 = vadd.f32 %v1823, %v1826
    %vm1828 = vweird.f32 %v1822
    %vm1829 = vweird.f32 %v1823
    %vm1830 = vmor %vm1828, %vm1829
    %v1831 = vsel %vm1830, %v1823, %v1827
    %v1832 = vand.u32 2147483647, %v1822
    %vm1833 = vcmp.eq.f32.partialorder %v1832, 8.507059e+37
    %v1834 = vand.u32 %v1822, 2147483648
    %v1835 = vor.u32 1.1754944e-38, %v1834
    %v1836 = vsel %vm1833, %v1835, %v1831
    %v1837 = vmul.f32 1.0, %v1836
    %v1838 = vadd.f32 %v1796, %v713
    %v1839 = vmul.f32 %v1817, %v1838
    %v1840 = vadd.f32 %v1737, %v1839
    %v1841 = vtanh.pop %v1840
    %v1842 = vsub.f32 1.0, %v1837
    %v1843 = vmul.f32 %v1842, %v1841
    %v1844 = vmul.f32 %v1837, %v1621
    %v1845 = vadd.f32 %v1843, %v1844
    %s1846 = scalar_lea.vmem [#allocation3], 48
    %v1847 = vld [vmem:[%s1846] sm:$0xff]
    %v1848 = vld [vmem:[%s1846 + $0x8] sm:$0xff]
    %v1849 = vld [vmem:[%s1846 + $0x10] sm:$0xff]
    %1850 = vmatpush.msra.mxu0 %v604
    %1851 = vmatpush.msra.mxu0 %v601
    %1852 = vmatpush.msra.mxu0 %v598
    %1853 = vmatpush.msra.mxu0 %v595
    %1854 = vmatpush.msra.mxu0 %v592
    %1855 = vmatpush.msra.mxu0 %v589
    %1856 = vmatpush.msra.mxu0 %v586
    %1857 = vmatpush.msra.mxu0 %v583
    %1858 = vmatpush.msra.mxu0 %v580
    %1859 = vmatpush.msra.mxu0 %v577
    %1860 = vmatpush.msra.mxu0 %v574
    %1861 = vmatpush.msra.mxu0 %v571
    %1862 = vmatpush.msra.mxu0 %v568
    %1863 = vmatpush.msra.mxu0 %v565
    %1864 = vmatpush.msra.mxu0 %v562
    %1865 = vmatpush.msra.mxu0 %v559
    %1866 = vmatmul.f32.gmra.mxu0 %v1733
    %v1867 = vpop.f32.mrf.mxu0
    %v1868 = vadd.f32 0.0, %v1867
    %1869 = vdwg.mxu0
    %1870 = vmatpush.msra.mxu0 %v605
    %1871 = vmatpush.msra.mxu0 %v602
    %1872 = vmatpush.msra.mxu0 %v599
    %1873 = vmatpush.msra.mxu0 %v596
    %1874 = vmatpush.msra.mxu0 %v593
    %1875 = vmatpush.msra.mxu0 %v590
    %1876 = vmatpush.msra.mxu0 %v587
    %1877 = vmatpush.msra.mxu0 %v584
    %1878 = vmatpush.msra.mxu0 %v581
    %1879 = vmatpush.msra.mxu0 %v578
    %1880 = vmatpush.msra.mxu0 %v575
    %1881 = vmatpush.msra.mxu0 %v572
    %1882 = vmatpush.msra.mxu0 %v569
    %1883 = vmatpush.msra.mxu0 %v566
    %1884 = vmatpush.msra.mxu0 %v563
    %1885 = vmatpush.msra.mxu0 %v560
    %1886 = vmatmul.f32.gmra.mxu0 %v1733
    %v1887 = vpop.f32.mrf.mxu0
    %v1888 = vadd.f32 0.0, %v1887
    %1889 = vdwg.mxu0
    %1890 = vmatpush.msra.mxu0 %v606
    %1891 = vmatpush.msra.mxu0 %v603
    %1892 = vmatpush.msra.mxu0 %v600
    %1893 = vmatpush.msra.mxu0 %v597
    %1894 = vmatpush.msra.mxu0 %v594
    %1895 = vmatpush.msra.mxu0 %v591
    %1896 = vmatpush.msra.mxu0 %v588
    %1897 = vmatpush.msra.mxu0 %v585
    %1898 = vmatpush.msra.mxu0 %v582
    %1899 = vmatpush.msra.mxu0 %v579
    %1900 = vmatpush.msra.mxu0 %v576
    %1901 = vmatpush.msra.mxu0 %v573
    %1902 = vmatpush.msra.mxu0 %v570
    %1903 = vmatpush.msra.mxu0 %v567
    %1904 = vmatpush.msra.mxu0 %v564
    %1905 = vmatpush.msra.mxu0 %v561
    %1906 = vmatmul.f32.gmra.mxu0 %v1733
    %v1907 = vpop.f32.mrf.mxu0
    %v1908 = vadd.f32 0.0, %v1907
    %1909 = vdwg.mxu0
    %v1910 = vadd.f32 %v1847, %v1868
    %v1911 = vxor.u32 %v1910, 2147483648
    %v1912 = vmul.f32 %v1911, 1.442695
    %v1913 = vpow.pop %v1912
    %v1914 = vadd.f32 %v1913, 1.0
    %v1915 = vrcp.pop %v1914
    %v1916 = vmul.f32 %v1914, %v1915
    %v1917 = vsub.f32 1.0, %v1916
    %v1918 = vmul.f32 %v1915, %v1917
    %v1919 = vadd.f32 %v1915, %v1918
    %vm1920 = vweird.f32 %v1914
    %vm1921 = vweird.f32 %v1915
    %vm1922 = vmor %vm1920, %vm1921
    %v1923 = vsel %vm1922, %v1915, %v1919
    %v1924 = vand.u32 2147483647, %v1914
    %vm1925 = vcmp.eq.f32.partialorder %v1924, 8.507059e+37
    %v1926 = vand.u32 %v1914, 2147483648
    %v1927 = vor.u32 1.1754944e-38, %v1926
    %v1928 = vsel %vm1925, %v1927, %v1923
    %v1929 = vmul.f32 1.0, %v1928
    %v1930 = vadd.f32 %v1848, %v1888
    %v1931 = vxor.u32 %v1930, 2147483648
    %v1932 = vmul.f32 %v1931, 1.442695
    %v1933 = vpow.pop %v1932
    %v1934 = vadd.f32 %v1933, 1.0
    %v1935 = vrcp.pop %v1934
    %v1936 = vmul.f32 %v1934, %v1935
    %v1937 = vsub.f32 1.0, %v1936
    %v1938 = vmul.f32 %v1935, %v1937
    %v1939 = vadd.f32 %v1935, %v1938
    %vm1940 = vweird.f32 %v1934
    %vm1941 = vweird.f32 %v1935
    %vm1942 = vmor %vm1940, %vm1941
    %v1943 = vsel %vm1942, %v1935, %v1939
    %v1944 = vand.u32 2147483647, %v1934
    %vm1945 = vcmp.eq.f32.partialorder %v1944, 8.507059e+37
    %v1946 = vand.u32 %v1934, 2147483648
    %v1947 = vor.u32 1.1754944e-38, %v1946
    %v1948 = vsel %vm1945, %v1947, %v1943
    %v1949 = vmul.f32 1.0, %v1948
    %v1950 = vadd.f32 %v1908, %v828
    %v1951 = vmul.f32 %v1929, %v1950
    %v1952 = vadd.f32 %v1849, %v1951
    %v1953 = vtanh.pop %v1952
    %v1954 = vsub.f32 1.0, %v1949
    %v1955 = vmul.f32 %v1954, %v1953
    %v1956 = vmul.f32 %v1949, %v1733
    %v1957 = vadd.f32 %v1955, %v1956
    %s1958 = scalar_lea.vmem [#allocation2], 144
    %v1959 = vld [vmem:[%s1958] sm:$0xff]
    %v1960 = vld [vmem:[%s1958 + $0x8] sm:$0xff]
    %v1961 = vld [vmem:[%s1958 + $0x10] sm:$0xff]
    %1962 = vmatpush.msra.mxu0 %v556
    %1963 = vmatpush.msra.mxu0 %v553
    %1964 = vmatpush.msra.mxu0 %v550
    %1965 = vmatpush.msra.mxu0 %v547
    %1966 = vmatpush.msra.mxu0 %v544
    %1967 = vmatpush.msra.mxu0 %v541
    %1968 = vmatpush.msra.mxu0 %v538
    %1969 = vmatpush.msra.mxu0 %v535
    %1970 = vmatpush.msra.mxu0 %v532
    %1971 = vmatpush.msra.mxu0 %v529
    %1972 = vmatpush.msra.mxu0 %v526
    %1973 = vmatpush.msra.mxu0 %v523
    %1974 = vmatpush.msra.mxu0 %v520
    %1975 = vmatpush.msra.mxu0 %v517
    %1976 = vmatpush.msra.mxu0 %v514
    %1977 = vmatpush.msra.mxu0 %v511
    %1978 = vmatmul.f32.gmra.mxu0 %v1845
    %v1979 = vpop.f32.mrf.mxu0
    %v1980 = vadd.f32 0.0, %v1979
    %1981 = vdwg.mxu0
    %1982 = vmatpush.msra.mxu0 %v557
    %1983 = vmatpush.msra.mxu0 %v554
    %1984 = vmatpush.msra.mxu0 %v551
    %1985 = vmatpush.msra.mxu0 %v548
    %1986 = vmatpush.msra.mxu0 %v545
    %1987 = vmatpush.msra.mxu0 %v542
    %1988 = vmatpush.msra.mxu0 %v539
    %1989 = vmatpush.msra.mxu0 %v536
    %1990 = vmatpush.msra.mxu0 %v533
    %1991 = vmatpush.msra.mxu0 %v530
    %1992 = vmatpush.msra.mxu0 %v527
    %1993 = vmatpush.msra.mxu0 %v524
    %1994 = vmatpush.msra.mxu0 %v521
    %1995 = vmatpush.msra.mxu0 %v518
    %1996 = vmatpush.msra.mxu0 %v515
    %1997 = vmatpush.msra.mxu0 %v512
    %1998 = vmatmul.f32.gmra.mxu0 %v1845
    %v1999 = vpop.f32.mrf.mxu0
    %v2000 = vadd.f32 0.0, %v1999
    %2001 = vdwg.mxu0
    %2002 = vmatpush.msra.mxu0 %v558
    %2003 = vmatpush.msra.mxu0 %v555
    %2004 = vmatpush.msra.mxu0 %v552
    %2005 = vmatpush.msra.mxu0 %v549
    %2006 = vmatpush.msra.mxu0 %v546
    %2007 = vmatpush.msra.mxu0 %v543
    %2008 = vmatpush.msra.mxu0 %v540
    %2009 = vmatpush.msra.mxu0 %v537
    %2010 = vmatpush.msra.mxu0 %v534
    %2011 = vmatpush.msra.mxu0 %v531
    %2012 = vmatpush.msra.mxu0 %v528
    %2013 = vmatpush.msra.mxu0 %v525
    %2014 = vmatpush.msra.mxu0 %v522
    %2015 = vmatpush.msra.mxu0 %v519
    %2016 = vmatpush.msra.mxu0 %v516
    %2017 = vmatpush.msra.mxu0 %v513
    %2018 = vmatmul.f32.gmra.mxu0 %v1845
    %v2019 = vpop.f32.mrf.mxu0
    %v2020 = vadd.f32 0.0, %v2019
    %2021 = vdwg.mxu0
    %v2022 = vadd.f32 %v1959, %v1980
    %v2023 = vxor.u32 %v2022, 2147483648
    %v2024 = vmul.f32 %v2023, 1.442695
    %v2025 = vpow.pop %v2024
    %v2026 = vadd.f32 %v2025, 1.0
    %v2027 = vrcp.pop %v2026
    %v2028 = vmul.f32 %v2026, %v2027
    %v2029 = vsub.f32 1.0, %v2028
    %v2030 = vmul.f32 %v2027, %v2029
    %v2031 = vadd.f32 %v2027, %v2030
    %vm2032 = vweird.f32 %v2026
    %vm2033 = vweird.f32 %v2027
    %vm2034 = vmor %vm2032, %vm2033
    %v2035 = vsel %vm2034, %v2027, %v2031
    %v2036 = vand.u32 2147483647, %v2026
    %vm2037 = vcmp.eq.f32.partialorder %v2036, 8.507059e+37
    %v2038 = vand.u32 %v2026, 2147483648
    %v2039 = vor.u32 1.1754944e-38, %v2038
    %v2040 = vsel %vm2037, %v2039, %v2035
    %v2041 = vmul.f32 1.0, %v2040
    %v2042 = vadd.f32 %v1960, %v2000
    %v2043 = vxor.u32 %v2042, 2147483648
    %v2044 = vmul.f32 %v2043, 1.442695
    %v2045 = vpow.pop %v2044
    %v2046 = vadd.f32 %v2045, 1.0
    %v2047 = vrcp.pop %v2046
    %v2048 = vmul.f32 %v2046, %v2047
    %v2049 = vsub.f32 1.0, %v2048
    %v2050 = vmul.f32 %v2047, %v2049
    %v2051 = vadd.f32 %v2047, %v2050
    %vm2052 = vweird.f32 %v2046
    %vm2053 = vweird.f32 %v2047
    %vm2054 = vmor %vm2052, %vm2053
    %v2055 = vsel %vm2054, %v2047, %v2051
    %v2056 = vand.u32 2147483647, %v2046
    %vm2057 = vcmp.eq.f32.partialorder %v2056, 8.507059e+37
    %v2058 = vand.u32 %v2046, 2147483648
    %v2059 = vor.u32 1.1754944e-38, %v2058
    %v2060 = vsel %vm2057, %v2059, %v2055
    %v2061 = vmul.f32 1.0, %v2060
    %v2062 = vadd.f32 %v2020, %v713
    %v2063 = vmul.f32 %v2041, %v2062
    %v2064 = vadd.f32 %v1961, %v2063
    %v2065 = vtanh.pop %v2064
    %v2066 = vsub.f32 1.0, %v2061
    %v2067 = vmul.f32 %v2066, %v2065
    %v2068 = vmul.f32 %v2061, %v1845
    %v2069 = vadd.f32 %v2067, %v2068
    %s2070 = scalar_lea.vmem [#allocation3], 24
    %v2071 = vld [vmem:[%s2070] sm:$0xff]
    %v2072 = vld [vmem:[%s2070 + $0x8] sm:$0xff]
    %v2073 = vld [vmem:[%s2070 + $0x10] sm:$0xff]
    %2074 = vmatpush.msra.mxu0 %v604
    %2075 = vmatpush.msra.mxu0 %v601
    %2076 = vmatpush.msra.mxu0 %v598
    %2077 = vmatpush.msra.mxu0 %v595
    %2078 = vmatpush.msra.mxu0 %v592
    %2079 = vmatpush.msra.mxu0 %v589
    %2080 = vmatpush.msra.mxu0 %v586
    %2081 = vmatpush.msra.mxu0 %v583
    %2082 = vmatpush.msra.mxu0 %v580
    %2083 = vmatpush.msra.mxu0 %v577
    %2084 = vmatpush.msra.mxu0 %v574
    %2085 = vmatpush.msra.mxu0 %v571
    %2086 = vmatpush.msra.mxu0 %v568
    %2087 = vmatpush.msra.mxu0 %v565
    %2088 = vmatpush.msra.mxu0 %v562
    %2089 = vmatpush.msra.mxu0 %v559
    %2090 = vmatmul.f32.gmra.mxu0 %v1957
    %v2091 = vpop.f32.mrf.mxu0
    %v2092 = vadd.f32 0.0, %v2091
    %2093 = vdwg.mxu0
    %2094 = vmatpush.msra.mxu0 %v605
    %2095 = vmatpush.msra.mxu0 %v602
    %2096 = vmatpush.msra.mxu0 %v599
    %2097 = vmatpush.msra.mxu0 %v596
    %2098 = vmatpush.msra.mxu0 %v593
    %2099 = vmatpush.msra.mxu0 %v590
    %2100 = vmatpush.msra.mxu0 %v587
    %2101 = vmatpush.msra.mxu0 %v584
    %2102 = vmatpush.msra.mxu0 %v581
    %2103 = vmatpush.msra.mxu0 %v578
    %2104 = vmatpush.msra.mxu0 %v575
    %2105 = vmatpush.msra.mxu0 %v572
    %2106 = vmatpush.msra.mxu0 %v569
    %2107 = vmatpush.msra.mxu0 %v566
    %2108 = vmatpush.msra.mxu0 %v563
    %2109 = vmatpush.msra.mxu0 %v560
    %2110 = vmatmul.f32.gmra.mxu0 %v1957
    %v2111 = vpop.f32.mrf.mxu0
    %v2112 = vadd.f32 0.0, %v2111
    %2113 = vdwg.mxu0
    %2114 = vmatpush.msra.mxu0 %v606
    %2115 = vmatpush.msra.mxu0 %v603
    %2116 = vmatpush.msra.mxu0 %v600
    %2117 = vmatpush.msra.mxu0 %v597
    %2118 = vmatpush.msra.mxu0 %v594
    %2119 = vmatpush.msra.mxu0 %v591
    %2120 = vmatpush.msra.mxu0 %v588
    %2121 = vmatpush.msra.mxu0 %v585
    %2122 = vmatpush.msra.mxu0 %v582
    %2123 = vmatpush.msra.mxu0 %v579
    %2124 = vmatpush.msra.mxu0 %v576
    %2125 = vmatpush.msra.mxu0 %v573
    %2126 = vmatpush.msra.mxu0 %v570
    %2127 = vmatpush.msra.mxu0 %v567
    %2128 = vmatpush.msra.mxu0 %v564
    %2129 = vmatpush.msra.mxu0 %v561
    %2130 = vmatmul.f32.gmra.mxu0 %v1957
    %v2131 = vpop.f32.mrf.mxu0
    %v2132 = vadd.f32 0.0, %v2131
    %2133 = vdwg.mxu0
    %v2134 = vadd.f32 %v2071, %v2092
    %v2135 = vxor.u32 %v2134, 2147483648
    %v2136 = vmul.f32 %v2135, 1.442695
    %v2137 = vpow.pop %v2136
    %v2138 = vadd.f32 %v2137, 1.0
    %v2139 = vrcp.pop %v2138
    %v2140 = vmul.f32 %v2138, %v2139
    %v2141 = vsub.f32 1.0, %v2140
    %v2142 = vmul.f32 %v2139, %v2141
    %v2143 = vadd.f32 %v2139, %v2142
    %vm2144 = vweird.f32 %v2138
    %vm2145 = vweird.f32 %v2139
    %vm2146 = vmor %vm2144, %vm2145
    %v2147 = vsel %vm2146, %v2139, %v2143
    %v2148 = vand.u32 2147483647, %v2138
    %vm2149 = vcmp.eq.f32.partialorder %v2148, 8.507059e+37
    %v2150 = vand.u32 %v2138, 2147483648
    %v2151 = vor.u32 1.1754944e-38, %v2150
    %v2152 = vsel %vm2149, %v2151, %v2147
    %v2153 = vmul.f32 1.0, %v2152
    %v2154 = vadd.f32 %v2072, %v2112
    %v2155 = vxor.u32 %v2154, 2147483648
    %v2156 = vmul.f32 %v2155, 1.442695
    %v2157 = vpow.pop %v2156
    %v2158 = vadd.f32 %v2157, 1.0
    %v2159 = vrcp.pop %v2158
    %v2160 = vmul.f32 %v2158, %v2159
    %v2161 = vsub.f32 1.0, %v2160
    %v2162 = vmul.f32 %v2159, %v2161
    %v2163 = vadd.f32 %v2159, %v2162
    %vm2164 = vweird.f32 %v2158
    %vm2165 = vweird.f32 %v2159
    %vm2166 = vmor %vm2164, %vm2165
    %v2167 = vsel %vm2166, %v2159, %v2163
    %v2168 = vand.u32 2147483647, %v2158
    %vm2169 = vcmp.eq.f32.partialorder %v2168, 8.507059e+37
    %v2170 = vand.u32 %v2158, 2147483648
    %v2171 = vor.u32 1.1754944e-38, %v2170
    %v2172 = vsel %vm2169, %v2171, %v2167
    %v2173 = vmul.f32 1.0, %v2172
    %v2174 = vadd.f32 %v2132, %v828
    %v2175 = vmul.f32 %v2153, %v2174
    %v2176 = vadd.f32 %v2073, %v2175
    %v2177 = vtanh.pop %v2176
    %v2178 = vsub.f32 1.0, %v2173
    %v2179 = vmul.f32 %v2178, %v2177
    %v2180 = vmul.f32 %v2173, %v1957
    %v2181 = vadd.f32 %v2179, %v2180
    %s2182 = scalar_lea.vmem [#allocation2], 168
    %v2183 = vld [vmem:[%s2182] sm:$0xff]
    %v2184 = vld [vmem:[%s2182 + $0x8] sm:$0xff]
    %v2185 = vld [vmem:[%s2182 + $0x10] sm:$0xff]
    %2186 = vmatpush.msra.mxu0 %v556
    %2187 = vmatpush.msra.mxu0 %v553
    %2188 = vmatpush.msra.mxu0 %v550
    %2189 = vmatpush.msra.mxu0 %v547
    %2190 = vmatpush.msra.mxu0 %v544
    %2191 = vmatpush.msra.mxu0 %v541
    %2192 = vmatpush.msra.mxu0 %v538
    %2193 = vmatpush.msra.mxu0 %v535
    %2194 = vmatpush.msra.mxu0 %v532
    %2195 = vmatpush.msra.mxu0 %v529
    %2196 = vmatpush.msra.mxu0 %v526
    %2197 = vmatpush.msra.mxu0 %v523
    %2198 = vmatpush.msra.mxu0 %v520
    %2199 = vmatpush.msra.mxu0 %v517
    %2200 = vmatpush.msra.mxu0 %v514
    %2201 = vmatpush.msra.mxu0 %v511
    %2202 = vmatmul.f32.gmra.mxu0 %v2069
    %v2203 = vpop.f32.mrf.mxu0
    %v2204 = vadd.f32 0.0, %v2203
    %2205 = vdwg.mxu0
    %2206 = vmatpush.msra.mxu0 %v557
    %2207 = vmatpush.msra.mxu0 %v554
    %2208 = vmatpush.msra.mxu0 %v551
    %2209 = vmatpush.msra.mxu0 %v548
    %2210 = vmatpush.msra.mxu0 %v545
    %2211 = vmatpush.msra.mxu0 %v542
    %2212 = vmatpush.msra.mxu0 %v539
    %2213 = vmatpush.msra.mxu0 %v536
    %2214 = vmatpush.msra.mxu0 %v533
    %2215 = vmatpush.msra.mxu0 %v530
    %2216 = vmatpush.msra.mxu0 %v527
    %2217 = vmatpush.msra.mxu0 %v524
    %2218 = vmatpush.msra.mxu0 %v521
    %2219 = vmatpush.msra.mxu0 %v518
    %2220 = vmatpush.msra.mxu0 %v515
    %2221 = vmatpush.msra.mxu0 %v512
    %2222 = vmatmul.f32.gmra.mxu0 %v2069
    %v2223 = vpop.f32.mrf.mxu0
    %v2224 = vadd.f32 0.0, %v2223
    %2225 = vdwg.mxu0
    %2226 = vmatpush.msra.mxu0 %v558
    %2227 = vmatpush.msra.mxu0 %v555
    %2228 = vmatpush.msra.mxu0 %v552
    %2229 = vmatpush.msra.mxu0 %v549
    %2230 = vmatpush.msra.mxu0 %v546
    %2231 = vmatpush.msra.mxu0 %v543
    %2232 = vmatpush.msra.mxu0 %v540
    %2233 = vmatpush.msra.mxu0 %v537
    %2234 = vmatpush.msra.mxu0 %v534
    %2235 = vmatpush.msra.mxu0 %v531
    %2236 = vmatpush.msra.mxu0 %v528
    %2237 = vmatpush.msra.mxu0 %v525
    %2238 = vmatpush.msra.mxu0 %v522
    %2239 = vmatpush.msra.mxu0 %v519
    %2240 = vmatpush.msra.mxu0 %v516
    %2241 = vmatpush.msra.mxu0 %v513
    %2242 = vmatmul.f32.gmra.mxu0 %v2069
    %v2243 = vpop.f32.mrf.mxu0
    %v2244 = vadd.f32 0.0, %v2243
    %2245 = vdwg.mxu0
    %v2246 = vadd.f32 %v2183, %v2204
    %v2247 = vxor.u32 %v2246, 2147483648
    %v2248 = vmul.f32 %v2247, 1.442695
    %v2249 = vpow.pop %v2248
    %v2250 = vadd.f32 %v2249, 1.0
    %v2251 = vrcp.pop %v2250
    %v2252 = vmul.f32 %v2250, %v2251
    %v2253 = vsub.f32 1.0, %v2252
    %v2254 = vmul.f32 %v2251, %v2253
    %v2255 = vadd.f32 %v2251, %v2254
    %vm2256 = vweird.f32 %v2250
    %vm2257 = vweird.f32 %v2251
    %vm2258 = vmor %vm2256, %vm2257
    %v2259 = vsel %vm2258, %v2251, %v2255
    %v2260 = vand.u32 2147483647, %v2250
    %vm2261 = vcmp.eq.f32.partialorder %v2260, 8.507059e+37
    %v2262 = vand.u32 %v2250, 2147483648
    %v2263 = vor.u32 1.1754944e-38, %v2262
    %v2264 = vsel %vm2261, %v2263, %v2259
    %v2265 = vmul.f32 1.0, %v2264
    %v2266 = vadd.f32 %v2184, %v2224
    %v2267 = vxor.u32 %v2266, 2147483648
    %v2268 = vmul.f32 %v2267, 1.442695
    %v2269 = vpow.pop %v2268
    %v2270 = vadd.f32 %v2269, 1.0
    %v2271 = vrcp.pop %v2270
    %v2272 = vmul.f32 %v2270, %v2271
    %v2273 = vsub.f32 1.0, %v2272
    %v2274 = vmul.f32 %v2271, %v2273
    %v2275 = vadd.f32 %v2271, %v2274
    %vm2276 = vweird.f32 %v2270
    %vm2277 = vweird.f32 %v2271
    %vm2278 = vmor %vm2276, %vm2277
    %v2279 = vsel %vm2278, %v2271, %v2275
    %v2280 = vand.u32 2147483647, %v2270
    %vm2281 = vcmp.eq.f32.partialorder %v2280, 8.507059e+37
    %v2282 = vand.u32 %v2270, 2147483648
    %v2283 = vor.u32 1.1754944e-38, %v2282
    %v2284 = vsel %vm2281, %v2283, %v2279
    %v2285 = vmul.f32 1.0, %v2284
    %v2286 = vadd.f32 %v2244, %v713
    %v2287 = vmul.f32 %v2265, %v2286
    %v2288 = vadd.f32 %v2185, %v2287
    %v2289 = vtanh.pop %v2288
    %v2290 = vsub.f32 1.0, %v2285
    %v2291 = vmul.f32 %v2290, %v2289
    %v2292 = vmul.f32 %v2285, %v2069
    %v2293 = vadd.f32 %v2291, %v2292
    %v2294 = vld [vmem:[#allocation3] sm:$0xff]
    %v2295 = vld [vmem:[#allocation3 + $0x8] sm:$0xff]
    %v2296 = vld [vmem:[#allocation3 + $0x10] sm:$0xff]
    %2297 = vmatpush.msra.mxu0 %v604
    %2298 = vmatpush.msra.mxu0 %v601
    %2299 = vmatpush.msra.mxu0 %v598
    %2300 = vmatpush.msra.mxu0 %v595
    %2301 = vmatpush.msra.mxu0 %v592
    %2302 = vmatpush.msra.mxu0 %v589
    %2303 = vmatpush.msra.mxu0 %v586
    %2304 = vmatpush.msra.mxu0 %v583
    %2305 = vmatpush.msra.mxu0 %v580
    %2306 = vmatpush.msra.mxu0 %v577
    %2307 = vmatpush.msra.mxu0 %v574
    %2308 = vmatpush.msra.mxu0 %v571
    %2309 = vmatpush.msra.mxu0 %v568
    %2310 = vmatpush.msra.mxu0 %v565
    %2311 = vmatpush.msra.mxu0 %v562
    %2312 = vmatpush.msra.mxu0 %v559
    %2313 = vmatmul.f32.gmra.mxu0 %v2181
    %v2314 = vpop.f32.mrf.mxu0
    %v2315 = vadd.f32 0.0, %v2314
    %2316 = vdwg.mxu0
    %2317 = vmatpush.msra.mxu0 %v605
    %2318 = vmatpush.msra.mxu0 %v602
    %2319 = vmatpush.msra.mxu0 %v599
    %2320 = vmatpush.msra.mxu0 %v596
    %2321 = vmatpush.msra.mxu0 %v593
    %2322 = vmatpush.msra.mxu0 %v590
    %2323 = vmatpush.msra.mxu0 %v587
    %2324 = vmatpush.msra.mxu0 %v584
    %2325 = vmatpush.msra.mxu0 %v581
    %2326 = vmatpush.msra.mxu0 %v578
    %2327 = vmatpush.msra.mxu0 %v575
    %2328 = vmatpush.msra.mxu0 %v572
    %2329 = vmatpush.msra.mxu0 %v569
    %2330 = vmatpush.msra.mxu0 %v566
    %2331 = vmatpush.msra.mxu0 %v563
    %2332 = vmatpush.msra.mxu0 %v560
    %2333 = vmatmul.f32.gmra.mxu0 %v2181
    %v2334 = vpop.f32.mrf.mxu0
    %v2335 = vadd.f32 0.0, %v2334
    %2336 = vdwg.mxu0
    %2337 = vmatpush.msra.mxu0 %v606
    %2338 = vmatpush.msra.mxu0 %v603
    %2339 = vmatpush.msra.mxu0 %v600
    %2340 = vmatpush.msra.mxu0 %v597
    %2341 = vmatpush.msra.mxu0 %v594
    %2342 = vmatpush.msra.mxu0 %v591
    %2343 = vmatpush.msra.mxu0 %v588
    %2344 = vmatpush.msra.mxu0 %v585
    %2345 = vmatpush.msra.mxu0 %v582
    %2346 = vmatpush.msra.mxu0 %v579
    %2347 = vmatpush.msra.mxu0 %v576
    %2348 = vmatpush.msra.mxu0 %v573
    %2349 = vmatpush.msra.mxu0 %v570
    %2350 = vmatpush.msra.mxu0 %v567
    %2351 = vmatpush.msra.mxu0 %v564
    %2352 = vmatpush.msra.mxu0 %v561
    %2353 = vmatmul.f32.gmra.mxu0 %v2181
    %v2354 = vpop.f32.mrf.mxu0
    %v2355 = vadd.f32 0.0, %v2354
    %2356 = vdwg.mxu0
    %v2357 = vadd.f32 %v2294, %v2315
    %v2358 = vxor.u32 %v2357, 2147483648
    %v2359 = vmul.f32 %v2358, 1.442695
    %v2360 = vpow.pop %v2359
    %v2361 = vadd.f32 %v2360, 1.0
    %v2362 = vrcp.pop %v2361
    %v2363 = vmul.f32 %v2361, %v2362
    %v2364 = vsub.f32 1.0, %v2363
    %v2365 = vmul.f32 %v2362, %v2364
    %v2366 = vadd.f32 %v2362, %v2365
    %vm2367 = vweird.f32 %v2361
    %vm2368 = vweird.f32 %v2362
    %vm2369 = vmor %vm2367, %vm2368
    %v2370 = vsel %vm2369, %v2362, %v2366
    %v2371 = vand.u32 2147483647, %v2361
    %vm2372 = vcmp.eq.f32.partialorder %v2371, 8.507059e+37
    %v2373 = vand.u32 %v2361, 2147483648
    %v2374 = vor.u32 1.1754944e-38, %v2373
    %v2375 = vsel %vm2372, %v2374, %v2370
    %v2376 = vmul.f32 1.0, %v2375
    %v2377 = vadd.f32 %v2295, %v2335
    %v2378 = vxor.u32 %v2377, 2147483648
    %v2379 = vmul.f32 %v2378, 1.442695
    %v2380 = vpow.pop %v2379
    %v2381 = vadd.f32 %v2380, 1.0
    %v2382 = vrcp.pop %v2381
    %v2383 = vmul.f32 %v2381, %v2382
    %v2384 = vsub.f32 1.0, %v2383
    %v2385 = vmul.f32 %v2382, %v2384
    %v2386 = vadd.f32 %v2382, %v2385
    %vm2387 = vweird.f32 %v2381
    %vm2388 = vweird.f32 %v2382
    %vm2389 = vmor %vm2387, %vm2388
    %v2390 = vsel %vm2389, %v2382, %v2386
    %v2391 = vand.u32 2147483647, %v2381
    %vm2392 = vcmp.eq.f32.partialorder %v2391, 8.507059e+37
    %v2393 = vand.u32 %v2381, 2147483648
    %v2394 = vor.u32 1.1754944e-38, %v2393
    %v2395 = vsel %vm2392, %v2394, %v2390
    %v2396 = vmul.f32 1.0, %v2395
    %v2397 = vadd.f32 %v2355, %v828
    %v2398 = vmul.f32 %v2376, %v2397
    %v2399 = vadd.f32 %v2296, %v2398
    %v2400 = vtanh.pop %v2399
    %v2401 = vsub.f32 1.0, %v2396
    %v2402 = vmul.f32 %v2401, %v2400
    %v2403 = vmul.f32 %v2396, %v2181
    %v2404 = vadd.f32 %v2402, %v2403
    %v2405 = vadd.f32 %v2293, %v2404
    %v2406 = vmul.f32 %v2405, 0.5
    %2407 = vst [vmem:[#allocation15] sm:$0xff] %v2406
    // Predicated region
    $region62: #{tpu_custom_call.1} parent=1 // pred_check
      _
    $region63: #{tpu_custom_call.1} parent=1 // pred_check_branch
      %2409 = sbr.rel (0) target = $region65
    $region64: #{tpu_custom_call.1} parent=1 // pred_region
      %2411 = vsyncadd [#allocation6], 0
      %s2413 = sshll.u32 [#allocation15], 4
      %s2414 = int_to_ptr.vmem [resolvable:$true] %s2413
      %s2415 = sshll.u32 %s9, 4
      %s2416 = int_to_ptr.hbm [resolvable:$true] %s2415
      %2418 = dma.vmem_to_hbm [thread:$0]  %s2414, 128, %s2416, [#allocation6]
    $region65: #{tpu_custom_call.1} parent=1 // pred_fallthru
      _
    // Predicated region
    $region66: #{tpu_custom_call.1} parent=1 // pred_check
      _
    $region67: #{tpu_custom_call.1} parent=1 // pred_check_branch
      %2420 = sbr.rel (0) target = $region69
    $region68: #{tpu_custom_call.1} parent=1 // pred_region
      %2422 = dma.done [#allocation6], 128
    $region69: #{tpu_custom_call.1} parent=1 // pred_fallthru
      _
    %2423 = vsyncpa [#allocation5], 1
    %2424 = vsyncpa [#allocation8], 1
    %2425 = vsyncpa [#allocation11], 1
    %2426 = vsyncpa [#allocation14], 1
    %2427 = vsyncpa [#allocation6], 1

</llo_original>
